<compile_context>
chip_gen: v6e
topology: v6e:2x2x1
jax: 0.10.0
libtpu: 0.0.40
codegen_flags: <defaults>
</compile_context>

<pallas_src>
import functools

import jax
import jax.numpy as jnp
from jax.experimental import pallas as pl
from jax.experimental.pallas import tpu as pltpu

N_FEATURES = 3
LRELU_SLOPE = 0.2
K1, K2, K3 = 5, 5, 3          # kernel sizes: conv1 (convp folded in), conv2, conv3
C1, C2, C3 = 128, 256, 512    # output channels of the three conv stages


def _lrelu(v):
    return jnp.where(v >= 0, v, LRELU_SLOPE * v)


# ----------------------------------------------------------------------------
# Fused Pallas kernel: one grid step = `bt` batch samples, whole forward,
# all activations resident in VMEM.
# ----------------------------------------------------------------------------
def _disc_fused_kernel(cols1_ref, w1_ref, bias1_ref, w2_ref, b2_ref,
                       w3_ref, b3_ref, wlin_ref, blin_ref, o_ref,
                       p2_s, p3_s, *, bt, L, im2col):
    """
    cols1_ref : (bt*L, 15)      host-side im2col of the raw input (col = k*3+a)
    w1_ref    : (15, 128)       convp folded into conv1, row = k*3 + a
    bias1_ref : (L, 128)        position-dependent bias of the fold (exact edges)
    w2_ref    : (640, 256)      conv2 weights, im2col layout (row = k*128 + ci)
    b2_ref    : (1, 256)
    w3_ref    : (768, 512)      conv3 weights, im2col layout (row = k*256 + ci)
    b3_ref    : (1, 512)
    wlin_ref  : (L, 512)        lin0 weight permuted to (l, c)
    blin_ref  : (1, 1)
    o_ref     : (bt, 1, 1)      per-sample scalar outputs
    p2_s      : (bt*(L+4), 128) zero-halo padded h1, per-sample stride L+4
    p3_s      : (bt*(L+2), 256) zero-halo padded h2, per-sample stride L+2
    """
    S2, S3 = L + 4, L + 2

    # Re-zero ONLY the halo rows (bodies are fully overwritten below).  Doing
    # this every step is cheap (6 rows/sample) and keeps every grid step
    # self-contained, so "parallel" semantics stay correct on multi-TC parts.
    zero2 = jnp.zeros((2, C1), jnp.float32)
    zero3 = jnp.zeros((1, C2), jnp.float32)
    for b in range(bt):
        p2_s[pl.ds(b * S2, 2), :] = zero2
        p2_s[pl.ds(b * S2 + 2 + L, 2), :] = zero2
        p3_s[pl.ds(b * S3, 1), :] = zero3
        p3_s[pl.ds(b * S3 + 1 + L, 1), :] = zero3

    # ---- stage 1: convp (1x1, 3->64) folded into conv1 (k=5, ->128) --------
    # Single (bt*L, 15) @ (15, 128) contraction instead of five K=3 MXU pushes.
    z1 = jax.lax.dot_general(
        cols1_ref[...], w1_ref[...],
        dimension_numbers=(((1,), (0,)), ((), ())),
        preferred_element_type=jnp.float32)                        # (bt*L, 128)
    for b in range(bt):
        p2_s[pl.ds(b * S2 + 2, L), :] = _lrelu(
            z1[b * L:(b + 1) * L, :] + bias1_ref[...])

    def conv_stage(p_ref, w_ref, b_ref, ksize, cin, stride):
        """'same' conv over a zero-halo padded scratch, batch-stacked rows."""
        cd = w_ref.dtype
        taps = []
        for k in range(ksize):
            taps.append(jnp.concatenate(
                [p_ref[pl.ds(b * stride + k, L), :] for b in range(bt)],
                axis=0))                                           # (bt*L, cin)
        if im2col:
            # v6e/v7x: one K = ksize*cin contraction keeps the 256-deep MXU full.
            cols = jnp.concatenate(taps, axis=-1).astype(cd)
            acc = jax.lax.dot_general(
                cols, w_ref[...],
                dimension_numbers=(((1,), (0,)), ((), ())),
                preferred_element_type=jnp.float32)
        else:
            # v5e: the 128-deep MXU gains nothing from im2col; per-tap
            # accumulation avoids the (bt*L, ksize*cin) column buffer.
            acc = jax.lax.dot_general(
                taps[0].astype(cd), w_ref[pl.ds(0, cin), :],
                dimension_numbers=(((1,), (0,)), ((), ())),
                preferred_element_type=jnp.float32)
            for k in range(1, ksize):
                acc = acc + jax.lax.dot_general(
                    taps[k].astype(cd), w_ref[pl.ds(k * cin, cin), :],
                    dimension_numbers=(((1,), (0,)), ((), ())),
                    preferred_element_type=jnp.float32)
        return _lrelu(acc + b_ref[...])                            # (bt*L, cout)

    # ---- stage 2: conv2 (k=5, 128->256) -------------------------------------
    h2 = conv_stage(p2_s, w2_ref, b2_ref, K2, C1, S2)
    for b in range(bt):
        p3_s[pl.ds(b * S3 + 1, L), :] = h2[b * L:(b + 1) * L, :]

    # ---- stage 3: conv3 (k=3, 256->512) -------------------------------------
    h3 = conv_stage(p3_s, w3_ref, b3_ref, K3, C2, S3)

    # ---- fused lin0: y[b] = sum_{l,c} h3[b,l,c] * Wlin[l,c] + b -------------
    # Row (sublane) reduction first — VALU adds — then ONE cross-lane reduce.
    wlin = wlin_ref[...].astype(jnp.float32)
    for b in range(bt):
        prod = h3[b * L:(b + 1) * L, :] * wlin                     # (L, 512)
        part = jnp.sum(prod, axis=0, keepdims=True)                # (1, 512) VALU
        y = jnp.sum(part, axis=1, keepdims=True)                   # (1, 1)   XLU
        o_ref[b] = (y + blin_ref[...]).astype(o_ref.dtype)


# ----------------------------------------------------------------------------
# Wrapper
# ----------------------------------------------------------------------------
def _pick_bt(batch, L, target_rows=256):
    """Samples per grid step so stacked matmuls have ~target_rows M rows."""
    want = max(1, min(batch, target_rows // max(L, 1)))
    for cand in range(want, 0, -1):
        if batch % cand == 0:
            return cand
    return 1


def _const_spec(shape, single_buffer):
    """BlockSpec for a grid-invariant (constant index_map) operand."""
    if single_buffer:
        # Constant index_map => second pipeline buffer is pure VMEM waste.
        return pl.BlockSpec(shape, lambda g: (0, 0),
                            pipeline_mode=pl.Buffered(1))
    return pl.BlockSpec(shape, lambda g: (0, 0))


def _vmem_limit_bytes(L, bt, kp):
    """Footprint-based VMEM request; never the full 64 MiB of a v7x TC."""
    w_bytes = sum(int(v.size) * v.dtype.itemsize for v in kp.values())
    scratch = 4 * (bt * (L + 4) * C1 + bt * (L + 2) * C2)
    acts = 4 * bt * L * (K2 * C1 + K3 * C2 + C1 + C2 + C3)
    io = 2 * (bt * L * K1 * N_FEATURES * 4 + bt * 4)
    est = 2 * w_bytes + scratch + acts + io
    return int(min(56 * 2 ** 20, max(32 * 2 ** 20, 2 * est)))


def _run(cols1, kp, *, batch, L, bt, im2col, single_buffer, vmem_limit):
    grid = (batch // bt,)
    kern = functools.partial(_disc_fused_kernel, bt=bt, L=L, im2col=im2col)
    out = pl.pallas_call(
        kern,
        out_shape=jax.ShapeDtypeStruct((batch, 1, 1), jnp.float32),
        grid=grid,
        in_specs=[
            pl.BlockSpec((bt * L, K1 * N_FEATURES), lambda g: (g, 0)),
            _const_spec((K1 * N_FEATURES, C1), single_buffer),
            _const_spec((L, C1), single_buffer),
            _const_spec((K2 * C1, C2), single_buffer),
            _const_spec((1, C2), single_buffer),
            _const_spec((K3 * C2, C3), single_buffer),
            _const_spec((1, C3), single_buffer),
            _const_spec((L, C3), single_buffer),
            _const_spec((1, 1), single_buffer),
        ],
        out_specs=pl.BlockSpec((bt, 1, 1), lambda g: (g, 0, 0)),
        scratch_shapes=[
            pltpu.VMEM((bt * (L + 4), C1), jnp.float32),   # zero-halo padded h1
            pltpu.VMEM((bt * (L + 2), C2), jnp.float32),   # zero-halo padded h2
        ],
        compiler_params=pltpu.CompilerParams(
            dimension_semantics=("parallel",),
            vmem_limit_bytes=vmem_limit),
    )(cols1, kp["w1f"], kp["bias1"], kp["w2f"], kp["b2"],
      kp["w3f"], kp["b3"], kp["wlin_lc"], kp["blin"])
    return out.reshape(batch, 1)


def disc_forward(x_ncl, kp, *, bt=None, im2col=True):
    """Fused Pallas forward. x_ncl: (B, C, L) with C >= n_features (NCL)."""
    B, _, L = x_ncl.shape
    # Only the first n_features channels feed the forward (w/wg are dead code).
    x_blc = jnp.transpose(x_ncl[:, :N_FEATURES, :], (0, 2, 1)).astype(jnp.float32)
    # Host-side im2col for the tiny stage-1 contraction (K*Cin = 15 columns).
    xp = jnp.pad(x_blc, ((0, 0), (2, 2), (0, 0)))
    cols1 = jnp.concatenate([xp[:, k:k + L, :] for k in range(K1)], axis=-1)
    cols1 = cols1.reshape(B * L, K1 * N_FEATURES)

    if bt is None:
        bt = _pick_bt(B, L)
    assert B % bt == 0, (B, bt)
    vmem_limit = _vmem_limit_bytes(L, bt, kp)

    try:
        return _run(cols1, kp, batch=B, L=L, bt=bt, im2col=im2col,
                    single_buffer=True, vmem_limit=vmem_limit)
    except Exception:
        # TODO(synk): pl.Buffered(1) (single-buffered grid-invariant weights)
        # not supported on this JAX build — fall back to default buffering.
        return _run(cols1, kp, batch=B, L=L, bt=bt, im2col=im2col,
                    single_buffer=False, vmem_limit=vmem_limit)


# ----------------------------------------------------------------------------
# Host-side parameter preparation (exact algebraic rewrites of PyTorch weights)
# ----------------------------------------------------------------------------
def prepare_kernel_params(pt, seq_len, compute_dtype=jnp.float32):
    L = seq_len
    wp_cl = pt["wp"][:, :, 0].T                       # (3, 64)
    w1_taps = jnp.transpose(pt["w1"], (2, 1, 0))      # (5, 64, 128)

    # Fold convp into conv1: W1f[k] = Wp @ W1[k]; flatten to (15,128), row=k*3+a.
    w1f = jnp.einsum("ai,kio->kao", wp_cl, w1_taps).reshape(K1 * N_FEATURES, C1)

    # Exact position-dependent bias of the fold (convp's bias must NOT leak
    # into conv1's zero-padding region at the sequence edges).
    c_k = jnp.einsum("i,kio->ko", pt["bp"], w1_taps)  # (5, 128)
    src = jnp.arange(L)[:, None] + jnp.arange(K1)[None, :] - (K1 // 2)
    valid = ((src >= 0) & (src < L)).astype(jnp.float32)
    bias1 = pt["b1"][None, :] + valid @ c_k           # (L, 128)

    # conv2 / conv3 weights in im2col layout: (K*Cin, Cout), row = k*Cin + ci.
    w2f = jnp.transpose(pt["w2"], (2, 1, 0)).reshape(K2 * C1, C2)
    w3f = jnp.transpose(pt["w3"], (2, 1, 0)).reshape(K3 * C2, C3)

    # lin0 weight: PyTorch flatten(1,2) index is c*L + l -> permute to (l, c).
    wlin_lc = pt["wlin"][0].reshape(C3, L).T          # (L, 512)

    return {
        "w1f": w1f.astype(jnp.float32),
        "bias1": bias1.astype(jnp.float32),
        "w2f": w2f.astype(compute_dtype),
        "b2": pt["b2"].reshape(1, C2).astype(jnp.float32),
        "w3f": w3f.astype(compute_dtype),
        "b3": pt["b3"].reshape(1, C3).astype(jnp.float32),
        "wlin_lc": wlin_lc.astype(compute_dtype),
        "blin": pt["blin"].reshape(1, 1).astype(jnp.float32),
    }


def make_pt_params(seq_len, key):
    ks = jax.random.split(key, 10)

    def conv_w(k, cout, cin, ksz):
        return (0.1 * jax.random.normal(k, (cout, cin, ksz))).astype(jnp.float32)

    return {
        "wp": conv_w(ks[0], 64, N_FEATURES, 1),
        "bp": (0.1 * jax.random.normal(ks[1], (64,))).astype(jnp.float32),
        "w1": conv_w(ks[2], 128, 64, 5),
        "b1": (0.1 * jax.random.normal(ks[3], (128,))).astype(jnp.float32),
        "w2": conv_w(ks[4], 256, 128, 5),
        "b2": (0.1 * jax.random.normal(ks[5], (256,))).astype(jnp.float32),
        "w3": conv_w(ks[6], 512, 256, 3),
        "b3": (0.1 * jax.random.normal(ks[7], (512,))).astype(jnp.float32),
        "wlin": (0.1 * jax.random.normal(ks[8], (1, seq_len * 512))).astype(jnp.float32),
        "blin": (0.1 * jax.random.normal(ks[9], (1,))).astype(jnp.float32),
    }


# ----------------------------------------------------------------------------
# Pure-JAX reference (PyTorch NCL semantics) for correctness checking
# ----------------------------------------------------------------------------
def _ref_conv1d(x_ncl, w_oik, b, pad):
    y = jax.lax.conv_general_dilated(
        x_ncl, w_oik, window_strides=(1,), padding=[(pad, pad)],
        dimension_numbers=("NCH", "OIH", "NCH"))
    return y + b[None, :, None]


def disc_forward_ref(x_ncl, pt):
    lrelu = lambda v: jnp.where(v >= 0, v, LRELU_SLOPE * v)
    p = x_ncl[:, :N_FEATURES, :]
    h = _ref_conv1d(p, pt["wp"], pt["bp"], 0)
    h = lrelu(_ref_conv1d(h, pt["w1"], pt["b1"], 2))
    h = lrelu(_ref_conv1d(h, pt["w2"], pt["b2"], 2))
    h = lrelu(_ref_conv1d(h, pt["w3"], pt["b3"], 1))
    B = h.shape[0]
    flat = h.reshape(B, -1)                # channel-major == torch flatten(1,2)
    return flat @ pt["wlin"].T + pt["blin"]


# ----------------------------------------------------------------------------
if __name__ == "__main__":
    B, C_in, seq_len = 2, N_FEATURES + 2, 16   # (batch, n_features + 2, L)
    key = jax.random.PRNGKey(0)
    k_x, k_p = jax.random.split(key)

    x = jax.random.normal(k_x, (B, C_in, seq_len), dtype=jnp.float32)
    pt = make_pt_params(seq_len, k_p)
    ref = jax.block_until_ready(disc_forward_ref(x, pt))

    # f32 weights (default): tight check against the PyTorch-semantics ref.
    kp32 = prepare_kernel_params(pt, seq_len, jnp.float32)
    out32 = jax.block_until_ready(disc_forward(x, kp32))
    assert out32.shape == (B, 1), out32.shape
    assert jnp.allclose(out32, ref, rtol=2e-4, atol=2e-4), (out32, ref)

    # bf16 conv2/conv3/lin0 weights (v6e/v7x bf16-native MXU path): loose check.
    kp16 = prepare_kernel_params(pt, seq_len, jnp.bfloat16)
    out16 = jax.block_until_ready(disc_forward(x, kp16))
    tol16 = 5e-2 * float(jnp.max(jnp.abs(ref))) + 5e-2
    assert float(jnp.max(jnp.abs(out16 - ref))) < tol16, (out16, ref)

    # v5e-style per-tap accumulation path, bt=1 (also exercises grid > 1).
    out_tap = jax.block_until_ready(disc_forward(x, kp32, bt=1, im2col=False))
    assert jnp.allclose(out_tap, ref, rtol=2e-4, atol=2e-4), (out_tap, ref)

    print("KERNEL_OK")
</pallas_src>

<mosaic_0001>
module attributes {stable_mosaic.version = 11 : i64} {
  func.func @_disc_fused_kernel(%arg0: i32, %arg1: memref<32x15xf32, #tpu.memory_space<vmem>>, %arg2: memref<15x128xf32, #tpu.memory_space<vmem>>, %arg3: memref<16x128xf32, #tpu.memory_space<vmem>>, %arg4: memref<640x256xf32, #tpu.memory_space<vmem>>, %arg5: memref<1x256xf32, #tpu.memory_space<vmem>>, %arg6: memref<768x512xf32, #tpu.memory_space<vmem>>, %arg7: memref<1x512xf32, #tpu.memory_space<vmem>>, %arg8: memref<16x512xf32, #tpu.memory_space<vmem>>, %arg9: memref<1x1xf32, #tpu.memory_space<vmem>>, %arg10: memref<2x1x1xf32, #tpu.memory_space<vmem>>, %arg11: memref<40x128xf32, #tpu.memory_space<vmem>>, %arg12: memref<36x256xf32, #tpu.memory_space<vmem>>) attributes {dimension_semantics = [#tpu.dimension_semantics<parallel>], iteration_bounds = array<i64: 1>, scalar_prefetch = 0 : i64, scratch_operands = 2 : i64, tpu.core_type = #tpu.core_type<tc>, window_params = [{transform_indices = @transform_0, window_bounds = array<i64: 32, 15>}, {pipeline_mode = #tpu.pipeline_mode<synchronous>, transform_indices = @transform_1, window_bounds = array<i64: 15, 128>}, {pipeline_mode = #tpu.pipeline_mode<synchronous>, transform_indices = @transform_2, window_bounds = array<i64: 16, 128>}, {pipeline_mode = #tpu.pipeline_mode<synchronous>, transform_indices = @transform_3, window_bounds = array<i64: 640, 256>}, {pipeline_mode = #tpu.pipeline_mode<synchronous>, transform_indices = @transform_4, window_bounds = array<i64: 1, 256>}, {pipeline_mode = #tpu.pipeline_mode<synchronous>, transform_indices = @transform_5, window_bounds = array<i64: 768, 512>}, {pipeline_mode = #tpu.pipeline_mode<synchronous>, transform_indices = @transform_6, window_bounds = array<i64: 1, 512>}, {pipeline_mode = #tpu.pipeline_mode<synchronous>, transform_indices = @transform_7, window_bounds = array<i64: 16, 512>}, {pipeline_mode = #tpu.pipeline_mode<synchronous>, transform_indices = @transform_8, window_bounds = array<i64: 1, 1>}, {transform_indices = @transform_9, window_bounds = array<i64: 2, 1, 1>}]} {
    %cst = arith.constant 0.000000e+00 : f32
    %0 = vector.broadcast %cst : f32 to vector<2x128xf32>
    %cst_0 = arith.constant 0.000000e+00 : f32
    %1 = vector.broadcast %cst_0 : f32 to vector<1x256xf32>
    %c0 = arith.constant 0 : index
    %c0_1 = arith.constant 0 : index
    %2 = vector.load %arg11[%c0, %c0_1] : memref<40x128xf32, #tpu.memory_space<vmem>>, vector<2x128xf32>
    tpu.vector_store %arg11[%c0, %c0_1], %0 {strides = array<i32>} : memref<40x128xf32, #tpu.memory_space<vmem>>, vector<2x128xf32>,
    %c18 = arith.constant 18 : index
    %c0_2 = arith.constant 0 : index
    %3 = vector.load %arg11[%c18, %c0_2] : memref<40x128xf32, #tpu.memory_space<vmem>>, vector<2x128xf32>
    tpu.vector_store %arg11[%c18, %c0_2], %0 {strides = array<i32>} : memref<40x128xf32, #tpu.memory_space<vmem>>, vector<2x128xf32>,
    %c0_3 = arith.constant 0 : index
    %c0_4 = arith.constant 0 : index
    %4 = vector.load %arg12[%c0_3, %c0_4] : memref<36x256xf32, #tpu.memory_space<vmem>>, vector<1x256xf32>
    tpu.vector_store %arg12[%c0_3, %c0_4], %1 {strides = array<i32>} : memref<36x256xf32, #tpu.memory_space<vmem>>, vector<1x256xf32>,
    %c17 = arith.constant 17 : index
    %c0_5 = arith.constant 0 : index
    %5 = vector.load %arg12[%c17, %c0_5] : memref<36x256xf32, #tpu.memory_space<vmem>>, vector<1x256xf32>
    tpu.vector_store %arg12[%c17, %c0_5], %1 {strides = array<i32>} : memref<36x256xf32, #tpu.memory_space<vmem>>, vector<1x256xf32>,
    %c20 = arith.constant 20 : index
    %c0_6 = arith.constant 0 : index
    %6 = vector.load %arg11[%c20, %c0_6] : memref<40x128xf32, #tpu.memory_space<vmem>>, vector<2x128xf32>
    tpu.vector_store %arg11[%c20, %c0_6], %0 {strides = array<i32>} : memref<40x128xf32, #tpu.memory_space<vmem>>, vector<2x128xf32>,
    %c38 = arith.constant 38 : index
    %c0_7 = arith.constant 0 : index
    %7 = vector.load %arg11[%c38, %c0_7] : memref<40x128xf32, #tpu.memory_space<vmem>>, vector<2x128xf32>
    tpu.vector_store %arg11[%c38, %c0_7], %0 {strides = array<i32>} : memref<40x128xf32, #tpu.memory_space<vmem>>, vector<2x128xf32>,
    %c18_8 = arith.constant 18 : index
    %c0_9 = arith.constant 0 : index
    %8 = vector.load %arg12[%c18_8, %c0_9] : memref<36x256xf32, #tpu.memory_space<vmem>>, vector<1x256xf32>
    tpu.vector_store %arg12[%c18_8, %c0_9], %1 {strides = array<i32>} : memref<36x256xf32, #tpu.memory_space<vmem>>, vector<1x256xf32>,
    %c35 = arith.constant 35 : index
    %c0_10 = arith.constant 0 : index
    %9 = vector.load %arg12[%c35, %c0_10] : memref<36x256xf32, #tpu.memory_space<vmem>>, vector<1x256xf32>
    tpu.vector_store %arg12[%c35, %c0_10], %1 {strides = array<i32>} : memref<36x256xf32, #tpu.memory_space<vmem>>, vector<1x256xf32>,
    %c0_11 = arith.constant 0 : index
    %c0_12 = arith.constant 0 : index
    %10 = vector.load %arg1[%c0_11, %c0_12] : memref<32x15xf32, #tpu.memory_space<vmem>>, vector<32x15xf32>
    %c0_13 = arith.constant 0 : index
    %c0_14 = arith.constant 0 : index
    %11 = vector.load %arg2[%c0_13, %c0_14] : memref<15x128xf32, #tpu.memory_space<vmem>>, vector<15x128xf32>
    %cst_15 = arith.constant dense<0.000000e+00> : vector<32x128xf32>
    %12 = tpu.matmul %10, %11, %cst_15 {dimension_numbers = #tpu.dot_dimension_numbers<[1], [0], [0], [1], [0, 0, 1, 1], [], []>} : vector<32x15xf32>, vector<15x128xf32>, vector<32x128xf32> -> vector<32x128xf32>
    %13 = vector.extract_strided_slice %12 {offsets = [0, 0], sizes = [16, 128], strides = [1, 1]} : vector<32x128xf32> to vector<16x128xf32>
    %c0_16 = arith.constant 0 : index
    %c0_17 = arith.constant 0 : index
    %14 = vector.load %arg3[%c0_16, %c0_17] : memref<16x128xf32, #tpu.memory_space<vmem>>, vector<16x128xf32>
    %15 = arith.addf %13, %14 : vector<16x128xf32>
    %cst_18 = arith.constant 0.000000e+00 : f32
    %16 = vector.broadcast %cst_18 : f32 to vector<16x128xf32>
    %17 = arith.cmpf oge, %15, %16 : vector<16x128xf32>
    %cst_19 = arith.constant 2.000000e-01 : f32
    %18 = vector.broadcast %cst_19 : f32 to vector<16x128xf32>
    %19 = arith.mulf %18, %15 : vector<16x128xf32>
    %20 = arith.select %17, %15, %19 : vector<16x128xi1>, vector<16x128xf32>
    %c2 = arith.constant 2 : index
    %c0_20 = arith.constant 0 : index
    %21 = vector.load %arg11[%c2, %c0_20] : memref<40x128xf32, #tpu.memory_space<vmem>>, vector<16x128xf32>
    tpu.vector_store %arg11[%c2, %c0_20], %20 {strides = array<i32>} : memref<40x128xf32, #tpu.memory_space<vmem>>, vector<16x128xf32>,
    %22 = vector.extract_strided_slice %12 {offsets = [16, 0], sizes = [16, 128], strides = [1, 1]} : vector<32x128xf32> to vector<16x128xf32>
    %c0_21 = arith.constant 0 : index
    %c0_22 = arith.constant 0 : index
    %23 = vector.load %arg3[%c0_21, %c0_22] : memref<16x128xf32, #tpu.memory_space<vmem>>, vector<16x128xf32>
    %24 = arith.addf %22, %23 : vector<16x128xf32>
    %cst_23 = arith.constant 0.000000e+00 : f32
    %25 = vector.broadcast %cst_23 : f32 to vector<16x128xf32>
    %26 = arith.cmpf oge, %24, %25 : vector<16x128xf32>
    %cst_24 = arith.constant 2.000000e-01 : f32
    %27 = vector.broadcast %cst_24 : f32 to vector<16x128xf32>
    %28 = arith.mulf %27, %24 : vector<16x128xf32>
    %29 = arith.select %26, %24, %28 : vector<16x128xi1>, vector<16x128xf32>
    %c22 = arith.constant 22 : index
    %c0_25 = arith.constant 0 : index
    %30 = vector.load %arg11[%c22, %c0_25] : memref<40x128xf32, #tpu.memory_space<vmem>>, vector<16x128xf32>
    tpu.vector_store %arg11[%c22, %c0_25], %29 {strides = array<i32>} : memref<40x128xf32, #tpu.memory_space<vmem>>, vector<16x128xf32>,
    %c0_26 = arith.constant 0 : index
    %c0_27 = arith.constant 0 : index
    %31 = vector.load %arg11[%c0_26, %c0_27] : memref<40x128xf32, #tpu.memory_space<vmem>>, vector<16x128xf32>
    %c20_28 = arith.constant 20 : index
    %c0_29 = arith.constant 0 : index
    %32 = vector.load %arg11[%c20_28, %c0_29] : memref<40x128xf32, #tpu.memory_space<vmem>>, vector<16x128xf32>
    %33 = tpu.concatenate %31, %32 in 0 : vector<16x128xf32>, vector<16x128xf32> -> vector<32x128xf32>
    %c1 = arith.constant 1 : index
    %c0_30 = arith.constant 0 : index
    %34 = vector.load %arg11[%c1, %c0_30] : memref<40x128xf32, #tpu.memory_space<vmem>>, vector<16x128xf32>
    %c21 = arith.constant 21 : index
    %c0_31 = arith.constant 0 : index
    %35 = vector.load %arg11[%c21, %c0_31] : memref<40x128xf32, #tpu.memory_space<vmem>>, vector<16x128xf32>
    %36 = tpu.concatenate %34, %35 in 0 : vector<16x128xf32>, vector<16x128xf32> -> vector<32x128xf32>
    %c2_32 = arith.constant 2 : index
    %c0_33 = arith.constant 0 : index
    %37 = vector.load %arg11[%c2_32, %c0_33] : memref<40x128xf32, #tpu.memory_space<vmem>>, vector<16x128xf32>
    %c22_34 = arith.constant 22 : index
    %c0_35 = arith.constant 0 : index
    %38 = vector.load %arg11[%c22_34, %c0_35] : memref<40x128xf32, #tpu.memory_space<vmem>>, vector<16x128xf32>
    %39 = tpu.concatenate %37, %38 in 0 : vector<16x128xf32>, vector<16x128xf32> -> vector<32x128xf32>
    %c3 = arith.constant 3 : index
    %c0_36 = arith.constant 0 : index
    %40 = vector.load %arg11[%c3, %c0_36] : memref<40x128xf32, #tpu.memory_space<vmem>>, vector<16x128xf32>
    %c23 = arith.constant 23 : index
    %c0_37 = arith.constant 0 : index
    %41 = vector.load %arg11[%c23, %c0_37] : memref<40x128xf32, #tpu.memory_space<vmem>>, vector<16x128xf32>
    %42 = tpu.concatenate %40, %41 in 0 : vector<16x128xf32>, vector<16x128xf32> -> vector<32x128xf32>
    %c4 = arith.constant 4 : index
    %c0_38 = arith.constant 0 : index
    %43 = vector.load %arg11[%c4, %c0_38] : memref<40x128xf32, #tpu.memory_space<vmem>>, vector<16x128xf32>
    %c24 = arith.constant 24 : index
    %c0_39 = arith.constant 0 : index
    %44 = vector.load %arg11[%c24, %c0_39] : memref<40x128xf32, #tpu.memory_space<vmem>>, vector<16x128xf32>
    %45 = tpu.concatenate %43, %44 in 0 : vector<16x128xf32>, vector<16x128xf32> -> vector<32x128xf32>
    %46 = tpu.concatenate %33, %36, %39, %42, %45 in 1 : vector<32x128xf32>, vector<32x128xf32>, vector<32x128xf32>, vector<32x128xf32>, vector<32x128xf32> -> vector<32x640xf32>
    %c0_40 = arith.constant 0 : index
    %c0_41 = arith.constant 0 : index
    %47 = vector.load %arg4[%c0_40, %c0_41] : memref<640x256xf32, #tpu.memory_space<vmem>>, vector<640x256xf32>
    %cst_42 = arith.constant dense<0.000000e+00> : vector<32x256xf32>
    %48 = tpu.matmul %46, %47, %cst_42 {dimension_numbers = #tpu.dot_dimension_numbers<[1], [0], [0], [1], [0, 0, 1, 1], [], []>} : vector<32x640xf32>, vector<640x256xf32>, vector<32x256xf32> -> vector<32x256xf32>
    %c0_43 = arith.constant 0 : index
    %c0_44 = arith.constant 0 : index
    %49 = vector.load %arg5[%c0_43, %c0_44] : memref<1x256xf32, #tpu.memory_space<vmem>>, vector<1x256xf32>
    %50 = vector.broadcast %49 : vector<1x256xf32> to vector<32x256xf32>
    %51 = arith.addf %48, %50 : vector<32x256xf32>
    %cst_45 = arith.constant 0.000000e+00 : f32
    %52 = vector.broadcast %cst_45 : f32 to vector<32x256xf32>
    %53 = arith.cmpf oge, %51, %52 : vector<32x256xf32>
    %cst_46 = arith.constant 2.000000e-01 : f32
    %54 = vector.broadcast %cst_46 : f32 to vector<32x256xf32>
    %55 = arith.mulf %54, %51 : vector<32x256xf32>
    %56 = arith.select %53, %51, %55 : vector<32x256xi1>, vector<32x256xf32>
    %57 = vector.extract_strided_slice %56 {offsets = [0, 0], sizes = [16, 256], strides = [1, 1]} : vector<32x256xf32> to vector<16x256xf32>
    %c1_47 = arith.constant 1 : index
    %c0_48 = arith.constant 0 : index
    %58 = vector.load %arg12[%c1_47, %c0_48] : memref<36x256xf32, #tpu.memory_space<vmem>>, vector<16x256xf32>
    tpu.vector_store %arg12[%c1_47, %c0_48], %57 {strides = array<i32>} : memref<36x256xf32, #tpu.memory_space<vmem>>, vector<16x256xf32>,
    %59 = vector.extract_strided_slice %56 {offsets = [16, 0], sizes = [16, 256], strides = [1, 1]} : vector<32x256xf32> to vector<16x256xf32>
    %c19 = arith.constant 19 : index
    %c0_49 = arith.constant 0 : index
    %60 = vector.load %arg12[%c19, %c0_49] : memref<36x256xf32, #tpu.memory_space<vmem>>, vector<16x256xf32>
    tpu.vector_store %arg12[%c19, %c0_49], %59 {strides = array<i32>} : memref<36x256xf32, #tpu.memory_space<vmem>>, vector<16x256xf32>,
    %c0_50 = arith.constant 0 : index
    %c0_51 = arith.constant 0 : index
    %61 = vector.load %arg12[%c0_50, %c0_51] : memref<36x256xf32, #tpu.memory_space<vmem>>, vector<16x256xf32>
    %c18_52 = arith.constant 18 : index
    %c0_53 = arith.constant 0 : index
    %62 = vector.load %arg12[%c18_52, %c0_53] : memref<36x256xf32, #tpu.memory_space<vmem>>, vector<16x256xf32>
    %63 = tpu.concatenate %61, %62 in 0 : vector<16x256xf32>, vector<16x256xf32> -> vector<32x256xf32>
    %c1_54 = arith.constant 1 : index
    %c0_55 = arith.constant 0 : index
    %64 = vector.load %arg12[%c1_54, %c0_55] : memref<36x256xf32, #tpu.memory_space<vmem>>, vector<16x256xf32>
    %c19_56 = arith.constant 19 : index
    %c0_57 = arith.constant 0 : index
    %65 = vector.load %arg12[%c19_56, %c0_57] : memref<36x256xf32, #tpu.memory_space<vmem>>, vector<16x256xf32>
    %66 = tpu.concatenate %64, %65 in 0 : vector<16x256xf32>, vector<16x256xf32> -> vector<32x256xf32>
    %c2_58 = arith.constant 2 : index
    %c0_59 = arith.constant 0 : index
    %67 = vector.load %arg12[%c2_58, %c0_59] : memref<36x256xf32, #tpu.memory_space<vmem>>, vector<16x256xf32>
    %c20_60 = arith.constant 20 : index
    %c0_61 = arith.constant 0 : index
    %68 = vector.load %arg12[%c20_60, %c0_61] : memref<36x256xf32, #tpu.memory_space<vmem>>, vector<16x256xf32>
    %69 = tpu.concatenate %67, %68 in 0 : vector<16x256xf32>, vector<16x256xf32> -> vector<32x256xf32>
    %70 = tpu.concatenate %63, %66, %69 in 1 : vector<32x256xf32>, vector<32x256xf32>, vector<32x256xf32> -> vector<32x768xf32>
    %c0_62 = arith.constant 0 : index
    %c0_63 = arith.constant 0 : index
    %71 = vector.load %arg6[%c0_62, %c0_63] : memref<768x512xf32, #tpu.memory_space<vmem>>, vector<768x512xf32>
    %cst_64 = arith.constant dense<0.000000e+00> : vector<32x512xf32>
    %72 = tpu.matmul %70, %71, %cst_64 {dimension_numbers = #tpu.dot_dimension_numbers<[1], [0], [0], [1], [0, 0, 1, 1], [], []>} : vector<32x768xf32>, vector<768x512xf32>, vector<32x512xf32> -> vector<32x512xf32>
    %c0_65 = arith.constant 0 : index
    %c0_66 = arith.constant 0 : index
    %73 = vector.load %arg7[%c0_65, %c0_66] : memref<1x512xf32, #tpu.memory_space<vmem>>, vector<1x512xf32>
    %74 = vector.broadcast %73 : vector<1x512xf32> to vector<32x512xf32>
    %75 = arith.addf %72, %74 : vector<32x512xf32>
    %cst_67 = arith.constant 0.000000e+00 : f32
    %76 = vector.broadcast %cst_67 : f32 to vector<32x512xf32>
    %77 = arith.cmpf oge, %75, %76 : vector<32x512xf32>
    %cst_68 = arith.constant 2.000000e-01 : f32
    %78 = vector.broadcast %cst_68 : f32 to vector<32x512xf32>
    %79 = arith.mulf %78, %75 : vector<32x512xf32>
    %80 = arith.select %77, %75, %79 : vector<32x512xi1>, vector<32x512xf32>
    %c0_69 = arith.constant 0 : index
    %c0_70 = arith.constant 0 : index
    %81 = vector.load %arg8[%c0_69, %c0_70] : memref<16x512xf32, #tpu.memory_space<vmem>>, vector<16x512xf32>
    %82 = vector.extract_strided_slice %80 {offsets = [0, 0], sizes = [16, 512], strides = [1, 1]} : vector<32x512xf32> to vector<16x512xf32>
    %83 = arith.mulf %82, %81 : vector<16x512xf32>
    %cst_71 = arith.constant dense<0.000000e+00> : vector<512xf32>
    %84 = vector.multi_reduction <add>, %83, %cst_71 [0] : vector<16x512xf32> to vector<512xf32>
    %85 = vector.shape_cast %84 : vector<512xf32> to vector<1x512xf32>
    %cst_72 = arith.constant dense<0.000000e+00> : vector<1xf32>
    %86 = vector.multi_reduction <add>, %85, %cst_72 [1] : vector<1x512xf32> to vector<1xf32>
    %87 = vector.shape_cast %86 : vector<1xf32> to vector<1x1xf32>
    %c0_73 = arith.constant 0 : index
    %c0_74 = arith.constant 0 : index
    %88 = vector.load %arg9[%c0_73, %c0_74] : memref<1x1xf32, #tpu.memory_space<vmem>>, vector<1x1xf32>
    %89 = arith.addf %87, %88 : vector<1x1xf32>
    %c0_75 = arith.constant 0 : index
    %c0_76 = arith.constant 0 : index
    %c0_77 = arith.constant 0 : index
    %90 = vector.load %arg10[%c0_75, %c0_76, %c0_77] : memref<2x1x1xf32, #tpu.memory_space<vmem>>, vector<1x1x1xf32>
    %91 = vector.shape_cast %90 : vector<1x1x1xf32> to vector<1x1xf32>
    %92 = vector.shape_cast %89 : vector<1x1xf32> to vector<1x1x1xf32>
    tpu.vector_store %arg10[%c0_75, %c0_76, %c0_77], %92 {strides = array<i32>} : memref<2x1x1xf32, #tpu.memory_space<vmem>>, vector<1x1x1xf32>,
    %93 = vector.extract_strided_slice %80 {offsets = [16, 0], sizes = [16, 512], strides = [1, 1]} : vector<32x512xf32> to vector<16x512xf32>
    %94 = arith.mulf %93, %81 : vector<16x512xf32>
    %cst_78 = arith.constant dense<0.000000e+00> : vector<512xf32>
    %95 = vector.multi_reduction <add>, %94, %cst_78 [0] : vector<16x512xf32> to vector<512xf32>
    %96 = vector.shape_cast %95 : vector<512xf32> to vector<1x512xf32>
    %cst_79 = arith.constant dense<0.000000e+00> : vector<1xf32>
    %97 = vector.multi_reduction <add>, %96, %cst_79 [1] : vector<1x512xf32> to vector<1xf32>
    %98 = vector.shape_cast %97 : vector<1xf32> to vector<1x1xf32>
    %c0_80 = arith.constant 0 : index
    %c0_81 = arith.constant 0 : index
    %99 = vector.load %arg9[%c0_80, %c0_81] : memref<1x1xf32, #tpu.memory_space<vmem>>, vector<1x1xf32>
    %100 = arith.addf %98, %99 : vector<1x1xf32>
    %c1_82 = arith.constant 1 : index
    %c0_83 = arith.constant 0 : index
    %c0_84 = arith.constant 0 : index
    %101 = vector.load %arg10[%c1_82, %c0_83, %c0_84] : memref<2x1x1xf32, #tpu.memory_space<vmem>>, vector<1x1x1xf32>
    %102 = vector.shape_cast %101 : vector<1x1x1xf32> to vector<1x1xf32>
    %103 = vector.shape_cast %100 : vector<1x1xf32> to vector<1x1x1xf32>
    tpu.vector_store %arg10[%c1_82, %c0_83, %c0_84], %103 {strides = array<i32>} : memref<2x1x1xf32, #tpu.memory_space<vmem>>, vector<1x1x1xf32>,
    return
  }
  func.func @transform_0(%arg0: i32) -> (i32, i32) {
    %c0_i32 = arith.constant 0 : i32
    %c0_i32_0 = arith.constant 0 : i32
    return %arg0, %c0_i32 : i32, i32
  }
  func.func @transform_1(%arg0: i32) -> (i32, i32) {
    %c0_i32 = arith.constant 0 : i32
    %c0_i32_0 = arith.constant 0 : i32
    %c0_i32_1 = arith.constant 0 : i32
    return %c0_i32, %c0_i32_0 : i32, i32
  }
  func.func @transform_2(%arg0: i32) -> (i32, i32) {
    %c0_i32 = arith.constant 0 : i32
    %c0_i32_0 = arith.constant 0 : i32
    %c0_i32_1 = arith.constant 0 : i32
    return %c0_i32, %c0_i32_0 : i32, i32
  }
  func.func @transform_3(%arg0: i32) -> (i32, i32) {
    %c0_i32 = arith.constant 0 : i32
    %c0_i32_0 = arith.constant 0 : i32
    %c0_i32_1 = arith.constant 0 : i32
    return %c0_i32, %c0_i32_0 : i32, i32
  }
  func.func @transform_4(%arg0: i32) -> (i32, i32) {
    %c0_i32 = arith.constant 0 : i32
    %c0_i32_0 = arith.constant 0 : i32
    %c0_i32_1 = arith.constant 0 : i32
    return %c0_i32, %c0_i32_0 : i32, i32
  }
  func.func @transform_5(%arg0: i32) -> (i32, i32) {
    %c0_i32 = arith.constant 0 : i32
    %c0_i32_0 = arith.constant 0 : i32
    %c0_i32_1 = arith.constant 0 : i32
    return %c0_i32, %c0_i32_0 : i32, i32
  }
  func.func @transform_6(%arg0: i32) -> (i32, i32) {
    %c0_i32 = arith.constant 0 : i32
    %c0_i32_0 = arith.constant 0 : i32
    %c0_i32_1 = arith.constant 0 : i32
    return %c0_i32, %c0_i32_0 : i32, i32
  }
  func.func @transform_7(%arg0: i32) -> (i32, i32) {
    %c0_i32 = arith.constant 0 : i32
    %c0_i32_0 = arith.constant 0 : i32
    %c0_i32_1 = arith.constant 0 : i32
    return %c0_i32, %c0_i32_0 : i32, i32
  }
  func.func @transform_8(%arg0: i32) -> (i32, i32) {
    %c0_i32 = arith.constant 0 : i32
    %c0_i32_0 = arith.constant 0 : i32
    %c0_i32_1 = arith.constant 0 : i32
    return %c0_i32, %c0_i32_0 : i32, i32
  }
  func.func @transform_9(%arg0: i32) -> (i32, i32, i32) {
    %c0_i32 = arith.constant 0 : i32
    %c0_i32_0 = arith.constant 0 : i32
    %c0_i32_1 = arith.constant 0 : i32
    return %arg0, %c0_i32, %c0_i32_0 : i32, i32, i32
  }
}

module attributes {stable_mosaic.version = 11 : i64} {
  func.func @_disc_fused_kernel(%arg0: i32, %arg1: memref<32x15xf32, #tpu.memory_space<vmem>>, %arg2: memref<15x128xf32, #tpu.memory_space<vmem>>, %arg3: memref<16x128xf32, #tpu.memory_space<vmem>>, %arg4: memref<640x256xf32, #tpu.memory_space<vmem>>, %arg5: memref<1x256xf32, #tpu.memory_space<vmem>>, %arg6: memref<768x512xf32, #tpu.memory_space<vmem>>, %arg7: memref<1x512xf32, #tpu.memory_space<vmem>>, %arg8: memref<16x512xf32, #tpu.memory_space<vmem>>, %arg9: memref<1x1xf32, #tpu.memory_space<vmem>>, %arg10: memref<2x1x1xf32, #tpu.memory_space<vmem>>, %arg11: memref<40x128xf32, #tpu.memory_space<vmem>>, %arg12: memref<36x256xf32, #tpu.memory_space<vmem>>) attributes {dimension_semantics = [#tpu.dimension_semantics<parallel>], iteration_bounds = array<i64: 1>, scalar_prefetch = 0 : i64, scratch_operands = 2 : i64, tpu.core_type = #tpu.core_type<tc>, window_params = [{transform_indices = @transform_0, window_bounds = array<i64: 32, 15>}, {pipeline_mode = #tpu.pipeline_mode<synchronous>, transform_indices = @transform_1, window_bounds = array<i64: 15, 128>}, {pipeline_mode = #tpu.pipeline_mode<synchronous>, transform_indices = @transform_2, window_bounds = array<i64: 16, 128>}, {pipeline_mode = #tpu.pipeline_mode<synchronous>, transform_indices = @transform_3, window_bounds = array<i64: 640, 256>}, {pipeline_mode = #tpu.pipeline_mode<synchronous>, transform_indices = @transform_4, window_bounds = array<i64: 1, 256>}, {pipeline_mode = #tpu.pipeline_mode<synchronous>, transform_indices = @transform_5, window_bounds = array<i64: 768, 512>}, {pipeline_mode = #tpu.pipeline_mode<synchronous>, transform_indices = @transform_6, window_bounds = array<i64: 1, 512>}, {pipeline_mode = #tpu.pipeline_mode<synchronous>, transform_indices = @transform_7, window_bounds = array<i64: 16, 512>}, {pipeline_mode = #tpu.pipeline_mode<synchronous>, transform_indices = @transform_8, window_bounds = array<i64: 1, 1>}, {transform_indices = @transform_9, window_bounds = array<i64: 2, 1, 1>}]} {
    %cst = arith.constant 0.000000e+00 : f32
    %0 = vector.broadcast %cst : f32 to vector<2x128xf32>
    %cst_0 = arith.constant 0.000000e+00 : f32
    %1 = vector.broadcast %cst_0 : f32 to vector<1x256xf32>
    %c0 = arith.constant 0 : index
    %c0_1 = arith.constant 0 : index
    %2 = vector.load %arg11[%c0, %c0_1] : memref<40x128xf32, #tpu.memory_space<vmem>>, vector<2x128xf32>
    tpu.vector_store %arg11[%c0, %c0_1], %0 {strides = array<i32>} : memref<40x128xf32, #tpu.memory_space<vmem>>, vector<2x128xf32>,
    %c18 = arith.constant 18 : index
    %c0_2 = arith.constant 0 : index
    %3 = vector.load %arg11[%c18, %c0_2] : memref<40x128xf32, #tpu.memory_space<vmem>>, vector<2x128xf32>
    tpu.vector_store %arg11[%c18, %c0_2], %0 {strides = array<i32>} : memref<40x128xf32, #tpu.memory_space<vmem>>, vector<2x128xf32>,
    %c0_3 = arith.constant 0 : index
    %c0_4 = arith.constant 0 : index
    %4 = vector.load %arg12[%c0_3, %c0_4] : memref<36x256xf32, #tpu.memory_space<vmem>>, vector<1x256xf32>
    tpu.vector_store %arg12[%c0_3, %c0_4], %1 {strides = array<i32>} : memref<36x256xf32, #tpu.memory_space<vmem>>, vector<1x256xf32>,
    %c17 = arith.constant 17 : index
    %c0_5 = arith.constant 0 : index
    %5 = vector.load %arg12[%c17, %c0_5] : memref<36x256xf32, #tpu.memory_space<vmem>>, vector<1x256xf32>
    tpu.vector_store %arg12[%c17, %c0_5], %1 {strides = array<i32>} : memref<36x256xf32, #tpu.memory_space<vmem>>, vector<1x256xf32>,
    %c20 = arith.constant 20 : index
    %c0_6 = arith.constant 0 : index
    %6 = vector.load %arg11[%c20, %c0_6] : memref<40x128xf32, #tpu.memory_space<vmem>>, vector<2x128xf32>
    tpu.vector_store %arg11[%c20, %c0_6], %0 {strides = array<i32>} : memref<40x128xf32, #tpu.memory_space<vmem>>, vector<2x128xf32>,
    %c38 = arith.constant 38 : index
    %c0_7 = arith.constant 0 : index
    %7 = vector.load %arg11[%c38, %c0_7] : memref<40x128xf32, #tpu.memory_space<vmem>>, vector<2x128xf32>
    tpu.vector_store %arg11[%c38, %c0_7], %0 {strides = array<i32>} : memref<40x128xf32, #tpu.memory_space<vmem>>, vector<2x128xf32>,
    %c18_8 = arith.constant 18 : index
    %c0_9 = arith.constant 0 : index
    %8 = vector.load %arg12[%c18_8, %c0_9] : memref<36x256xf32, #tpu.memory_space<vmem>>, vector<1x256xf32>
    tpu.vector_store %arg12[%c18_8, %c0_9], %1 {strides = array<i32>} : memref<36x256xf32, #tpu.memory_space<vmem>>, vector<1x256xf32>,
    %c35 = arith.constant 35 : index
    %c0_10 = arith.constant 0 : index
    %9 = vector.load %arg12[%c35, %c0_10] : memref<36x256xf32, #tpu.memory_space<vmem>>, vector<1x256xf32>
    tpu.vector_store %arg12[%c35, %c0_10], %1 {strides = array<i32>} : memref<36x256xf32, #tpu.memory_space<vmem>>, vector<1x256xf32>,
    %c0_11 = arith.constant 0 : index
    %c0_12 = arith.constant 0 : index
    %10 = vector.load %arg1[%c0_11, %c0_12] : memref<32x15xf32, #tpu.memory_space<vmem>>, vector<32x15xf32>
    %c0_13 = arith.constant 0 : index
    %c0_14 = arith.constant 0 : index
    %11 = vector.load %arg2[%c0_13, %c0_14] : memref<15x128xf32, #tpu.memory_space<vmem>>, vector<15x128xf32>
    %cst_15 = arith.constant dense<0.000000e+00> : vector<32x128xf32>
    %12 = tpu.matmul %10, %11, %cst_15 {dimension_numbers = #tpu.dot_dimension_numbers<[1], [0], [0], [1], [0, 0, 1, 1], [], []>} : vector<32x15xf32>, vector<15x128xf32>, vector<32x128xf32> -> vector<32x128xf32>
    %13 = vector.extract_strided_slice %12 {offsets = [0, 0], sizes = [16, 128], strides = [1, 1]} : vector<32x128xf32> to vector<16x128xf32>
    %c0_16 = arith.constant 0 : index
    %c0_17 = arith.constant 0 : index
    %14 = vector.load %arg3[%c0_16, %c0_17] : memref<16x128xf32, #tpu.memory_space<vmem>>, vector<16x128xf32>
    %15 = arith.addf %13, %14 : vector<16x128xf32>
    %cst_18 = arith.constant 0.000000e+00 : f32
    %16 = vector.broadcast %cst_18 : f32 to vector<16x128xf32>
    %17 = arith.cmpf oge, %15, %16 : vector<16x128xf32>
    %cst_19 = arith.constant 2.000000e-01 : f32
    %18 = vector.broadcast %cst_19 : f32 to vector<16x128xf32>
    %19 = arith.mulf %18, %15 : vector<16x128xf32>
    %20 = arith.select %17, %15, %19 : vector<16x128xi1>, vector<16x128xf32>
    %c2 = arith.constant 2 : index
    %c0_20 = arith.constant 0 : index
    %21 = vector.load %arg11[%c2, %c0_20] : memref<40x128xf32, #tpu.memory_space<vmem>>, vector<16x128xf32>
    tpu.vector_store %arg11[%c2, %c0_20], %20 {strides = array<i32>} : memref<40x128xf32, #tpu.memory_space<vmem>>, vector<16x128xf32>,
    %22 = vector.extract_strided_slice %12 {offsets = [16, 0], sizes = [16, 128], strides = [1, 1]} : vector<32x128xf32> to vector<16x128xf32>
    %c0_21 = arith.constant 0 : index
    %c0_22 = arith.constant 0 : index
    %23 = vector.load %arg3[%c0_21, %c0_22] : memref<16x128xf32, #tpu.memory_space<vmem>>, vector<16x128xf32>
    %24 = arith.addf %22, %23 : vector<16x128xf32>
    %cst_23 = arith.constant 0.000000e+00 : f32
    %25 = vector.broadcast %cst_23 : f32 to vector<16x128xf32>
    %26 = arith.cmpf oge, %24, %25 : vector<16x128xf32>
    %cst_24 = arith.constant 2.000000e-01 : f32
    %27 = vector.broadcast %cst_24 : f32 to vector<16x128xf32>
    %28 = arith.mulf %27, %24 : vector<16x128xf32>
    %29 = arith.select %26, %24, %28 : vector<16x128xi1>, vector<16x128xf32>
    %c22 = arith.constant 22 : index
    %c0_25 = arith.constant 0 : index
    %30 = vector.load %arg11[%c22, %c0_25] : memref<40x128xf32, #tpu.memory_space<vmem>>, vector<16x128xf32>
    tpu.vector_store %arg11[%c22, %c0_25], %29 {strides = array<i32>} : memref<40x128xf32, #tpu.memory_space<vmem>>, vector<16x128xf32>,
    %c0_26 = arith.constant 0 : index
    %c0_27 = arith.constant 0 : index
    %31 = vector.load %arg11[%c0_26, %c0_27] : memref<40x128xf32, #tpu.memory_space<vmem>>, vector<16x128xf32>
    %c20_28 = arith.constant 20 : index
    %c0_29 = arith.constant 0 : index
    %32 = vector.load %arg11[%c20_28, %c0_29] : memref<40x128xf32, #tpu.memory_space<vmem>>, vector<16x128xf32>
    %33 = tpu.concatenate %31, %32 in 0 : vector<16x128xf32>, vector<16x128xf32> -> vector<32x128xf32>
    %c1 = arith.constant 1 : index
    %c0_30 = arith.constant 0 : index
    %34 = vector.load %arg11[%c1, %c0_30] : memref<40x128xf32, #tpu.memory_space<vmem>>, vector<16x128xf32>
    %c21 = arith.constant 21 : index
    %c0_31 = arith.constant 0 : index
    %35 = vector.load %arg11[%c21, %c0_31] : memref<40x128xf32, #tpu.memory_space<vmem>>, vector<16x128xf32>
    %36 = tpu.concatenate %34, %35 in 0 : vector<16x128xf32>, vector<16x128xf32> -> vector<32x128xf32>
    %c2_32 = arith.constant 2 : index
    %c0_33 = arith.constant 0 : index
    %37 = vector.load %arg11[%c2_32, %c0_33] : memref<40x128xf32, #tpu.memory_space<vmem>>, vector<16x128xf32>
    %c22_34 = arith.constant 22 : index
    %c0_35 = arith.constant 0 : index
    %38 = vector.load %arg11[%c22_34, %c0_35] : memref<40x128xf32, #tpu.memory_space<vmem>>, vector<16x128xf32>
    %39 = tpu.concatenate %37, %38 in 0 : vector<16x128xf32>, vector<16x128xf32> -> vector<32x128xf32>
    %c3 = arith.constant 3 : index
    %c0_36 = arith.constant 0 : index
    %40 = vector.load %arg11[%c3, %c0_36] : memref<40x128xf32, #tpu.memory_space<vmem>>, vector<16x128xf32>
    %c23 = arith.constant 23 : index
    %c0_37 = arith.constant 0 : index
    %41 = vector.load %arg11[%c23, %c0_37] : memref<40x128xf32, #tpu.memory_space<vmem>>, vector<16x128xf32>
    %42 = tpu.concatenate %40, %41 in 0 : vector<16x128xf32>, vector<16x128xf32> -> vector<32x128xf32>
    %c4 = arith.constant 4 : index
    %c0_38 = arith.constant 0 : index
    %43 = vector.load %arg11[%c4, %c0_38] : memref<40x128xf32, #tpu.memory_space<vmem>>, vector<16x128xf32>
    %c24 = arith.constant 24 : index
    %c0_39 = arith.constant 0 : index
    %44 = vector.load %arg11[%c24, %c0_39] : memref<40x128xf32, #tpu.memory_space<vmem>>, vector<16x128xf32>
    %45 = tpu.concatenate %43, %44 in 0 : vector<16x128xf32>, vector<16x128xf32> -> vector<32x128xf32>
    %46 = tpu.concatenate %33, %36, %39, %42, %45 in 1 : vector<32x128xf32>, vector<32x128xf32>, vector<32x128xf32>, vector<32x128xf32>, vector<32x128xf32> -> vector<32x640xf32>
    %c0_40 = arith.constant 0 : index
    %c0_41 = arith.constant 0 : index
    %47 = vector.load %arg4[%c0_40, %c0_41] : memref<640x256xf32, #tpu.memory_space<vmem>>, vector<640x256xf32>
    %cst_42 = arith.constant dense<0.000000e+00> : vector<32x256xf32>
    %48 = tpu.matmul %46, %47, %cst_42 {dimension_numbers = #tpu.dot_dimension_numbers<[1], [0], [0], [1], [0, 0, 1, 1], [], []>} : vector<32x640xf32>, vector<640x256xf32>, vector<32x256xf32> -> vector<32x256xf32>
    %c0_43 = arith.constant 0 : index
    %c0_44 = arith.constant 0 : index
    %49 = vector.load %arg5[%c0_43, %c0_44] : memref<1x256xf32, #tpu.memory_space<vmem>>, vector<1x256xf32>
    %50 = vector.broadcast %49 : vector<1x256xf32> to vector<32x256xf32>
    %51 = arith.addf %48, %50 : vector<32x256xf32>
    %cst_45 = arith.constant 0.000000e+00 : f32
    %52 = vector.broadcast %cst_45 : f32 to vector<32x256xf32>
    %53 = arith.cmpf oge, %51, %52 : vector<32x256xf32>
    %cst_46 = arith.constant 2.000000e-01 : f32
    %54 = vector.broadcast %cst_46 : f32 to vector<32x256xf32>
    %55 = arith.mulf %54, %51 : vector<32x256xf32>
    %56 = arith.select %53, %51, %55 : vector<32x256xi1>, vector<32x256xf32>
    %57 = vector.extract_strided_slice %56 {offsets = [0, 0], sizes = [16, 256], strides = [1, 1]} : vector<32x256xf32> to vector<16x256xf32>
    %c1_47 = arith.constant 1 : index
    %c0_48 = arith.constant 0 : index
    %58 = vector.load %arg12[%c1_47, %c0_48] : memref<36x256xf32, #tpu.memory_space<vmem>>, vector<16x256xf32>
    tpu.vector_store %arg12[%c1_47, %c0_48], %57 {strides = array<i32>} : memref<36x256xf32, #tpu.memory_space<vmem>>, vector<16x256xf32>,
    %59 = vector.extract_strided_slice %56 {offsets = [16, 0], sizes = [16, 256], strides = [1, 1]} : vector<32x256xf32> to vector<16x256xf32>
    %c19 = arith.constant 19 : index
    %c0_49 = arith.constant 0 : index
    %60 = vector.load %arg12[%c19, %c0_49] : memref<36x256xf32, #tpu.memory_space<vmem>>, vector<16x256xf32>
    tpu.vector_store %arg12[%c19, %c0_49], %59 {strides = array<i32>} : memref<36x256xf32, #tpu.memory_space<vmem>>, vector<16x256xf32>,
    %c0_50 = arith.constant 0 : index
    %c0_51 = arith.constant 0 : index
    %61 = vector.load %arg12[%c0_50, %c0_51] : memref<36x256xf32, #tpu.memory_space<vmem>>, vector<16x256xf32>
    %c18_52 = arith.constant 18 : index
    %c0_53 = arith.constant 0 : index
    %62 = vector.load %arg12[%c18_52, %c0_53] : memref<36x256xf32, #tpu.memory_space<vmem>>, vector<16x256xf32>
    %63 = tpu.concatenate %61, %62 in 0 : vector<16x256xf32>, vector<16x256xf32> -> vector<32x256xf32>
    %c1_54 = arith.constant 1 : index
    %c0_55 = arith.constant 0 : index
    %64 = vector.load %arg12[%c1_54, %c0_55] : memref<36x256xf32, #tpu.memory_space<vmem>>, vector<16x256xf32>
    %c19_56 = arith.constant 19 : index
    %c0_57 = arith.constant 0 : index
    %65 = vector.load %arg12[%c19_56, %c0_57] : memref<36x256xf32, #tpu.memory_space<vmem>>, vector<16x256xf32>
    %66 = tpu.concatenate %64, %65 in 0 : vector<16x256xf32>, vector<16x256xf32> -> vector<32x256xf32>
    %c2_58 = arith.constant 2 : index
    %c0_59 = arith.constant 0 : index
    %67 = vector.load %arg12[%c2_58, %c0_59] : memref<36x256xf32, #tpu.memory_space<vmem>>, vector<16x256xf32>
    %c20_60 = arith.constant 20 : index
    %c0_61 = arith.constant 0 : index
    %68 = vector.load %arg12[%c20_60, %c0_61] : memref<36x256xf32, #tpu.memory_space<vmem>>, vector<16x256xf32>
    %69 = tpu.concatenate %67, %68 in 0 : vector<16x256xf32>, vector<16x256xf32> -> vector<32x256xf32>
    %70 = tpu.concatenate %63, %66, %69 in 1 : vector<32x256xf32>, vector<32x256xf32>, vector<32x256xf32> -> vector<32x768xf32>
    %c0_62 = arith.constant 0 : index
    %c0_63 = arith.constant 0 : index
    %71 = vector.load %arg6[%c0_62, %c0_63] : memref<768x512xf32, #tpu.memory_space<vmem>>, vector<768x512xf32>
    %cst_64 = arith.constant dense<0.000000e+00> : vector<32x512xf32>
    %72 = tpu.matmul %70, %71, %cst_64 {dimension_numbers = #tpu.dot_dimension_numbers<[1], [0], [0], [1], [0, 0, 1, 1], [], []>} : vector<32x768xf32>, vector<768x512xf32>, vector<32x512xf32> -> vector<32x512xf32>
    %c0_65 = arith.constant 0 : index
    %c0_66 = arith.constant 0 : index
    %73 = vector.load %arg7[%c0_65, %c0_66] : memref<1x512xf32, #tpu.memory_space<vmem>>, vector<1x512xf32>
    %74 = vector.broadcast %73 : vector<1x512xf32> to vector<32x512xf32>
    %75 = arith.addf %72, %74 : vector<32x512xf32>
    %cst_67 = arith.constant 0.000000e+00 : f32
    %76 = vector.broadcast %cst_67 : f32 to vector<32x512xf32>
    %77 = arith.cmpf oge, %75, %76 : vector<32x512xf32>
    %cst_68 = arith.constant 2.000000e-01 : f32
    %78 = vector.broadcast %cst_68 : f32 to vector<32x512xf32>
    %79 = arith.mulf %78, %75 : vector<32x512xf32>
    %80 = arith.select %77, %75, %79 : vector<32x512xi1>, vector<32x512xf32>
    %c0_69 = arith.constant 0 : index
    %c0_70 = arith.constant 0 : index
    %81 = vector.load %arg8[%c0_69, %c0_70] : memref<16x512xf32, #tpu.memory_space<vmem>>, vector<16x512xf32>
    %82 = vector.extract_strided_slice %80 {offsets = [0, 0], sizes = [16, 512], strides = [1, 1]} : vector<32x512xf32> to vector<16x512xf32>
    %83 = arith.mulf %82, %81 : vector<16x512xf32>
    %cst_71 = arith.constant dense<0.000000e+00> : vector<512xf32>
    %84 = vector.multi_reduction <add>, %83, %cst_71 [0] : vector<16x512xf32> to vector<512xf32>
    %85 = vector.shape_cast %84 : vector<512xf32> to vector<1x512xf32>
    %cst_72 = arith.constant dense<0.000000e+00> : vector<1xf32>
    %86 = vector.multi_reduction <add>, %85, %cst_72 [1] : vector<1x512xf32> to vector<1xf32>
    %87 = vector.shape_cast %86 : vector<1xf32> to vector<1x1xf32>
    %c0_73 = arith.constant 0 : index
    %c0_74 = arith.constant 0 : index
    %88 = vector.load %arg9[%c0_73, %c0_74] : memref<1x1xf32, #tpu.memory_space<vmem>>, vector<1x1xf32>
    %89 = arith.addf %87, %88 : vector<1x1xf32>
    %c0_75 = arith.constant 0 : index
    %c0_76 = arith.constant 0 : index
    %c0_77 = arith.constant 0 : index
    %90 = vector.load %arg10[%c0_75, %c0_76, %c0_77] : memref<2x1x1xf32, #tpu.memory_space<vmem>>, vector<1x1x1xf32>
    %91 = vector.shape_cast %90 : vector<1x1x1xf32> to vector<1x1xf32>
    %92 = vector.shape_cast %89 : vector<1x1xf32> to vector<1x1x1xf32>
    tpu.vector_store %arg10[%c0_75, %c0_76, %c0_77], %92 {strides = array<i32>} : memref<2x1x1xf32, #tpu.memory_space<vmem>>, vector<1x1x1xf32>,
    %93 = vector.extract_strided_slice %80 {offsets = [16, 0], sizes = [16, 512], strides = [1, 1]} : vector<32x512xf32> to vector<16x512xf32>
    %94 = arith.mulf %93, %81 : vector<16x512xf32>
    %cst_78 = arith.constant dense<0.000000e+00> : vector<512xf32>
    %95 = vector.multi_reduction <add>, %94, %cst_78 [0] : vector<16x512xf32> to vector<512xf32>
    %96 = vector.shape_cast %95 : vector<512xf32> to vector<1x512xf32>
    %cst_79 = arith.constant dense<0.000000e+00> : vector<1xf32>
    %97 = vector.multi_reduction <add>, %96, %cst_79 [1] : vector<1x512xf32> to vector<1xf32>
    %98 = vector.shape_cast %97 : vector<1xf32> to vector<1x1xf32>
    %c0_80 = arith.constant 0 : index
    %c0_81 = arith.constant 0 : index
    %99 = vector.load %arg9[%c0_80, %c0_81] : memref<1x1xf32, #tpu.memory_space<vmem>>, vector<1x1xf32>
    %100 = arith.addf %98, %99 : vector<1x1xf32>
    %c1_82 = arith.constant 1 : index
    %c0_83 = arith.constant 0 : index
    %c0_84 = arith.constant 0 : index
    %101 = vector.load %arg10[%c1_82, %c0_83, %c0_84] : memref<2x1x1xf32, #tpu.memory_space<vmem>>, vector<1x1x1xf32>
    %102 = vector.shape_cast %101 : vector<1x1x1xf32> to vector<1x1xf32>
    %103 = vector.shape_cast %100 : vector<1x1xf32> to vector<1x1x1xf32>
    tpu.vector_store %arg10[%c1_82, %c0_83, %c0_84], %103 {strides = array<i32>} : memref<2x1x1xf32, #tpu.memory_space<vmem>>, vector<1x1x1xf32>,
    return
  }
  func.func @transform_0(%arg0: i32) -> (i32, i32) {
    %c0_i32 = arith.constant 0 : i32
    %c0_i32_0 = arith.constant 0 : i32
    return %arg0, %c0_i32 : i32, i32
  }
  func.func @transform_1(%arg0: i32) -> (i32, i32) {
    %c0_i32 = arith.constant 0 : i32
    %c0_i32_0 = arith.constant 0 : i32
    %c0_i32_1 = arith.constant 0 : i32
    return %c0_i32, %c0_i32_0 : i32, i32
  }
  func.func @transform_2(%arg0: i32) -> (i32, i32) {
    %c0_i32 = arith.constant 0 : i32
    %c0_i32_0 = arith.constant 0 : i32
    %c0_i32_1 = arith.constant 0 : i32
    return %c0_i32, %c0_i32_0 : i32, i32
  }
  func.func @transform_3(%arg0: i32) -> (i32, i32) {
    %c0_i32 = arith.constant 0 : i32
    %c0_i32_0 = arith.constant 0 : i32
    %c0_i32_1 = arith.constant 0 : i32
    return %c0_i32, %c0_i32_0 : i32, i32
  }
  func.func @transform_4(%arg0: i32) -> (i32, i32) {
    %c0_i32 = arith.constant 0 : i32
    %c0_i32_0 = arith.constant 0 : i32
    %c0_i32_1 = arith.constant 0 : i32
    return %c0_i32, %c0_i32_0 : i32, i32
  }
  func.func @transform_5(%arg0: i32) -> (i32, i32) {
    %c0_i32 = arith.constant 0 : i32
    %c0_i32_0 = arith.constant 0 : i32
    %c0_i32_1 = arith.constant 0 : i32
    return %c0_i32, %c0_i32_0 : i32, i32
  }
  func.func @transform_6(%arg0: i32) -> (i32, i32) {
    %c0_i32 = arith.constant 0 : i32
    %c0_i32_0 = arith.constant 0 : i32
    %c0_i32_1 = arith.constant 0 : i32
    return %c0_i32, %c0_i32_0 : i32, i32
  }
  func.func @transform_7(%arg0: i32) -> (i32, i32) {
    %c0_i32 = arith.constant 0 : i32
    %c0_i32_0 = arith.constant 0 : i32
    %c0_i32_1 = arith.constant 0 : i32
    return %c0_i32, %c0_i32_0 : i32, i32
  }
  func.func @transform_8(%arg0: i32) -> (i32, i32) {
    %c0_i32 = arith.constant 0 : i32
    %c0_i32_0 = arith.constant 0 : i32
    %c0_i32_1 = arith.constant 0 : i32
    return %c0_i32, %c0_i32_0 : i32, i32
  }
  func.func @transform_9(%arg0: i32) -> (i32, i32, i32) {
    %c0_i32 = arith.constant 0 : i32
    %c0_i32_0 = arith.constant 0 : i32
    %c0_i32_1 = arith.constant 0 : i32
    return %arg0, %c0_i32, %c0_i32_0 : i32, i32, i32
  }
}

</mosaic_0001>

<llo_original>
// kernel: tpu_custom_call.1
$region0: #{tpu_custom_call.1}
  #allocation0 [shape = 'u32[]', space=smem, size = 0x4, offset = 0x4, fixed_abs, tag = 'smem constant byte address 0x4 - core index']
  #allocation1 [shape = 'u32[144,128]{1,0:T(1,128)}', space=vmem, size = 0x12000, scoped, tag = 'internal scratch']
  #allocation2 [shape = 'f32[40,128]{1,0:T(8,128)}', space=vmem, size = 0x5000, scoped, tag = 'scratch operand']
  #allocation3 [shape = 'f32[36,256]{1,0:T(8,128)}', space=vmem, size = 0xa000, scoped, tag = 'scratch operand']
  #allocation4 [shape = 'f32[1,1]{1,0:T(1,128)S(1)}', space=vmem, size = 0x200, scoped, tag = 'scoped memory for tpu_custom_call.1']
  %s0 = inlined_call_operand.vmem [shape: f32[32,15], index: 0, kind: input, shape index: {}]
  %s1 = inlined_call_operand.hbm [shape: f32[15,128], index: 1, kind: input, shape index: {}]
  %s2 = inlined_call_operand.hbm [shape: f32[16,128], index: 2, kind: input, shape index: {}]
  %s3 = inlined_call_operand.hbm [shape: f32[640,256], index: 3, kind: input, shape index: {}]
  %s4 = inlined_call_operand.hbm [shape: f32[1,256], index: 4, kind: input, shape index: {}]
  %s5 = inlined_call_operand.hbm [shape: f32[768,512], index: 5, kind: input, shape index: {}]
  %s6 = inlined_call_operand.hbm [shape: f32[1,512], index: 6, kind: input, shape index: {}]
  %s7 = inlined_call_operand.hbm [shape: f32[16,512], index: 7, kind: input, shape index: {}]
  %s8 = inlined_call_operand.<no memory space> [shape: f32[1,1], index: 8, kind: input, shape index: {}]
  %s9 = inlined_call_operand.vmem [shape: f32[2,1,1], index: 9, kind: output, shape index: {}]
  %s10 = sld [smem:[#allocation0]]
  $region74: #{tpu_custom_call.1} parent=0
    _
  %s12 = ssub.s32 1, %s10
  %s13 = scalar_select 0, %s12, %s10
  %v14 = vstv %s8
  %15 = vst [vmem:[#allocation4] sm:$0x1] %v14
  $region1: #{tpu_custom_call.1} parent=0
    #allocation5 [shape = 'u8[8192]{0}', space=vmem, size = 0x2000, scoped, tag = 'input window, operand 1, single buffered']
    #allocation6 [shape = 's32[1]{0}', space=sflag, size = 0x4, scoped, tag = 'scoped memory for tpu_custom_call.1']
    #allocation7 [shape = 'u8[8192]{0}', space=vmem, size = 0x2000, scoped, tag = 'input window, operand 2, single buffered']
    #allocation8 [shape = 's32[1]{0}', space=sflag, size = 0x4, scoped, tag = 'scoped memory for tpu_custom_call.1']
    #allocation9 [shape = 'u8[655360]{0}', space=vmem, size = 0xa0000, scoped, tag = 'input window, operand 3, single buffered']
    #allocation10 [shape = 'u8[1024]{0}', space=vmem, size = 0x400, scoped, tag = 'input window, operand 4, single buffered']
    #allocation11 [shape = 's32[1]{0}', space=sflag, size = 0x4, scoped, tag = 'scoped memory for tpu_custom_call.1']
    #allocation12 [shape = 'u8[1572864]{0}', space=vmem, size = 0x180000, scoped, tag = 'input window, operand 5, single buffered']
    #allocation13 [shape = 'u8[2048]{0}', space=vmem, size = 0x800, scoped, tag = 'input window, operand 6, single buffered']
    #allocation14 [shape = 's32[1]{0}', space=sflag, size = 0x4, scoped, tag = 'scoped memory for tpu_custom_call.1']
    #allocation15 [shape = 'u8[32768]{0}', space=vmem, size = 0x8000, scoped, tag = 'input window, operand 7, single buffered']
    %16 = vsyncpa [#allocation6], 0
    %17 = vsyncpa [#allocation8], 0
    %18 = vsyncpa [#allocation11], 0
    %19 = vsyncpa [#allocation14], 0
    // Predicated region
    $region2: #{tpu_custom_call.1} parent=1 // pred_check
      _
    $region3: #{tpu_custom_call.1} parent=1 // pred_check_branch
      %21 = sbr.rel (0) target = $region5
    $region4: #{tpu_custom_call.1} parent=1 // pred_region
      _
    $region5: #{tpu_custom_call.1} parent=1 // pred_fallthru
      _
    // Predicated region
    $region6: #{tpu_custom_call.1} parent=1 // pred_check
      _
    $region7: #{tpu_custom_call.1} parent=1 // pred_check_branch
      %23 = sbr.rel (0) target = $region9
    $region8: #{tpu_custom_call.1} parent=1 // pred_region
      %s25 = ssub.s32 256, 256
      %26 = vsyncadd [#allocation6], %s25
      %s27 = sshll.u32 [#allocation5], 4
      %s28 = int_to_ptr.vmem [resolvable:$true] %s27
      %33 = dma.hbm_to_vmem [thread:$0]  %s1, 256, %s28, [#allocation6], 128, 128, 8
    $region9: #{tpu_custom_call.1} parent=1 // pred_fallthru
      _
    // Predicated region
    $region10: #{tpu_custom_call.1} parent=1 // pred_check
      _
    $region11: #{tpu_custom_call.1} parent=1 // pred_check_branch
      %35 = sbr.rel (0) target = $region13
    $region12: #{tpu_custom_call.1} parent=1 // pred_region
      %s37 = ssub.s32 256, 256
      %38 = vsyncadd [#allocation8], %s37
      %s39 = sshll.u32 [#allocation7], 4
      %s40 = int_to_ptr.vmem [resolvable:$true] %s39
      %45 = dma.hbm_to_vmem [thread:$0]  %s2, 256, %s40, [#allocation8], 128, 128, 8
    $region13: #{tpu_custom_call.1} parent=1 // pred_fallthru
      _
    // Predicated region
    $region14: #{tpu_custom_call.1} parent=1 // pred_check
      _
    $region15: #{tpu_custom_call.1} parent=1 // pred_check_branch
      %47 = sbr.rel (0) target = $region17
    $region16: #{tpu_custom_call.1} parent=1 // pred_region
      %s49 = ssub.s32 20480, 20480
      %50 = vsyncadd [#allocation8], %s49
      %s51 = sshll.u32 [#allocation9], 4
      %s52 = int_to_ptr.vmem [resolvable:$true] %s51
      %57 = dma.hbm_to_vmem [thread:$0]  %s3, 20480, %s52, [#allocation8], 256, 256, 16
    $region17: #{tpu_custom_call.1} parent=1 // pred_fallthru
      _
    // Predicated region
    $region18: #{tpu_custom_call.1} parent=1 // pred_check
      _
    $region19: #{tpu_custom_call.1} parent=1 // pred_check_branch
      %59 = sbr.rel (0) target = $region21
    $region20: #{tpu_custom_call.1} parent=1 // pred_region
      %s61 = ssub.s32 32, 32
      %62 = vsyncadd [#allocation11], %s61
      %s64 = sshll.u32 [#allocation10], 4
      %s65 = int_to_ptr.vmem [resolvable:$true] %s64
      %67 = dma.hbm_to_vmem [thread:$0]  %s4, 32, %s65, [#allocation11]
    $region21: #{tpu_custom_call.1} parent=1 // pred_fallthru
      _
    // Predicated region
    $region22: #{tpu_custom_call.1} parent=1 // pred_check
      _
    $region23: #{tpu_custom_call.1} parent=1 // pred_check_branch
      %69 = sbr.rel (0) target = $region25
    $region24: #{tpu_custom_call.1} parent=1 // pred_region
      %s71 = ssub.s32 49152, 49152
      %72 = vsyncadd [#allocation11], %s71
      %s73 = sshll.u32 [#allocation12], 4
      %s74 = int_to_ptr.vmem [resolvable:$true] %s73
      %79 = dma.hbm_to_vmem [thread:$0]  %s5, 49152, %s74, [#allocation11], 512, 512, 32
    $region25: #{tpu_custom_call.1} parent=1 // pred_fallthru
      _
    // Predicated region
    $region26: #{tpu_custom_call.1} parent=1 // pred_check
      _
    $region27: #{tpu_custom_call.1} parent=1 // pred_check_branch
      %81 = sbr.rel (0) target = $region29
    $region28: #{tpu_custom_call.1} parent=1 // pred_region
      %s83 = ssub.s32 64, 64
      %84 = vsyncadd [#allocation14], %s83
      %s86 = sshll.u32 [#allocation13], 4
      %s87 = int_to_ptr.vmem [resolvable:$true] %s86
      %89 = dma.hbm_to_vmem [thread:$0]  %s6, 64, %s87, [#allocation14]
    $region29: #{tpu_custom_call.1} parent=1 // pred_fallthru
      _
    // Predicated region
    $region30: #{tpu_custom_call.1} parent=1 // pred_check
      _
    $region31: #{tpu_custom_call.1} parent=1 // pred_check_branch
      %91 = sbr.rel (0) target = $region33
    $region32: #{tpu_custom_call.1} parent=1 // pred_region
      %s93 = ssub.s32 1024, 1024
      %94 = vsyncadd [#allocation14], %s93
      %s95 = sshll.u32 [#allocation15], 4
      %s96 = int_to_ptr.vmem [resolvable:$true] %s95
      %101 = dma.hbm_to_vmem [thread:$0]  %s7, 1024, %s96, [#allocation14], 512, 512, 32
    $region33: #{tpu_custom_call.1} parent=1 // pred_fallthru
      _
    // Predicated region
    $region34: #{tpu_custom_call.1} parent=1 // pred_check
      _
    $region35: #{tpu_custom_call.1} parent=1 // pred_check_branch
      %103 = sbr.rel (0) target = $region37
    $region36: #{tpu_custom_call.1} parent=1 // pred_region
      _
    $region37: #{tpu_custom_call.1} parent=1 // pred_fallthru
      _
    // Predicated region
    $region38: #{tpu_custom_call.1} parent=1 // pred_check
      _
    $region39: #{tpu_custom_call.1} parent=1 // pred_check_branch
      %105 = sbr.rel (0) target = $region41
    $region40: #{tpu_custom_call.1} parent=1 // pred_region
      %106 = dma.done [#allocation6], 256
    $region41: #{tpu_custom_call.1} parent=1 // pred_fallthru
      _
    // Predicated region
    $region42: #{tpu_custom_call.1} parent=1 // pred_check
      _
    $region43: #{tpu_custom_call.1} parent=1 // pred_check_branch
      %108 = sbr.rel (0) target = $region45
    $region44: #{tpu_custom_call.1} parent=1 // pred_region
      %109 = dma.done [#allocation8], 256
    $region45: #{tpu_custom_call.1} parent=1 // pred_fallthru
      _
    // Predicated region
    $region46: #{tpu_custom_call.1} parent=1 // pred_check
      _
    $region47: #{tpu_custom_call.1} parent=1 // pred_check_branch
      %111 = sbr.rel (0) target = $region49
    $region48: #{tpu_custom_call.1} parent=1 // pred_region
      %112 = dma.done [#allocation8], 20480
    $region49: #{tpu_custom_call.1} parent=1 // pred_fallthru
      _
    // Predicated region
    $region50: #{tpu_custom_call.1} parent=1 // pred_check
      _
    $region51: #{tpu_custom_call.1} parent=1 // pred_check_branch
      %114 = sbr.rel (0) target = $region53
    $region52: #{tpu_custom_call.1} parent=1 // pred_region
      %115 = dma.done [#allocation11], 32
    $region53: #{tpu_custom_call.1} parent=1 // pred_fallthru
      _
    // Predicated region
    $region54: #{tpu_custom_call.1} parent=1 // pred_check
      _
    $region55: #{tpu_custom_call.1} parent=1 // pred_check_branch
      %117 = sbr.rel (0) target = $region57
    $region56: #{tpu_custom_call.1} parent=1 // pred_region
      %118 = dma.done [#allocation11], 49152
    $region57: #{tpu_custom_call.1} parent=1 // pred_fallthru
      _
    // Predicated region
    $region58: #{tpu_custom_call.1} parent=1 // pred_check
      _
    $region59: #{tpu_custom_call.1} parent=1 // pred_check_branch
      %120 = sbr.rel (0) target = $region61
    $region60: #{tpu_custom_call.1} parent=1 // pred_region
      %121 = dma.done [#allocation14], 64
    $region61: #{tpu_custom_call.1} parent=1 // pred_fallthru
      _
    // Predicated region
    $region62: #{tpu_custom_call.1} parent=1 // pred_check
      _
    $region63: #{tpu_custom_call.1} parent=1 // pred_check_branch
      %123 = sbr.rel (0) target = $region65
    $region64: #{tpu_custom_call.1} parent=1 // pred_region
      %124 = dma.done [#allocation14], 1024
    $region65: #{tpu_custom_call.1} parent=1 // pred_fallthru
      _
    %125 = vst [vmem:[#allocation2] sm:$0x3] 0.0
    %126 = vst [vmem:[#allocation2 + $0x12] sm:$0x3] 0.0
    %v127 = vlaneseq
    %vm128 = vcmp.ge.s32.totalorder %v127, 0
    %vm129 = vcmp.lt.s32.totalorder %v127, 256
    %vm130 = vmand %vm128, %vm129
    %131 = vst.msk [vmem:[#allocation3] ss:$8 sm:$0x3] %vm130, 0.0
    %132 = vst.msk [vmem:[#allocation3] ss:$8 sm:$0x0] %vm130, 0.0
    %s133 = scalar_lea.vmem [#allocation3], 33
    %134 = vst.msk [vmem:[%s133] ss:$8 sm:$0x3] %vm130, 0.0
    %135 = vst.msk [vmem:[%s133] ss:$8 sm:$0x0] %vm130, 0.0
    %136 = vst [vmem:[#allocation2 + $0x14] sm:$0x3] 0.0
    %137 = vst [vmem:[#allocation2 + $0x26] sm:$0x3] 0.0
    %s138 = scalar_lea.vmem [#allocation3], 34
    %139 = vst.msk [vmem:[%s138] ss:$8 sm:$0x3] %vm130, 0.0
    %140 = vst.msk [vmem:[%s138] ss:$8 sm:$0x0] %vm130, 0.0
    %s141 = scalar_lea.vmem [#allocation3], 67
    %142 = vst.msk [vmem:[%s141] ss:$8 sm:$0x3] %vm130, 0.0
    %143 = vst.msk [vmem:[%s141] ss:$8 sm:$0x0] %vm130, 0.0
    %v144 = vld [vmem:[%s0] sm:$0xff]
    %v145 = vld [vmem:[%s0 + $0x8] sm:$0xff]
    %v146 = vld [vmem:[%s0 + $0x10] sm:$0xff]
    %v147 = vld [vmem:[%s0 + $0x18] sm:$0xff]
    %v148 = vld [vmem:[#allocation5] sm:$0xff]
    %v149 = vld [vmem:[#allocation5 + $0x8] sm:$0x7f]
    %vm150 = vcmask 121856
    %v152 = vsel %vm150, %v144, 0
    %v155 = vsel %vm150, %v145, 0
    %v158 = vsel %vm150, %v146, 0
    %v161 = vsel %vm150, %v147, 0
    %vm163 = vcmask 1046528
    %v165 = vsel %vm163, %v149, 0
    %167 = vmatprep.subr.mxu0 0.0
    %168 = vmatpush1.msra.mxu0 0.0
    %169 = vmatprep.subr.mxu0 0.0
    %170 = vmatpush1.msra.mxu0 0.0
    %171 = vmatprep.subr.mxu0 0.0
    %172 = vmatpush1.msra.mxu0 0.0
    %173 = vmatprep.subr.mxu0 0.0
    %174 = vmatpush1.msra.mxu0 0.0
    %175 = vmatprep.subr.mxu0 0.0
    %176 = vmatpush1.msra.mxu0 0.0
    %177 = vmatprep.subr.mxu0 0.0
    %178 = vmatpush1.msra.mxu0 0.0
    %179 = vmatprep.subr.mxu0 0.0
    %180 = vmatpush1.msra.mxu0 0.0
    %181 = vmatprep.subr.mxu0 0.0
    %182 = vmatpush1.msra.mxu0 0.0
    %183 = vmatprep.subr.mxu0 0.0
    %184 = vmatpush1.msra.mxu0 0.0
    %185 = vmatprep.subr.mxu0 0.0
    %186 = vmatpush1.msra.mxu0 0.0
    %187 = vmatprep.subr.mxu0 0.0
    %188 = vmatpush1.msra.mxu0 0.0
    %189 = vmatprep.subr.mxu0 0.0
    %190 = vmatpush1.msra.mxu0 0.0
    %191 = vmatprep.subr.mxu0 0.0
    %192 = vmatpush1.msra.mxu0 0.0
    %193 = vmatprep.subr.mxu0 0.0
    %194 = vmatpush1.msra.mxu0 0.0
    %195 = vmatprep.subr.mxu0 0.0
    %196 = vmatpush1.msra.mxu0 %v165
    %197 = vmatprep.subr.mxu0 0.0
    %198 = vmatpush1.msra.mxu0 %v148
    %199 = vmatprep.subr.mxu0 0.0
    %200 = vmatpush2.msra.mxu0 0.0
    %201 = vmatprep.subr.mxu0 0.0
    %202 = vmatpush2.msra.mxu0 0.0
    %203 = vmatprep.subr.mxu0 0.0
    %204 = vmatpush2.msra.mxu0 0.0
    %205 = vmatprep.subr.mxu0 0.0
    %206 = vmatpush2.msra.mxu0 0.0
    %207 = vmatprep.subr.mxu0 0.0
    %208 = vmatpush2.msra.mxu0 0.0
    %209 = vmatprep.subr.mxu0 0.0
    %210 = vmatpush2.msra.mxu0 0.0
    %211 = vmatprep.subr.mxu0 0.0
    %212 = vmatpush2.msra.mxu0 0.0
    %213 = vmatprep.subr.mxu0 0.0
    %214 = vmatpush2.msra.mxu0 0.0
    %215 = vmatprep.subr.mxu0 0.0
    %216 = vmatpush2.msra.mxu0 0.0
    %217 = vmatprep.subr.mxu0 0.0
    %218 = vmatpush2.msra.mxu0 0.0
    %219 = vmatprep.subr.mxu0 0.0
    %220 = vmatpush2.msra.mxu0 0.0
    %221 = vmatprep.subr.mxu0 0.0
    %222 = vmatpush2.msra.mxu0 0.0
    %223 = vmatprep.subr.mxu0 0.0
    %224 = vmatpush2.msra.mxu0 0.0
    %225 = vmatprep.subr.mxu0 0.0
    %226 = vmatpush2.msra.mxu0 0.0
    %227 = vmatprep.subr.mxu0 0.0
    %228 = vmatpush2.msra.mxu0 0.0
    %229 = vmatprep.subr.mxu0 0.0
    %230 = vmatpush2.msra.mxu0 0.0
    %231 = vmatprep.mubr.f32.mxu0 0.0
    %232 = vmatmul.mubr.f32.gmra.mxu0 %v152
    %v233 = vpop.f32.mrf.mxu0
    %v234 = vadd.f32 0.0, %v233
    %v235 = vpop.f32.mrf.mxu0
    %236 = vmatprep.mubr.f32.mxu0 0.0
    %237 = vmatmul.mubr.f32.gmra.mxu0 %v155
    %v238 = vpop.f32.mrf.mxu0
    %v239 = vadd.f32 0.0, %v238
    %v240 = vpop.f32.mrf.mxu0
    %241 = vmatprep.mubr.f32.mxu0 0.0
    %242 = vmatmul.mubr.f32.gmra.mxu0 %v158
    %v243 = vpop.f32.mrf.mxu0
    %v244 = vadd.f32 0.0, %v243
    %v245 = vpop.f32.mrf.mxu0
    %246 = vmatprep.mubr.f32.mxu0 0.0
    %247 = vmatmul.mubr.f32.gmra.mxu0 %v161
    %v248 = vpop.f32.mrf.mxu0
    %v249 = vadd.f32 0.0, %v248
    %v250 = vpop.f32.mrf.mxu0
    %251 = vdwg.mxu0
    %v252 = vld [vmem:[#allocation7] sm:$0xff]
    %v253 = vld [vmem:[#allocation7 + $0x8] sm:$0xff]
    %v254 = vadd.f32 %v234, %v252
    %v255 = vadd.f32 %v239, %v253
    %vm256 = vcmp.ge.f32.partialorder %v254, 0.0
    %vm257 = vcmp.ge.f32.partialorder %v255, 0.0
    %v258 = vmul.f32 %v254, 0.2
    %v259 = vmul.f32 %v255, 0.2
    %v260 = vsel %vm256, %v254, %v258
    %v261 = vsel %vm257, %v255, %v259
    %262 = vst [vmem:[#allocation2 + $0x2] sm:$0xff] %v260
    %263 = vst [vmem:[#allocation2 + $0xa] sm:$0xff] %v261
    %v264 = vld [vmem:[#allocation7] sm:$0xff]
    %v265 = vld [vmem:[#allocation7 + $0x8] sm:$0xff]
    %v266 = vadd.f32 %v244, %v264
    %v267 = vadd.f32 %v249, %v265
    %vm268 = vcmp.ge.f32.partialorder %v266, 0.0
    %vm269 = vcmp.ge.f32.partialorder %v267, 0.0
    %v270 = vmul.f32 %v266, 0.2
    %v271 = vmul.f32 %v267, 0.2
    %v272 = vsel %vm268, %v266, %v270
    %v273 = vsel %vm269, %v267, %v271
    %274 = vst [vmem:[#allocation2 + $0x16] sm:$0xff] %v272
    %275 = vst [vmem:[#allocation2 + $0x1e] sm:$0xff] %v273
    %v276 = vld [vmem:[#allocation2] sm:$0xff]
    %v277 = vld [vmem:[#allocation2 + $0x8] sm:$0xff]
    %v278 = vld [vmem:[#allocation2 + $0x14] sm:$0xff]
    %v279 = vld [vmem:[#allocation2 + $0x1c] sm:$0xff]
    %v280 = vld [vmem:[#allocation2 + $0x1] sm:$0xff]
    %v281 = vld [vmem:[#allocation2 + $0x9] sm:$0xff]
    %v282 = vld [vmem:[#allocation2 + $0x15] sm:$0xff]
    %v283 = vld [vmem:[#allocation2 + $0x1d] sm:$0xff]
    %v284 = vld [vmem:[#allocation2 + $0x2] sm:$0xff]
    %v285 = vld [vmem:[#allocation2 + $0xa] sm:$0xff]
    %v286 = vld [vmem:[#allocation2 + $0x16] sm:$0xff]
    %v287 = vld [vmem:[#allocation2 + $0x1e] sm:$0xff]
    %v288 = vld [vmem:[#allocation2 + $0x3] sm:$0xff]
    %v289 = vld [vmem:[#allocation2 + $0xb] sm:$0xff]
    %v290 = vld [vmem:[#allocation2 + $0x17] sm:$0xff]
    %v291 = vld [vmem:[#allocation2 + $0x1f] sm:$0xff]
    %v292 = vld [vmem:[#allocation2 + $0x4] sm:$0xff]
    %v293 = vld [vmem:[#allocation2 + $0xc] sm:$0xff]
    %v294 = vld [vmem:[#allocation2 + $0x18] sm:$0xff]
    %v295 = vld [vmem:[#allocation2 + $0x20] sm:$0xff]
    %v296 = vld [vmem:[#allocation9] sm:$0xff]
    %v297 = vld [vmem:[#allocation9 + $0x8] sm:$0xff]
    %v298 = vld [vmem:[#allocation9 + $0x10] sm:$0xff]
    %v299 = vld [vmem:[#allocation9 + $0x18] sm:$0xff]
    %v300 = vld [vmem:[#allocation9 + $0x20] sm:$0xff]
    %v301 = vld [vmem:[#allocation9 + $0x28] sm:$0xff]
    %v302 = vld [vmem:[#allocation9 + $0x30] sm:$0xff]
    %v303 = vld [vmem:[#allocation9 + $0x38] sm:$0xff]
    %v304 = vld [vmem:[#allocation9 + $0x40] sm:$0xff]
    %v305 = vld [vmem:[#allocation9 + $0x48] sm:$0xff]
    %v306 = vld [vmem:[#allocation9 + $0x50] sm:$0xff]
    %v307 = vld [vmem:[#allocation9 + $0x58] sm:$0xff]
    %v308 = vld [vmem:[#allocation9 + $0x60] sm:$0xff]
    %v309 = vld [vmem:[#allocation9 + $0x68] sm:$0xff]
    %v310 = vld [vmem:[#allocation9 + $0x70] sm:$0xff]
    %v311 = vld [vmem:[#allocation9 + $0x78] sm:$0xff]
    %v312 = vld [vmem:[#allocation9 + $0x80] sm:$0xff]
    %v313 = vld [vmem:[#allocation9 + $0x88] sm:$0xff]
    %v314 = vld [vmem:[#allocation9 + $0x90] sm:$0xff]
    %v315 = vld [vmem:[#allocation9 + $0x98] sm:$0xff]
    %v316 = vld [vmem:[#allocation9 + $0xa0] sm:$0xff]
    %v317 = vld [vmem:[#allocation9 + $0xa8] sm:$0xff]
    %v318 = vld [vmem:[#allocation9 + $0xb0] sm:$0xff]
    %v319 = vld [vmem:[#allocation9 + $0xb8] sm:$0xff]
    %v320 = vld [vmem:[#allocation9 + $0xc0] sm:$0xff]
    %v321 = vld [vmem:[#allocation9 + $0xc8] sm:$0xff]
    %v322 = vld [vmem:[#allocation9 + $0xd0] sm:$0xff]
    %v323 = vld [vmem:[#allocation9 + $0xd8] sm:$0xff]
    %v324 = vld [vmem:[#allocation9 + $0xe0] sm:$0xff]
    %v325 = vld [vmem:[#allocation9 + $0xe8] sm:$0xff]
    %v326 = vld [vmem:[#allocation9 + $0xf0] sm:$0xff]
    %v327 = vld [vmem:[#allocation9 + $0xf8] sm:$0xff]
    %v328 = vld [vmem:[#allocation9 + $0x100] sm:$0xff]
    %v329 = vld [vmem:[#allocation9 + $0x108] sm:$0xff]
    %v330 = vld [vmem:[#allocation9 + $0x110] sm:$0xff]
    %v331 = vld [vmem:[#allocation9 + $0x118] sm:$0xff]
    %v332 = vld [vmem:[#allocation9 + $0x120] sm:$0xff]
    %v333 = vld [vmem:[#allocation9 + $0x128] sm:$0xff]
    %v334 = vld [vmem:[#allocation9 + $0x130] sm:$0xff]
    %v335 = vld [vmem:[#allocation9 + $0x138] sm:$0xff]
    %v336 = vld [vmem:[#allocation9 + $0x140] sm:$0xff]
    %v337 = vld [vmem:[#allocation9 + $0x148] sm:$0xff]
    %v338 = vld [vmem:[#allocation9 + $0x150] sm:$0xff]
    %v339 = vld [vmem:[#allocation9 + $0x158] sm:$0xff]
    %v340 = vld [vmem:[#allocation9 + $0x160] sm:$0xff]
    %v341 = vld [vmem:[#allocation9 + $0x168] sm:$0xff]
    %v342 = vld [vmem:[#allocation9 + $0x170] sm:$0xff]
    %v343 = vld [vmem:[#allocation9 + $0x178] sm:$0xff]
    %v344 = vld [vmem:[#allocation9 + $0x180] sm:$0xff]
    %v345 = vld [vmem:[#allocation9 + $0x188] sm:$0xff]
    %v346 = vld [vmem:[#allocation9 + $0x190] sm:$0xff]
    %v347 = vld [vmem:[#allocation9 + $0x198] sm:$0xff]
    %v348 = vld [vmem:[#allocation9 + $0x1a0] sm:$0xff]
    %v349 = vld [vmem:[#allocation9 + $0x1a8] sm:$0xff]
    %v350 = vld [vmem:[#allocation9 + $0x1b0] sm:$0xff]
    %v351 = vld [vmem:[#allocation9 + $0x1b8] sm:$0xff]
    %v352 = vld [vmem:[#allocation9 + $0x1c0] sm:$0xff]
    %v353 = vld [vmem:[#allocation9 + $0x1c8] sm:$0xff]
    %v354 = vld [vmem:[#allocation9 + $0x1d0] sm:$0xff]
    %v355 = vld [vmem:[#allocation9 + $0x1d8] sm:$0xff]
    %v356 = vld [vmem:[#allocation9 + $0x1e0] sm:$0xff]
    %v357 = vld [vmem:[#allocation9 + $0x1e8] sm:$0xff]
    %v358 = vld [vmem:[#allocation9 + $0x1f0] sm:$0xff]
    %v359 = vld [vmem:[#allocation9 + $0x1f8] sm:$0xff]
    %v360 = vld [vmem:[#allocation9 + $0x200] sm:$0xff]
    %v361 = vld [vmem:[#allocation9 + $0x208] sm:$0xff]
    %v362 = vld [vmem:[#allocation9 + $0x210] sm:$0xff]
    %v363 = vld [vmem:[#allocation9 + $0x218] sm:$0xff]
    %v364 = vld [vmem:[#allocation9 + $0x220] sm:$0xff]
    %v365 = vld [vmem:[#allocation9 + $0x228] sm:$0xff]
    %v366 = vld [vmem:[#allocation9 + $0x230] sm:$0xff]
    %v367 = vld [vmem:[#allocation9 + $0x238] sm:$0xff]
    %v368 = vld [vmem:[#allocation9 + $0x240] sm:$0xff]
    %v369 = vld [vmem:[#allocation9 + $0x248] sm:$0xff]
    %v370 = vld [vmem:[#allocation9 + $0x250] sm:$0xff]
    %v371 = vld [vmem:[#allocation9 + $0x258] sm:$0xff]
    %v372 = vld [vmem:[#allocation9 + $0x260] sm:$0xff]
    %v373 = vld [vmem:[#allocation9 + $0x268] sm:$0xff]
    %v374 = vld [vmem:[#allocation9 + $0x270] sm:$0xff]
    %v375 = vld [vmem:[#allocation9 + $0x278] sm:$0xff]
    %v376 = vld [vmem:[#allocation9 + $0x280] sm:$0xff]
    %v377 = vld [vmem:[#allocation9 + $0x288] sm:$0xff]
    %v378 = vld [vmem:[#allocation9 + $0x290] sm:$0xff]
    %v379 = vld [vmem:[#allocation9 + $0x298] sm:$0xff]
    %v380 = vld [vmem:[#allocation9 + $0x2a0] sm:$0xff]
    %v381 = vld [vmem:[#allocation9 + $0x2a8] sm:$0xff]
    %v382 = vld [vmem:[#allocation9 + $0x2b0] sm:$0xff]
    %v383 = vld [vmem:[#allocation9 + $0x2b8] sm:$0xff]
    %v384 = vld [vmem:[#allocation9 + $0x2c0] sm:$0xff]
    %v385 = vld [vmem:[#allocation9 + $0x2c8] sm:$0xff]
    %v386 = vld [vmem:[#allocation9 + $0x2d0] sm:$0xff]
    %v387 = vld [vmem:[#allocation9 + $0x2d8] sm:$0xff]
    %v388 = vld [vmem:[#allocation9 + $0x2e0] sm:$0xff]
    %v389 = vld [vmem:[#allocation9 + $0x2e8] sm:$0xff]
    %v390 = vld [vmem:[#allocation9 + $0x2f0] sm:$0xff]
    %v391 = vld [vmem:[#allocation9 + $0x2f8] sm:$0xff]
    %v392 = vld [vmem:[#allocation9 + $0x300] sm:$0xff]
    %v393 = vld [vmem:[#allocation9 + $0x308] sm:$0xff]
    %v394 = vld [vmem:[#allocation9 + $0x310] sm:$0xff]
    %v395 = vld [vmem:[#allocation9 + $0x318] sm:$0xff]
    %v396 = vld [vmem:[#allocation9 + $0x320] sm:$0xff]
    %v397 = vld [vmem:[#allocation9 + $0x328] sm:$0xff]
    %v398 = vld [vmem:[#allocation9 + $0x330] sm:$0xff]
    %v399 = vld [vmem:[#allocation9 + $0x338] sm:$0xff]
    %v400 = vld [vmem:[#allocation9 + $0x340] sm:$0xff]
    %v401 = vld [vmem:[#allocation9 + $0x348] sm:$0xff]
    %v402 = vld [vmem:[#allocation9 + $0x350] sm:$0xff]
    %v403 = vld [vmem:[#allocation9 + $0x358] sm:$0xff]
    %v404 = vld [vmem:[#allocation9 + $0x360] sm:$0xff]
    %v405 = vld [vmem:[#allocation9 + $0x368] sm:$0xff]
    %v406 = vld [vmem:[#allocation9 + $0x370] sm:$0xff]
    %v407 = vld [vmem:[#allocation9 + $0x378] sm:$0xff]
    %v408 = vld [vmem:[#allocation9 + $0x380] sm:$0xff]
    %v409 = vld [vmem:[#allocation9 + $0x388] sm:$0xff]
    %v410 = vld [vmem:[#allocation9 + $0x390] sm:$0xff]
    %v411 = vld [vmem:[#allocation9 + $0x398] sm:$0xff]
    %v412 = vld [vmem:[#allocation9 + $0x3a0] sm:$0xff]
    %v413 = vld [vmem:[#allocation9 + $0x3a8] sm:$0xff]
    %v414 = vld [vmem:[#allocation9 + $0x3b0] sm:$0xff]
    %v415 = vld [vmem:[#allocation9 + $0x3b8] sm:$0xff]
    %v416 = vld [vmem:[#allocation9 + $0x3c0] sm:$0xff]
    %v417 = vld [vmem:[#allocation9 + $0x3c8] sm:$0xff]
    %v418 = vld [vmem:[#allocation9 + $0x3d0] sm:$0xff]
    %v419 = vld [vmem:[#allocation9 + $0x3d8] sm:$0xff]
    %v420 = vld [vmem:[#allocation9 + $0x3e0] sm:$0xff]
    %v421 = vld [vmem:[#allocation9 + $0x3e8] sm:$0xff]
    %v422 = vld [vmem:[#allocation9 + $0x3f0] sm:$0xff]
    %v423 = vld [vmem:[#allocation9 + $0x3f8] sm:$0xff]
    %v424 = vld [vmem:[#allocation9 + $0x400] sm:$0xff]
    %v425 = vld [vmem:[#allocation9 + $0x408] sm:$0xff]
    %v426 = vld [vmem:[#allocation9 + $0x410] sm:$0xff]
    %v427 = vld [vmem:[#allocation9 + $0x418] sm:$0xff]
    %v428 = vld [vmem:[#allocation9 + $0x420] sm:$0xff]
    %v429 = vld [vmem:[#allocation9 + $0x428] sm:$0xff]
    %v430 = vld [vmem:[#allocation9 + $0x430] sm:$0xff]
    %v431 = vld [vmem:[#allocation9 + $0x438] sm:$0xff]
    %v432 = vld [vmem:[#allocation9 + $0x440] sm:$0xff]
    %v433 = vld [vmem:[#allocation9 + $0x448] sm:$0xff]
    %v434 = vld [vmem:[#allocation9 + $0x450] sm:$0xff]
    %v435 = vld [vmem:[#allocation9 + $0x458] sm:$0xff]
    %v436 = vld [vmem:[#allocation9 + $0x460] sm:$0xff]
    %v437 = vld [vmem:[#allocation9 + $0x468] sm:$0xff]
    %v438 = vld [vmem:[#allocation9 + $0x470] sm:$0xff]
    %v439 = vld [vmem:[#allocation9 + $0x478] sm:$0xff]
    %v440 = vld [vmem:[#allocation9 + $0x480] sm:$0xff]
    %v441 = vld [vmem:[#allocation9 + $0x488] sm:$0xff]
    %v442 = vld [vmem:[#allocation9 + $0x490] sm:$0xff]
    %v443 = vld [vmem:[#allocation9 + $0x498] sm:$0xff]
    %v444 = vld [vmem:[#allocation9 + $0x4a0] sm:$0xff]
    %v445 = vld [vmem:[#allocation9 + $0x4a8] sm:$0xff]
    %v446 = vld [vmem:[#allocation9 + $0x4b0] sm:$0xff]
    %v447 = vld [vmem:[#allocation9 + $0x4b8] sm:$0xff]
    %v448 = vld [vmem:[#allocation9 + $0x4c0] sm:$0xff]
    %v449 = vld [vmem:[#allocation9 + $0x4c8] sm:$0xff]
    %v450 = vld [vmem:[#allocation9 + $0x4d0] sm:$0xff]
    %v451 = vld [vmem:[#allocation9 + $0x4d8] sm:$0xff]
    %v452 = vld [vmem:[#allocation9 + $0x4e0] sm:$0xff]
    %v453 = vld [vmem:[#allocation9 + $0x4e8] sm:$0xff]
    %v454 = vld [vmem:[#allocation9 + $0x4f0] sm:$0xff]
    %v455 = vld [vmem:[#allocation9 + $0x4f8] sm:$0xff]
    %v456 = vld [vmem:[#allocation10] sm:$0x3]
    %v458 = vlaneseq
    %v459 = vshrl.u32 %v458, 7
    %v460 = vsub.s32 0, %v459
    %v461 = vrot.slane %v456, %v460
    %v462 = vlaneseq
    %v463 = vshrl.u32 %v462, 7
    %v464 = vsub.s32 1, %v463
    %v465 = vrot.slane %v456, %v464
    %468 = vmatprep.subr.mxu0 %v327
    %469 = vmatpush1.msra.mxu0 %v326
    %470 = vmatprep.subr.mxu0 %v325
    %471 = vmatpush1.msra.mxu0 %v324
    %472 = vmatprep.subr.mxu0 %v323
    %473 = vmatpush1.msra.mxu0 %v322
    %474 = vmatprep.subr.mxu0 %v321
    %475 = vmatpush1.msra.mxu0 %v320
    %476 = vmatprep.subr.mxu0 %v319
    %477 = vmatpush1.msra.mxu0 %v318
    %478 = vmatprep.subr.mxu0 %v317
    %479 = vmatpush1.msra.mxu0 %v316
    %480 = vmatprep.subr.mxu0 %v315
    %481 = vmatpush1.msra.mxu0 %v314
    %482 = vmatprep.subr.mxu0 %v313
    %483 = vmatpush1.msra.mxu0 %v312
    %484 = vmatprep.subr.mxu0 %v311
    %485 = vmatpush1.msra.mxu0 %v310
    %486 = vmatprep.subr.mxu0 %v309
    %487 = vmatpush1.msra.mxu0 %v308
    %488 = vmatprep.subr.mxu0 %v307
    %489 = vmatpush1.msra.mxu0 %v306
    %490 = vmatprep.subr.mxu0 %v305
    %491 = vmatpush1.msra.mxu0 %v304
    %492 = vmatprep.subr.mxu0 %v303
    %493 = vmatpush1.msra.mxu0 %v302
    %494 = vmatprep.subr.mxu0 %v301
    %495 = vmatpush1.msra.mxu0 %v300
    %496 = vmatprep.subr.mxu0 %v299
    %497 = vmatpush1.msra.mxu0 %v298
    %498 = vmatprep.subr.mxu0 %v297
    %499 = vmatpush1.msra.mxu0 %v296
    %500 = vmatprep.subr.mxu0 %v359
    %501 = vmatpush2.msra.mxu0 %v358
    %502 = vmatprep.subr.mxu0 %v357
    %503 = vmatpush2.msra.mxu0 %v356
    %504 = vmatprep.subr.mxu0 %v355
    %505 = vmatpush2.msra.mxu0 %v354
    %506 = vmatprep.subr.mxu0 %v353
    %507 = vmatpush2.msra.mxu0 %v352
    %508 = vmatprep.subr.mxu0 %v351
    %509 = vmatpush2.msra.mxu0 %v350
    %510 = vmatprep.subr.mxu0 %v349
    %511 = vmatpush2.msra.mxu0 %v348
    %512 = vmatprep.subr.mxu0 %v347
    %513 = vmatpush2.msra.mxu0 %v346
    %514 = vmatprep.subr.mxu0 %v345
    %515 = vmatpush2.msra.mxu0 %v344
    %516 = vmatprep.subr.mxu0 %v343
    %517 = vmatpush2.msra.mxu0 %v342
    %518 = vmatprep.subr.mxu0 %v341
    %519 = vmatpush2.msra.mxu0 %v340
    %520 = vmatprep.subr.mxu0 %v339
    %521 = vmatpush2.msra.mxu0 %v338
    %522 = vmatprep.subr.mxu0 %v337
    %523 = vmatpush2.msra.mxu0 %v336
    %524 = vmatprep.subr.mxu0 %v335
    %525 = vmatpush2.msra.mxu0 %v334
    %526 = vmatprep.subr.mxu0 %v333
    %527 = vmatpush2.msra.mxu0 %v332
    %528 = vmatprep.subr.mxu0 %v331
    %529 = vmatpush2.msra.mxu0 %v330
    %530 = vmatprep.subr.mxu0 %v329
    %531 = vmatpush2.msra.mxu0 %v328
    %532 = vmatprep.mubr.f32.mxu0 %v280
    %533 = vmatmul.mubr.f32.gmra.mxu0 %v276
    %v534 = vpop.f32.mrf.mxu0
    %v535 = vadd.f32 %v461, %v534
    %v536 = vpop.f32.mrf.mxu0
    %v537 = vadd.f32 %v465, %v536
    %538 = vmatprep.mubr.f32.mxu0 %v281
    %539 = vmatmul.mubr.f32.gmra.mxu0 %v277
    %v540 = vpop.f32.mrf.mxu0
    %v541 = vadd.f32 %v461, %v540
    %v542 = vpop.f32.mrf.mxu0
    %v543 = vadd.f32 %v465, %v542
    %544 = vmatprep.mubr.f32.mxu0 %v282
    %545 = vmatmul.mubr.f32.gmra.mxu0 %v278
    %v546 = vpop.f32.mrf.mxu0
    %v547 = vadd.f32 %v461, %v546
    %v548 = vpop.f32.mrf.mxu0
    %v549 = vadd.f32 %v465, %v548
    %550 = vmatprep.mubr.f32.mxu0 %v283
    %551 = vmatmul.mubr.f32.gmra.mxu0 %v279
    %v552 = vpop.f32.mrf.mxu0
    %v553 = vadd.f32 %v461, %v552
    %v554 = vpop.f32.mrf.mxu0
    %v555 = vadd.f32 %v465, %v554
    %556 = vdwg.mxu0
    %557 = vmatprep.subr.mxu0 %v391
    %558 = vmatpush1.msra.mxu0 %v390
    %559 = vmatprep.subr.mxu0 %v389
    %560 = vmatpush1.msra.mxu0 %v388
    %561 = vmatprep.subr.mxu0 %v387
    %562 = vmatpush1.msra.mxu0 %v386
    %563 = vmatprep.subr.mxu0 %v385
    %564 = vmatpush1.msra.mxu0 %v384
    %565 = vmatprep.subr.mxu0 %v383
    %566 = vmatpush1.msra.mxu0 %v382
    %567 = vmatprep.subr.mxu0 %v381
    %568 = vmatpush1.msra.mxu0 %v380
    %569 = vmatprep.subr.mxu0 %v379
    %570 = vmatpush1.msra.mxu0 %v378
    %571 = vmatprep.subr.mxu0 %v377
    %572 = vmatpush1.msra.mxu0 %v376
    %573 = vmatprep.subr.mxu0 %v375
    %574 = vmatpush1.msra.mxu0 %v374
    %575 = vmatprep.subr.mxu0 %v373
    %576 = vmatpush1.msra.mxu0 %v372
    %577 = vmatprep.subr.mxu0 %v371
    %578 = vmatpush1.msra.mxu0 %v370
    %579 = vmatprep.subr.mxu0 %v369
    %580 = vmatpush1.msra.mxu0 %v368
    %581 = vmatprep.subr.mxu0 %v367
    %582 = vmatpush1.msra.mxu0 %v366
    %583 = vmatprep.subr.mxu0 %v365
    %584 = vmatpush1.msra.mxu0 %v364
    %585 = vmatprep.subr.mxu0 %v363
    %586 = vmatpush1.msra.mxu0 %v362
    %587 = vmatprep.subr.mxu0 %v361
    %588 = vmatpush1.msra.mxu0 %v360
    %589 = vmatprep.subr.mxu0 %v423
    %590 = vmatpush2.msra.mxu0 %v422
    %591 = vmatprep.subr.mxu0 %v421
    %592 = vmatpush2.msra.mxu0 %v420
    %593 = vmatprep.subr.mxu0 %v419
    %594 = vmatpush2.msra.mxu0 %v418
    %595 = vmatprep.subr.mxu0 %v417
    %596 = vmatpush2.msra.mxu0 %v416
    %597 = vmatprep.subr.mxu0 %v415
    %598 = vmatpush2.msra.mxu0 %v414
    %599 = vmatprep.subr.mxu0 %v413
    %600 = vmatpush2.msra.mxu0 %v412
    %601 = vmatprep.subr.mxu0 %v411
    %602 = vmatpush2.msra.mxu0 %v410
    %603 = vmatprep.subr.mxu0 %v409
    %604 = vmatpush2.msra.mxu0 %v408
    %605 = vmatprep.subr.mxu0 %v407
    %606 = vmatpush2.msra.mxu0 %v406
    %607 = vmatprep.subr.mxu0 %v405
    %608 = vmatpush2.msra.mxu0 %v404
    %609 = vmatprep.subr.mxu0 %v403
    %610 = vmatpush2.msra.mxu0 %v402
    %611 = vmatprep.subr.mxu0 %v401
    %612 = vmatpush2.msra.mxu0 %v400
    %613 = vmatprep.subr.mxu0 %v399
    %614 = vmatpush2.msra.mxu0 %v398
    %615 = vmatprep.subr.mxu0 %v397
    %616 = vmatpush2.msra.mxu0 %v396
    %617 = vmatprep.subr.mxu0 %v395
    %618 = vmatpush2.msra.mxu0 %v394
    %619 = vmatprep.subr.mxu0 %v393
    %620 = vmatpush2.msra.mxu0 %v392
    %621 = vmatprep.mubr.f32.mxu0 %v288
    %622 = vmatmul.mubr.f32.gmra.mxu0 %v284
    %v623 = vpop.f32.mrf.mxu0
    %v624 = vadd.f32 %v535, %v623
    %v625 = vpop.f32.mrf.mxu0
    %v626 = vadd.f32 %v537, %v625
    %627 = vmatprep.mubr.f32.mxu0 %v289
    %628 = vmatmul.mubr.f32.gmra.mxu0 %v285
    %v629 = vpop.f32.mrf.mxu0
    %v630 = vadd.f32 %v541, %v629
    %v631 = vpop.f32.mrf.mxu0
    %v632 = vadd.f32 %v543, %v631
    %633 = vmatprep.mubr.f32.mxu0 %v290
    %634 = vmatmul.mubr.f32.gmra.mxu0 %v286
    %v635 = vpop.f32.mrf.mxu0
    %v636 = vadd.f32 %v547, %v635
    %v637 = vpop.f32.mrf.mxu0
    %v638 = vadd.f32 %v549, %v637
    %639 = vmatprep.mubr.f32.mxu0 %v291
    %640 = vmatmul.mubr.f32.gmra.mxu0 %v287
    %v641 = vpop.f32.mrf.mxu0
    %v642 = vadd.f32 %v553, %v641
    %v643 = vpop.f32.mrf.mxu0
    %v644 = vadd.f32 %v555, %v643
    %645 = vdwg.mxu0
    %646 = vmatprep.subr.mxu0 %v455
    %647 = vmatpush1.msra.mxu0 %v454
    %648 = vmatprep.subr.mxu0 %v453
    %649 = vmatpush1.msra.mxu0 %v452
    %650 = vmatprep.subr.mxu0 %v451
    %651 = vmatpush1.msra.mxu0 %v450
    %652 = vmatprep.subr.mxu0 %v449
    %653 = vmatpush1.msra.mxu0 %v448
    %654 = vmatprep.subr.mxu0 %v447
    %655 = vmatpush1.msra.mxu0 %v446
    %656 = vmatprep.subr.mxu0 %v445
    %657 = vmatpush1.msra.mxu0 %v444
    %658 = vmatprep.subr.mxu0 %v443
    %659 = vmatpush1.msra.mxu0 %v442
    %660 = vmatprep.subr.mxu0 %v441
    %661 = vmatpush1.msra.mxu0 %v440
    %662 = vmatprep.subr.mxu0 %v439
    %663 = vmatpush1.msra.mxu0 %v438
    %664 = vmatprep.subr.mxu0 %v437
    %665 = vmatpush1.msra.mxu0 %v436
    %666 = vmatprep.subr.mxu0 %v435
    %667 = vmatpush1.msra.mxu0 %v434
    %668 = vmatprep.subr.mxu0 %v433
    %669 = vmatpush1.msra.mxu0 %v432
    %670 = vmatprep.subr.mxu0 %v431
    %671 = vmatpush1.msra.mxu0 %v430
    %672 = vmatprep.subr.mxu0 %v429
    %673 = vmatpush1.msra.mxu0 %v428
    %674 = vmatprep.subr.mxu0 %v427
    %675 = vmatpush1.msra.mxu0 %v426
    %676 = vmatprep.subr.mxu0 %v425
    %677 = vmatpush1.msra.mxu0 %v424
    %678 = vmatprep.subr.mxu0 0.0
    %679 = vmatpush2.msra.mxu0 0.0
    %680 = vmatprep.subr.mxu0 0.0
    %681 = vmatpush2.msra.mxu0 0.0
    %682 = vmatprep.subr.mxu0 0.0
    %683 = vmatpush2.msra.mxu0 0.0
    %684 = vmatprep.subr.mxu0 0.0
    %685 = vmatpush2.msra.mxu0 0.0
    %686 = vmatprep.subr.mxu0 0.0
    %687 = vmatpush2.msra.mxu0 0.0
    %688 = vmatprep.subr.mxu0 0.0
    %689 = vmatpush2.msra.mxu0 0.0
    %690 = vmatprep.subr.mxu0 0.0
    %691 = vmatpush2.msra.mxu0 0.0
    %692 = vmatprep.subr.mxu0 0.0
    %693 = vmatpush2.msra.mxu0 0.0
    %694 = vmatprep.subr.mxu0 0.0
    %695 = vmatpush2.msra.mxu0 0.0
    %696 = vmatprep.subr.mxu0 0.0
    %697 = vmatpush2.msra.mxu0 0.0
    %698 = vmatprep.subr.mxu0 0.0
    %699 = vmatpush2.msra.mxu0 0.0
    %700 = vmatprep.subr.mxu0 0.0
    %701 = vmatpush2.msra.mxu0 0.0
    %702 = vmatprep.subr.mxu0 0.0
    %703 = vmatpush2.msra.mxu0 0.0
    %704 = vmatprep.subr.mxu0 0.0
    %705 = vmatpush2.msra.mxu0 0.0
    %706 = vmatprep.subr.mxu0 0.0
    %707 = vmatpush2.msra.mxu0 0.0
    %708 = vmatprep.subr.mxu0 0.0
    %709 = vmatpush2.msra.mxu0 0.0
    %710 = vmatprep.mubr.f32.mxu0 0.0
    %711 = vmatmul.mubr.f32.gmra.mxu0 %v292
    %v712 = vpop.f32.mrf.mxu0
    %v713 = vadd.f32 %v624, %v712
    %v714 = vpop.f32.mrf.mxu0
    %v715 = vadd.f32 %v626, %v714
    %716 = vmatprep.mubr.f32.mxu0 0.0
    %717 = vmatmul.mubr.f32.gmra.mxu0 %v293
    %v718 = vpop.f32.mrf.mxu0
    %v719 = vadd.f32 %v630, %v718
    %v720 = vpop.f32.mrf.mxu0
    %v721 = vadd.f32 %v632, %v720
    %722 = vmatprep.mubr.f32.mxu0 0.0
    %723 = vmatmul.mubr.f32.gmra.mxu0 %v294
    %v724 = vpop.f32.mrf.mxu0
    %v725 = vadd.f32 %v636, %v724
    %v726 = vpop.f32.mrf.mxu0
    %v727 = vadd.f32 %v638, %v726
    %728 = vmatprep.mubr.f32.mxu0 0.0
    %729 = vmatmul.mubr.f32.gmra.mxu0 %v295
    %v730 = vpop.f32.mrf.mxu0
    %v731 = vadd.f32 %v642, %v730
    %v732 = vpop.f32.mrf.mxu0
    %v733 = vadd.f32 %v644, %v732
    %734 = vdwg.mxu0
    %vm735 = vcmp.ge.f32.partialorder %v713, 0.0
    %vm736 = vcmp.ge.f32.partialorder %v715, 0.0
    %vm737 = vcmp.ge.f32.partialorder %v719, 0.0
    %vm738 = vcmp.ge.f32.partialorder %v721, 0.0
    %vm739 = vcmp.ge.f32.partialorder %v725, 0.0
    %vm740 = vcmp.ge.f32.partialorder %v727, 0.0
    %vm741 = vcmp.ge.f32.partialorder %v731, 0.0
    %vm742 = vcmp.ge.f32.partialorder %v733, 0.0
    %v743 = vmul.f32 %v713, 0.2
    %v744 = vmul.f32 %v715, 0.2
    %v745 = vmul.f32 %v719, 0.2
    %v746 = vmul.f32 %v721, 0.2
    %v747 = vmul.f32 %v725, 0.2
    %v748 = vmul.f32 %v727, 0.2
    %v749 = vmul.f32 %v731, 0.2
    %v750 = vmul.f32 %v733, 0.2
    %v751 = vsel %vm735, %v713, %v743
    %v752 = vsel %vm736, %v715, %v744
    %v753 = vsel %vm737, %v719, %v745
    %v754 = vsel %vm738, %v721, %v746
    %v755 = vsel %vm739, %v725, %v747
    %v756 = vsel %vm740, %v727, %v748
    %v757 = vsel %vm741, %v731, %v749
    %v758 = vsel %vm742, %v733, %v750
    %vm763 = vcmask 1040384
    %v764 = vrot.slane %v751, 7
    %v765 = vrot.slane %v752, 7
    %v766 = vrot.slane %v753, 7
    %v767 = vsel %vm763, %v764, %v766
    %v768 = vrot.slane %v754, 7
    %v769 = vsel %vm763, %v765, %v768
    %776 = vst [vmem:[#allocation3] sm:$0xfe] %v764
    %777 = vst [vmem:[#allocation3 + $0x8] sm:$0xfe] %v765
    %778 = vst [vmem:[#allocation3 + $0x10] sm:$0xff] %v767
    %779 = vst [vmem:[#allocation3 + $0x18] sm:$0xff] %v769
    %780 = vst [vmem:[#allocation3 + $0x20] sm:$0x1] %v766
    %781 = vst [vmem:[#allocation3 + $0x28] sm:$0x1] %v768
    %vm786 = vcmask 1042432
    %v787 = vrot.slane %v755, 5
    %v788 = vrot.slane %v756, 5
    %v789 = vrot.slane %v757, 5
    %v790 = vsel %vm786, %v787, %v789
    %v791 = vrot.slane %v758, 5
    %v792 = vsel %vm786, %v788, %v791
    %799 = vst [vmem:[#allocation3 + $0x20] sm:$0xf8] %v787
    %800 = vst [vmem:[#allocation3 + $0x28] sm:$0xf8] %v788
    %801 = vst [vmem:[#allocation3 + $0x30] sm:$0xff] %v790
    %802 = vst [vmem:[#allocation3 + $0x38] sm:$0xff] %v792
    %803 = vst [vmem:[#allocation3 + $0x40] sm:$0x7] %v789
    %804 = vst [vmem:[#allocation3 + $0x48] sm:$0x7] %v791
    %v805 = vld [vmem:[#allocation3] sm:$0xff]
    %v806 = vld [vmem:[#allocation3 + $0x8] sm:$0xff]
    %v807 = vld [vmem:[#allocation3 + $0x10] sm:$0xff]
    %v808 = vld [vmem:[#allocation3 + $0x18] sm:$0xff]
    %v809 = vld [vmem:[#allocation3 + $0x20] sm:$0xfc]
    %v810 = vld [vmem:[#allocation3 + $0x28] sm:$0xfc]
    %v811 = vld [vmem:[#allocation3 + $0x30] sm:$0xff]
    %v812 = vld [vmem:[#allocation3 + $0x38] sm:$0xff]
    %v813 = vld [vmem:[#allocation3 + $0x40] sm:$0x3]
    %v814 = vld [vmem:[#allocation3 + $0x48] sm:$0x3]
    %vm821 = vcmask 1045504
    %v822 = vrot.slane %v809, 2
    %v823 = vrot.slane %v811, 2
    %v824 = vsel %vm821, %v822, %v823
    %v825 = vrot.slane %v810, 2
    %v826 = vrot.slane %v812, 2
    %v827 = vsel %vm821, %v825, %v826
    %v828 = vrot.slane %v813, 2
    %v829 = vsel %vm821, %v823, %v828
    %v830 = vrot.slane %v814, 2
    %v831 = vsel %vm821, %v826, %v830
    %v836 = vld [vmem:[#allocation3] sm:$0xfe]
    %v837 = vld [vmem:[#allocation3 + $0x8] sm:$0xfe]
    %v838 = vld [vmem:[#allocation3 + $0x20] sm:$0x1]
    %v839 = vld [vmem:[#allocation3 + $0x28] sm:$0x1]
    %v840 = vld [vmem:[#allocation3 + $0x20] sm:$0xf8]
    %v841 = vld [vmem:[#allocation3 + $0x28] sm:$0xf8]
    %v842 = vld [vmem:[#allocation3 + $0x40] sm:$0x7]
    %v843 = vld [vmem:[#allocation3 + $0x48] sm:$0x7]
    %v850 = vrot.slane %v836, 1
    %v851 = vrot.slane %v807, 1
    %v852 = vsel %vm163, %v850, %v851
    %v853 = vrot.slane %v837, 1
    %v854 = vrot.slane %v808, 1
    %v855 = vsel %vm163, %v853, %v854
    %v856 = vrot.slane %v838, 1
    %v857 = vsel %vm163, %v851, %v856
    %v858 = vrot.slane %v839, 1
    %v859 = vsel %vm163, %v854, %v858
    %vm868 = vcmask 1044480
    %v869 = vrot.slane %v840, 3
    %v870 = vrot.slane %v811, 3
    %v871 = vsel %vm868, %v869, %v870
    %v872 = vrot.slane %v841, 3
    %v873 = vrot.slane %v812, 3
    %v874 = vsel %vm868, %v872, %v873
    %v875 = vrot.slane %v842, 3
    %v876 = vsel %vm868, %v870, %v875
    %v877 = vrot.slane %v843, 3
    %v878 = vsel %vm868, %v873, %v877
    %v883 = vld [vmem:[#allocation3] sm:$0xfc]
    %v884 = vld [vmem:[#allocation3 + $0x8] sm:$0xfc]
    %v885 = vld [vmem:[#allocation3 + $0x20] sm:$0x3]
    %v886 = vld [vmem:[#allocation3 + $0x28] sm:$0x3]
    %v887 = vld [vmem:[#allocation3 + $0x20] sm:$0xf0]
    %v888 = vld [vmem:[#allocation3 + $0x28] sm:$0xf0]
    %v889 = vld [vmem:[#allocation3 + $0x40] sm:$0xf]
    %v890 = vld [vmem:[#allocation3 + $0x48] sm:$0xf]
    %v895 = vrot.slane %v883, 2
    %v896 = vrot.slane %v807, 2
    %v897 = vsel %vm821, %v895, %v896
    %v898 = vrot.slane %v884, 2
    %v899 = vrot.slane %v808, 2
    %v900 = vsel %vm821, %v898, %v899
    %v901 = vrot.slane %v885, 2
    %v902 = vsel %vm821, %v896, %v901
    %v903 = vrot.slane %v886, 2
    %v904 = vsel %vm821, %v899, %v903
    %vm913 = vcmask 1043456
    %v914 = vrot.slane %v887, 4
    %v915 = vrot.slane %v811, 4
    %v916 = vsel %vm913, %v914, %v915
    %v917 = vrot.slane %v888, 4
    %v918 = vrot.slane %v812, 4
    %v919 = vsel %vm913, %v917, %v918
    %v920 = vrot.slane %v889, 4
    %v921 = vsel %vm913, %v915, %v920
    %v922 = vrot.slane %v890, 4
    %v923 = vsel %vm913, %v918, %v922
    %v928 = vld [vmem:[#allocation12] sm:$0xff]
    %v929 = vld [vmem:[#allocation12 + $0x8] sm:$0xff]
    %v930 = vld [vmem:[#allocation12 + $0x10] sm:$0xff]
    %v931 = vld [vmem:[#allocation12 + $0x18] sm:$0xff]
    %v932 = vld [vmem:[#allocation12 + $0x20] sm:$0xff]
    %v933 = vld [vmem:[#allocation12 + $0x28] sm:$0xff]
    %v934 = vld [vmem:[#allocation12 + $0x30] sm:$0xff]
    %v935 = vld [vmem:[#allocation12 + $0x38] sm:$0xff]
    %v936 = vld [vmem:[#allocation12 + $0x40] sm:$0xff]
    %v937 = vld [vmem:[#allocation12 + $0x48] sm:$0xff]
    %v938 = vld [vmem:[#allocation12 + $0x50] sm:$0xff]
    %v939 = vld [vmem:[#allocation12 + $0x58] sm:$0xff]
    %v940 = vld [vmem:[#allocation12 + $0x60] sm:$0xff]
    %v941 = vld [vmem:[#allocation12 + $0x68] sm:$0xff]
    %v942 = vld [vmem:[#allocation12 + $0x70] sm:$0xff]
    %v943 = vld [vmem:[#allocation12 + $0x78] sm:$0xff]
    %v944 = vld [vmem:[#allocation12 + $0x80] sm:$0xff]
    %v945 = vld [vmem:[#allocation12 + $0x88] sm:$0xff]
    %v946 = vld [vmem:[#allocation12 + $0x90] sm:$0xff]
    %v947 = vld [vmem:[#allocation12 + $0x98] sm:$0xff]
    %v948 = vld [vmem:[#allocation12 + $0xa0] sm:$0xff]
    %v949 = vld [vmem:[#allocation12 + $0xa8] sm:$0xff]
    %v950 = vld [vmem:[#allocation12 + $0xb0] sm:$0xff]
    %v951 = vld [vmem:[#allocation12 + $0xb8] sm:$0xff]
    %v952 = vld [vmem:[#allocation12 + $0xc0] sm:$0xff]
    %v953 = vld [vmem:[#allocation12 + $0xc8] sm:$0xff]
    %v954 = vld [vmem:[#allocation12 + $0xd0] sm:$0xff]
    %v955 = vld [vmem:[#allocation12 + $0xd8] sm:$0xff]
    %v956 = vld [vmem:[#allocation12 + $0xe0] sm:$0xff]
    %v957 = vld [vmem:[#allocation12 + $0xe8] sm:$0xff]
    %v958 = vld [vmem:[#allocation12 + $0xf0] sm:$0xff]
    %v959 = vld [vmem:[#allocation12 + $0xf8] sm:$0xff]
    %v960 = vld [vmem:[#allocation12 + $0x100] sm:$0xff]
    %v961 = vld [vmem:[#allocation12 + $0x108] sm:$0xff]
    %v962 = vld [vmem:[#allocation12 + $0x110] sm:$0xff]
    %v963 = vld [vmem:[#allocation12 + $0x118] sm:$0xff]
    %v964 = vld [vmem:[#allocation12 + $0x120] sm:$0xff]
    %v965 = vld [vmem:[#allocation12 + $0x128] sm:$0xff]
    %v966 = vld [vmem:[#allocation12 + $0x130] sm:$0xff]
    %v967 = vld [vmem:[#allocation12 + $0x138] sm:$0xff]
    %v968 = vld [vmem:[#allocation12 + $0x140] sm:$0xff]
    %v969 = vld [vmem:[#allocation12 + $0x148] sm:$0xff]
    %v970 = vld [vmem:[#allocation12 + $0x150] sm:$0xff]
    %v971 = vld [vmem:[#allocation12 + $0x158] sm:$0xff]
    %v972 = vld [vmem:[#allocation12 + $0x160] sm:$0xff]
    %v973 = vld [vmem:[#allocation12 + $0x168] sm:$0xff]
    %v974 = vld [vmem:[#allocation12 + $0x170] sm:$0xff]
    %v975 = vld [vmem:[#allocation12 + $0x178] sm:$0xff]
    %v976 = vld [vmem:[#allocation12 + $0x180] sm:$0xff]
    %v977 = vld [vmem:[#allocation12 + $0x188] sm:$0xff]
    %v978 = vld [vmem:[#allocation12 + $0x190] sm:$0xff]
    %v979 = vld [vmem:[#allocation12 + $0x198] sm:$0xff]
    %v980 = vld [vmem:[#allocation12 + $0x1a0] sm:$0xff]
    %v981 = vld [vmem:[#allocation12 + $0x1a8] sm:$0xff]
    %v982 = vld [vmem:[#allocation12 + $0x1b0] sm:$0xff]
    %v983 = vld [vmem:[#allocation12 + $0x1b8] sm:$0xff]
    %v984 = vld [vmem:[#allocation12 + $0x1c0] sm:$0xff]
    %v985 = vld [vmem:[#allocation12 + $0x1c8] sm:$0xff]
    %v986 = vld [vmem:[#allocation12 + $0x1d0] sm:$0xff]
    %v987 = vld [vmem:[#allocation12 + $0x1d8] sm:$0xff]
    %v988 = vld [vmem:[#allocation12 + $0x1e0] sm:$0xff]
    %v989 = vld [vmem:[#allocation12 + $0x1e8] sm:$0xff]
    %v990 = vld [vmem:[#allocation12 + $0x1f0] sm:$0xff]
    %v991 = vld [vmem:[#allocation12 + $0x1f8] sm:$0xff]
    %v992 = vld [vmem:[#allocation12 + $0x200] sm:$0xff]
    %v993 = vld [vmem:[#allocation12 + $0x208] sm:$0xff]
    %v994 = vld [vmem:[#allocation12 + $0x210] sm:$0xff]
    %v995 = vld [vmem:[#allocation12 + $0x218] sm:$0xff]
    %v996 = vld [vmem:[#allocation12 + $0x220] sm:$0xff]
    %v997 = vld [vmem:[#allocation12 + $0x228] sm:$0xff]
    %v998 = vld [vmem:[#allocation12 + $0x230] sm:$0xff]
    %v999 = vld [vmem:[#allocation12 + $0x238] sm:$0xff]
    %v1000 = vld [vmem:[#allocation12 + $0x240] sm:$0xff]
    %v1001 = vld [vmem:[#allocation12 + $0x248] sm:$0xff]
    %v1002 = vld [vmem:[#allocation12 + $0x250] sm:$0xff]
    %v1003 = vld [vmem:[#allocation12 + $0x258] sm:$0xff]
    %v1004 = vld [vmem:[#allocation12 + $0x260] sm:$0xff]
    %v1005 = vld [vmem:[#allocation12 + $0x268] sm:$0xff]
    %v1006 = vld [vmem:[#allocation12 + $0x270] sm:$0xff]
    %v1007 = vld [vmem:[#allocation12 + $0x278] sm:$0xff]
    %v1008 = vld [vmem:[#allocation12 + $0x280] sm:$0xff]
    %v1009 = vld [vmem:[#allocation12 + $0x288] sm:$0xff]
    %v1010 = vld [vmem:[#allocation12 + $0x290] sm:$0xff]
    %v1011 = vld [vmem:[#allocation12 + $0x298] sm:$0xff]
    %v1012 = vld [vmem:[#allocation12 + $0x2a0] sm:$0xff]
    %v1013 = vld [vmem:[#allocation12 + $0x2a8] sm:$0xff]
    %v1014 = vld [vmem:[#allocation12 + $0x2b0] sm:$0xff]
    %v1015 = vld [vmem:[#allocation12 + $0x2b8] sm:$0xff]
    %v1016 = vld [vmem:[#allocation12 + $0x2c0] sm:$0xff]
    %v1017 = vld [vmem:[#allocation12 + $0x2c8] sm:$0xff]
    %v1018 = vld [vmem:[#allocation12 + $0x2d0] sm:$0xff]
    %v1019 = vld [vmem:[#allocation12 + $0x2d8] sm:$0xff]
    %v1020 = vld [vmem:[#allocation12 + $0x2e0] sm:$0xff]
    %v1021 = vld [vmem:[#allocation12 + $0x2e8] sm:$0xff]
    %v1022 = vld [vmem:[#allocation12 + $0x2f0] sm:$0xff]
    %v1023 = vld [vmem:[#allocation12 + $0x2f8] sm:$0xff]
    %v1024 = vld [vmem:[#allocation12 + $0x300] sm:$0xff]
    %v1025 = vld [vmem:[#allocation12 + $0x308] sm:$0xff]
    %v1026 = vld [vmem:[#allocation12 + $0x310] sm:$0xff]
    %v1027 = vld [vmem:[#allocation12 + $0x318] sm:$0xff]
    %v1028 = vld [vmem:[#allocation12 + $0x320] sm:$0xff]
    %v1029 = vld [vmem:[#allocation12 + $0x328] sm:$0xff]
    %v1030 = vld [vmem:[#allocation12 + $0x330] sm:$0xff]
    %v1031 = vld [vmem:[#allocation12 + $0x338] sm:$0xff]
    %v1032 = vld [vmem:[#allocation12 + $0x340] sm:$0xff]
    %v1033 = vld [vmem:[#allocation12 + $0x348] sm:$0xff]
    %v1034 = vld [vmem:[#allocation12 + $0x350] sm:$0xff]
    %v1035 = vld [vmem:[#allocation12 + $0x358] sm:$0xff]
    %v1036 = vld [vmem:[#allocation12 + $0x360] sm:$0xff]
    %v1037 = vld [vmem:[#allocation12 + $0x368] sm:$0xff]
    %v1038 = vld [vmem:[#allocation12 + $0x370] sm:$0xff]
    %v1039 = vld [vmem:[#allocation12 + $0x378] sm:$0xff]
    %v1040 = vld [vmem:[#allocation12 + $0x380] sm:$0xff]
    %v1041 = vld [vmem:[#allocation12 + $0x388] sm:$0xff]
    %v1042 = vld [vmem:[#allocation12 + $0x390] sm:$0xff]
    %v1043 = vld [vmem:[#allocation12 + $0x398] sm:$0xff]
    %v1044 = vld [vmem:[#allocation12 + $0x3a0] sm:$0xff]
    %v1045 = vld [vmem:[#allocation12 + $0x3a8] sm:$0xff]
    %v1046 = vld [vmem:[#allocation12 + $0x3b0] sm:$0xff]
    %v1047 = vld [vmem:[#allocation12 + $0x3b8] sm:$0xff]
    %v1048 = vld [vmem:[#allocation12 + $0x3c0] sm:$0xff]
    %v1049 = vld [vmem:[#allocation12 + $0x3c8] sm:$0xff]
    %v1050 = vld [vmem:[#allocation12 + $0x3d0] sm:$0xff]
    %v1051 = vld [vmem:[#allocation12 + $0x3d8] sm:$0xff]
    %v1052 = vld [vmem:[#allocation12 + $0x3e0] sm:$0xff]
    %v1053 = vld [vmem:[#allocation12 + $0x3e8] sm:$0xff]
    %v1054 = vld [vmem:[#allocation12 + $0x3f0] sm:$0xff]
    %v1055 = vld [vmem:[#allocation12 + $0x3f8] sm:$0xff]
    %v1056 = vld [vmem:[#allocation12 + $0x400] sm:$0xff]
    %v1057 = vld [vmem:[#allocation12 + $0x408] sm:$0xff]
    %v1058 = vld [vmem:[#allocation12 + $0x410] sm:$0xff]
    %v1059 = vld [vmem:[#allocation12 + $0x418] sm:$0xff]
    %v1060 = vld [vmem:[#allocation12 + $0x420] sm:$0xff]
    %v1061 = vld [vmem:[#allocation12 + $0x428] sm:$0xff]
    %v1062 = vld [vmem:[#allocation12 + $0x430] sm:$0xff]
    %v1063 = vld [vmem:[#allocation12 + $0x438] sm:$0xff]
    %v1064 = vld [vmem:[#allocation12 + $0x440] sm:$0xff]
    %v1065 = vld [vmem:[#allocation12 + $0x448] sm:$0xff]
    %v1066 = vld [vmem:[#allocation12 + $0x450] sm:$0xff]
    %v1067 = vld [vmem:[#allocation12 + $0x458] sm:$0xff]
    %v1068 = vld [vmem:[#allocation12 + $0x460] sm:$0xff]
    %v1069 = vld [vmem:[#allocation12 + $0x468] sm:$0xff]
    %v1070 = vld [vmem:[#allocation12 + $0x470] sm:$0xff]
    %v1071 = vld [vmem:[#allocation12 + $0x478] sm:$0xff]
    %v1072 = vld [vmem:[#allocation12 + $0x480] sm:$0xff]
    %v1073 = vld [vmem:[#allocation12 + $0x488] sm:$0xff]
    %v1074 = vld [vmem:[#allocation12 + $0x490] sm:$0xff]
    %v1075 = vld [vmem:[#allocation12 + $0x498] sm:$0xff]
    %v1076 = vld [vmem:[#allocation12 + $0x4a0] sm:$0xff]
    %v1077 = vld [vmem:[#allocation12 + $0x4a8] sm:$0xff]
    %v1078 = vld [vmem:[#allocation12 + $0x4b0] sm:$0xff]
    %v1079 = vld [vmem:[#allocation12 + $0x4b8] sm:$0xff]
    %v1080 = vld [vmem:[#allocation12 + $0x4c0] sm:$0xff]
    %v1081 = vld [vmem:[#allocation12 + $0x4c8] sm:$0xff]
    %v1082 = vld [vmem:[#allocation12 + $0x4d0] sm:$0xff]
    %v1083 = vld [vmem:[#allocation12 + $0x4d8] sm:$0xff]
    %v1084 = vld [vmem:[#allocation12 + $0x4e0] sm:$0xff]
    %v1085 = vld [vmem:[#allocation12 + $0x4e8] sm:$0xff]
    %v1086 = vld [vmem:[#allocation12 + $0x4f0] sm:$0xff]
    %v1087 = vld [vmem:[#allocation12 + $0x4f8] sm:$0xff]
    %v1088 = vld [vmem:[#allocation12 + $0x500] sm:$0xff]
    %v1089 = vld [vmem:[#allocation12 + $0x508] sm:$0xff]
    %v1090 = vld [vmem:[#allocation12 + $0x510] sm:$0xff]
    %v1091 = vld [vmem:[#allocation12 + $0x518] sm:$0xff]
    %v1092 = vld [vmem:[#allocation12 + $0x520] sm:$0xff]
    %v1093 = vld [vmem:[#allocation12 + $0x528] sm:$0xff]
    %v1094 = vld [vmem:[#allocation12 + $0x530] sm:$0xff]
    %v1095 = vld [vmem:[#allocation12 + $0x538] sm:$0xff]
    %v1096 = vld [vmem:[#allocation12 + $0x540] sm:$0xff]
    %v1097 = vld [vmem:[#allocation12 + $0x548] sm:$0xff]
    %v1098 = vld [vmem:[#allocation12 + $0x550] sm:$0xff]
    %v1099 = vld [vmem:[#allocation12 + $0x558] sm:$0xff]
    %v1100 = vld [vmem:[#allocation12 + $0x560] sm:$0xff]
    %v1101 = vld [vmem:[#allocation12 + $0x568] sm:$0xff]
    %v1102 = vld [vmem:[#allocation12 + $0x570] sm:$0xff]
    %v1103 = vld [vmem:[#allocation12 + $0x578] sm:$0xff]
    %v1104 = vld [vmem:[#allocation12 + $0x580] sm:$0xff]
    %v1105 = vld [vmem:[#allocation12 + $0x588] sm:$0xff]
    %v1106 = vld [vmem:[#allocation12 + $0x590] sm:$0xff]
    %v1107 = vld [vmem:[#allocation12 + $0x598] sm:$0xff]
    %v1108 = vld [vmem:[#allocation12 + $0x5a0] sm:$0xff]
    %v1109 = vld [vmem:[#allocation12 + $0x5a8] sm:$0xff]
    %v1110 = vld [vmem:[#allocation12 + $0x5b0] sm:$0xff]
    %v1111 = vld [vmem:[#allocation12 + $0x5b8] sm:$0xff]
    %v1112 = vld [vmem:[#allocation12 + $0x5c0] sm:$0xff]
    %v1113 = vld [vmem:[#allocation12 + $0x5c8] sm:$0xff]
    %v1114 = vld [vmem:[#allocation12 + $0x5d0] sm:$0xff]
    %v1115 = vld [vmem:[#allocation12 + $0x5d8] sm:$0xff]
    %v1116 = vld [vmem:[#allocation12 + $0x5e0] sm:$0xff]
    %v1117 = vld [vmem:[#allocation12 + $0x5e8] sm:$0xff]
    %v1118 = vld [vmem:[#allocation12 + $0x5f0] sm:$0xff]
    %v1119 = vld [vmem:[#allocation12 + $0x5f8] sm:$0xff]
    %v1120 = vld [vmem:[#allocation12 + $0x600] sm:$0xff]
    %v1121 = vld [vmem:[#allocation12 + $0x608] sm:$0xff]
    %v1122 = vld [vmem:[#allocation12 + $0x610] sm:$0xff]
    %v1123 = vld [vmem:[#allocation12 + $0x618] sm:$0xff]
    %v1124 = vld [vmem:[#allocation12 + $0x620] sm:$0xff]
    %v1125 = vld [vmem:[#allocation12 + $0x628] sm:$0xff]
    %v1126 = vld [vmem:[#allocation12 + $0x630] sm:$0xff]
    %v1127 = vld [vmem:[#allocation12 + $0x638] sm:$0xff]
    %v1128 = vld [vmem:[#allocation12 + $0x640] sm:$0xff]
    %v1129 = vld [vmem:[#allocation12 + $0x648] sm:$0xff]
    %v1130 = vld [vmem:[#allocation12 + $0x650] sm:$0xff]
    %v1131 = vld [vmem:[#allocation12 + $0x658] sm:$0xff]
    %v1132 = vld [vmem:[#allocation12 + $0x660] sm:$0xff]
    %v1133 = vld [vmem:[#allocation12 + $0x668] sm:$0xff]
    %v1134 = vld [vmem:[#allocation12 + $0x670] sm:$0xff]
    %v1135 = vld [vmem:[#allocation12 + $0x678] sm:$0xff]
    %v1136 = vld [vmem:[#allocation12 + $0x680] sm:$0xff]
    %v1137 = vld [vmem:[#allocation12 + $0x688] sm:$0xff]
    %v1138 = vld [vmem:[#allocation12 + $0x690] sm:$0xff]
    %v1139 = vld [vmem:[#allocation12 + $0x698] sm:$0xff]
    %v1140 = vld [vmem:[#allocation12 + $0x6a0] sm:$0xff]
    %v1141 = vld [vmem:[#allocation12 + $0x6a8] sm:$0xff]
    %v1142 = vld [vmem:[#allocation12 + $0x6b0] sm:$0xff]
    %v1143 = vld [vmem:[#allocation12 + $0x6b8] sm:$0xff]
    %v1144 = vld [vmem:[#allocation12 + $0x6c0] sm:$0xff]
    %v1145 = vld [vmem:[#allocation12 + $0x6c8] sm:$0xff]
    %v1146 = vld [vmem:[#allocation12 + $0x6d0] sm:$0xff]
    %v1147 = vld [vmem:[#allocation12 + $0x6d8] sm:$0xff]
    %v1148 = vld [vmem:[#allocation12 + $0x6e0] sm:$0xff]
    %v1149 = vld [vmem:[#allocation12 + $0x6e8] sm:$0xff]
    %v1150 = vld [vmem:[#allocation12 + $0x6f0] sm:$0xff]
    %v1151 = vld [vmem:[#allocation12 + $0x6f8] sm:$0xff]
    %v1152 = vld [vmem:[#allocation12 + $0x700] sm:$0xff]
    %v1153 = vld [vmem:[#allocation12 + $0x708] sm:$0xff]
    %v1154 = vld [vmem:[#allocation12 + $0x710] sm:$0xff]
    %v1155 = vld [vmem:[#allocation12 + $0x718] sm:$0xff]
    %v1156 = vld [vmem:[#allocation12 + $0x720] sm:$0xff]
    %v1157 = vld [vmem:[#allocation12 + $0x728] sm:$0xff]
    %v1158 = vld [vmem:[#allocation12 + $0x730] sm:$0xff]
    %v1159 = vld [vmem:[#allocation12 + $0x738] sm:$0xff]
    %v1160 = vld [vmem:[#allocation12 + $0x740] sm:$0xff]
    %v1161 = vld [vmem:[#allocation12 + $0x748] sm:$0xff]
    %v1162 = vld [vmem:[#allocation12 + $0x750] sm:$0xff]
    %v1163 = vld [vmem:[#allocation12 + $0x758] sm:$0xff]
    %v1164 = vld [vmem:[#allocation12 + $0x760] sm:$0xff]
    %v1165 = vld [vmem:[#allocation12 + $0x768] sm:$0xff]
    %v1166 = vld [vmem:[#allocation12 + $0x770] sm:$0xff]
    %v1167 = vld [vmem:[#allocation12 + $0x778] sm:$0xff]
    %v1168 = vld [vmem:[#allocation12 + $0x780] sm:$0xff]
    %v1169 = vld [vmem:[#allocation12 + $0x788] sm:$0xff]
    %v1170 = vld [vmem:[#allocation12 + $0x790] sm:$0xff]
    %v1171 = vld [vmem:[#allocation12 + $0x798] sm:$0xff]
    %v1172 = vld [vmem:[#allocation12 + $0x7a0] sm:$0xff]
    %v1173 = vld [vmem:[#allocation12 + $0x7a8] sm:$0xff]
    %v1174 = vld [vmem:[#allocation12 + $0x7b0] sm:$0xff]
    %v1175 = vld [vmem:[#allocation12 + $0x7b8] sm:$0xff]
    %v1176 = vld [vmem:[#allocation12 + $0x7c0] sm:$0xff]
    %v1177 = vld [vmem:[#allocation12 + $0x7c8] sm:$0xff]
    %v1178 = vld [vmem:[#allocation12 + $0x7d0] sm:$0xff]
    %v1179 = vld [vmem:[#allocation12 + $0x7d8] sm:$0xff]
    %v1180 = vld [vmem:[#allocation12 + $0x7e0] sm:$0xff]
    %v1181 = vld [vmem:[#allocation12 + $0x7e8] sm:$0xff]
    %v1182 = vld [vmem:[#allocation12 + $0x7f0] sm:$0xff]
    %v1183 = vld [vmem:[#allocation12 + $0x7f8] sm:$0xff]
    %v1184 = vld [vmem:[#allocation12 + $0x800] sm:$0xff]
    %v1185 = vld [vmem:[#allocation12 + $0x808] sm:$0xff]
    %v1186 = vld [vmem:[#allocation12 + $0x810] sm:$0xff]
    %v1187 = vld [vmem:[#allocation12 + $0x818] sm:$0xff]
    %v1188 = vld [vmem:[#allocation12 + $0x820] sm:$0xff]
    %v1189 = vld [vmem:[#allocation12 + $0x828] sm:$0xff]
    %v1190 = vld [vmem:[#allocation12 + $0x830] sm:$0xff]
    %v1191 = vld [vmem:[#allocation12 + $0x838] sm:$0xff]
    %v1192 = vld [vmem:[#allocation12 + $0x840] sm:$0xff]
    %v1193 = vld [vmem:[#allocation12 + $0x848] sm:$0xff]
    %v1194 = vld [vmem:[#allocation12 + $0x850] sm:$0xff]
    %v1195 = vld [vmem:[#allocation12 + $0x858] sm:$0xff]
    %v1196 = vld [vmem:[#allocation12 + $0x860] sm:$0xff]
    %v1197 = vld [vmem:[#allocation12 + $0x868] sm:$0xff]
    %v1198 = vld [vmem:[#allocation12 + $0x870] sm:$0xff]
    %v1199 = vld [vmem:[#allocation12 + $0x878] sm:$0xff]
    %v1200 = vld [vmem:[#allocation12 + $0x880] sm:$0xff]
    %v1201 = vld [vmem:[#allocation12 + $0x888] sm:$0xff]
    %v1202 = vld [vmem:[#allocation12 + $0x890] sm:$0xff]
    %v1203 = vld [vmem:[#allocation12 + $0x898] sm:$0xff]
    %v1204 = vld [vmem:[#allocation12 + $0x8a0] sm:$0xff]
    %v1205 = vld [vmem:[#allocation12 + $0x8a8] sm:$0xff]
    %v1206 = vld [vmem:[#allocation12 + $0x8b0] sm:$0xff]
    %v1207 = vld [vmem:[#allocation12 + $0x8b8] sm:$0xff]
    %v1208 = vld [vmem:[#allocation12 + $0x8c0] sm:$0xff]
    %v1209 = vld [vmem:[#allocation12 + $0x8c8] sm:$0xff]
    %v1210 = vld [vmem:[#allocation12 + $0x8d0] sm:$0xff]
    %v1211 = vld [vmem:[#allocation12 + $0x8d8] sm:$0xff]
    %v1212 = vld [vmem:[#allocation12 + $0x8e0] sm:$0xff]
    %v1213 = vld [vmem:[#allocation12 + $0x8e8] sm:$0xff]
    %v1214 = vld [vmem:[#allocation12 + $0x8f0] sm:$0xff]
    %v1215 = vld [vmem:[#allocation12 + $0x8f8] sm:$0xff]
    %v1216 = vld [vmem:[#allocation12 + $0x900] sm:$0xff]
    %v1217 = vld [vmem:[#allocation12 + $0x908] sm:$0xff]
    %v1218 = vld [vmem:[#allocation12 + $0x910] sm:$0xff]
    %v1219 = vld [vmem:[#allocation12 + $0x918] sm:$0xff]
    %v1220 = vld [vmem:[#allocation12 + $0x920] sm:$0xff]
    %v1221 = vld [vmem:[#allocation12 + $0x928] sm:$0xff]
    %v1222 = vld [vmem:[#allocation12 + $0x930] sm:$0xff]
    %v1223 = vld [vmem:[#allocation12 + $0x938] sm:$0xff]
    %v1224 = vld [vmem:[#allocation12 + $0x940] sm:$0xff]
    %v1225 = vld [vmem:[#allocation12 + $0x948] sm:$0xff]
    %v1226 = vld [vmem:[#allocation12 + $0x950] sm:$0xff]
    %v1227 = vld [vmem:[#allocation12 + $0x958] sm:$0xff]
    %v1228 = vld [vmem:[#allocation12 + $0x960] sm:$0xff]
    %v1229 = vld [vmem:[#allocation12 + $0x968] sm:$0xff]
    %v1230 = vld [vmem:[#allocation12 + $0x970] sm:$0xff]
    %v1231 = vld [vmem:[#allocation12 + $0x978] sm:$0xff]
    %v1232 = vld [vmem:[#allocation12 + $0x980] sm:$0xff]
    %v1233 = vld [vmem:[#allocation12 + $0x988] sm:$0xff]
    %v1234 = vld [vmem:[#allocation12 + $0x990] sm:$0xff]
    %v1235 = vld [vmem:[#allocation12 + $0x998] sm:$0xff]
    %v1236 = vld [vmem:[#allocation12 + $0x9a0] sm:$0xff]
    %v1237 = vld [vmem:[#allocation12 + $0x9a8] sm:$0xff]
    %v1238 = vld [vmem:[#allocation12 + $0x9b0] sm:$0xff]
    %v1239 = vld [vmem:[#allocation12 + $0x9b8] sm:$0xff]
    %v1240 = vld [vmem:[#allocation12 + $0x9c0] sm:$0xff]
    %v1241 = vld [vmem:[#allocation12 + $0x9c8] sm:$0xff]
    %v1242 = vld [vmem:[#allocation12 + $0x9d0] sm:$0xff]
    %v1243 = vld [vmem:[#allocation12 + $0x9d8] sm:$0xff]
    %v1244 = vld [vmem:[#allocation12 + $0x9e0] sm:$0xff]
    %v1245 = vld [vmem:[#allocation12 + $0x9e8] sm:$0xff]
    %v1246 = vld [vmem:[#allocation12 + $0x9f0] sm:$0xff]
    %v1247 = vld [vmem:[#allocation12 + $0x9f8] sm:$0xff]
    %v1248 = vld [vmem:[#allocation12 + $0xa00] sm:$0xff]
    %v1249 = vld [vmem:[#allocation12 + $0xa08] sm:$0xff]
    %v1250 = vld [vmem:[#allocation12 + $0xa10] sm:$0xff]
    %v1251 = vld [vmem:[#allocation12 + $0xa18] sm:$0xff]
    %v1252 = vld [vmem:[#allocation12 + $0xa20] sm:$0xff]
    %v1253 = vld [vmem:[#allocation12 + $0xa28] sm:$0xff]
    %v1254 = vld [vmem:[#allocation12 + $0xa30] sm:$0xff]
    %v1255 = vld [vmem:[#allocation12 + $0xa38] sm:$0xff]
    %v1256 = vld [vmem:[#allocation12 + $0xa40] sm:$0xff]
    %v1257 = vld [vmem:[#allocation12 + $0xa48] sm:$0xff]
    %v1258 = vld [vmem:[#allocation12 + $0xa50] sm:$0xff]
    %v1259 = vld [vmem:[#allocation12 + $0xa58] sm:$0xff]
    %v1260 = vld [vmem:[#allocation12 + $0xa60] sm:$0xff]
    %v1261 = vld [vmem:[#allocation12 + $0xa68] sm:$0xff]
    %v1262 = vld [vmem:[#allocation12 + $0xa70] sm:$0xff]
    %v1263 = vld [vmem:[#allocation12 + $0xa78] sm:$0xff]
    %v1264 = vld [vmem:[#allocation12 + $0xa80] sm:$0xff]
    %v1265 = vld [vmem:[#allocation12 + $0xa88] sm:$0xff]
    %v1266 = vld [vmem:[#allocation12 + $0xa90] sm:$0xff]
    %v1267 = vld [vmem:[#allocation12 + $0xa98] sm:$0xff]
    %v1268 = vld [vmem:[#allocation12 + $0xaa0] sm:$0xff]
    %v1269 = vld [vmem:[#allocation12 + $0xaa8] sm:$0xff]
    %v1270 = vld [vmem:[#allocation12 + $0xab0] sm:$0xff]
    %v1271 = vld [vmem:[#allocation12 + $0xab8] sm:$0xff]
    %v1272 = vld [vmem:[#allocation12 + $0xac0] sm:$0xff]
    %v1273 = vld [vmem:[#allocation12 + $0xac8] sm:$0xff]
    %v1274 = vld [vmem:[#allocation12 + $0xad0] sm:$0xff]
    %v1275 = vld [vmem:[#allocation12 + $0xad8] sm:$0xff]
    %v1276 = vld [vmem:[#allocation12 + $0xae0] sm:$0xff]
    %v1277 = vld [vmem:[#allocation12 + $0xae8] sm:$0xff]
    %v1278 = vld [vmem:[#allocation12 + $0xaf0] sm:$0xff]
    %v1279 = vld [vmem:[#allocation12 + $0xaf8] sm:$0xff]
    %v1280 = vld [vmem:[#allocation12 + $0xb00] sm:$0xff]
    %v1281 = vld [vmem:[#allocation12 + $0xb08] sm:$0xff]
    %v1282 = vld [vmem:[#allocation12 + $0xb10] sm:$0xff]
    %v1283 = vld [vmem:[#allocation12 + $0xb18] sm:$0xff]
    %v1284 = vld [vmem:[#allocation12 + $0xb20] sm:$0xff]
    %v1285 = vld [vmem:[#allocation12 + $0xb28] sm:$0xff]
    %v1286 = vld [vmem:[#allocation12 + $0xb30] sm:$0xff]
    %v1287 = vld [vmem:[#allocation12 + $0xb38] sm:$0xff]
    %v1288 = vld [vmem:[#allocation12 + $0xb40] sm:$0xff]
    %v1289 = vld [vmem:[#allocation12 + $0xb48] sm:$0xff]
    %v1290 = vld [vmem:[#allocation12 + $0xb50] sm:$0xff]
    %v1291 = vld [vmem:[#allocation12 + $0xb58] sm:$0xff]
    %v1292 = vld [vmem:[#allocation12 + $0xb60] sm:$0xff]
    %v1293 = vld [vmem:[#allocation12 + $0xb68] sm:$0xff]
    %v1294 = vld [vmem:[#allocation12 + $0xb70] sm:$0xff]
    %v1295 = vld [vmem:[#allocation12 + $0xb78] sm:$0xff]
    %v1296 = vld [vmem:[#allocation12 + $0xb80] sm:$0xff]
    %v1297 = vld [vmem:[#allocation12 + $0xb88] sm:$0xff]
    %v1298 = vld [vmem:[#allocation12 + $0xb90] sm:$0xff]
    %v1299 = vld [vmem:[#allocation12 + $0xb98] sm:$0xff]
    %v1300 = vld [vmem:[#allocation12 + $0xba0] sm:$0xff]
    %v1301 = vld [vmem:[#allocation12 + $0xba8] sm:$0xff]
    %v1302 = vld [vmem:[#allocation12 + $0xbb0] sm:$0xff]
    %v1303 = vld [vmem:[#allocation12 + $0xbb8] sm:$0xff]
    %v1304 = vld [vmem:[#allocation12 + $0xbc0] sm:$0xff]
    %v1305 = vld [vmem:[#allocation12 + $0xbc8] sm:$0xff]
    %v1306 = vld [vmem:[#allocation12 + $0xbd0] sm:$0xff]
    %v1307 = vld [vmem:[#allocation12 + $0xbd8] sm:$0xff]
    %v1308 = vld [vmem:[#allocation12 + $0xbe0] sm:$0xff]
    %v1309 = vld [vmem:[#allocation12 + $0xbe8] sm:$0xff]
    %v1310 = vld [vmem:[#allocation12 + $0xbf0] sm:$0xff]
    %v1311 = vld [vmem:[#allocation12 + $0xbf8] sm:$0xff]
    %v1312 = vld [vmem:[#allocation13] sm:$0xf]
    %v1314 = vlaneseq
    %v1315 = vshrl.u32 %v1314, 7
    %v1316 = vsub.s32 0, %v1315
    %v1317 = vrot.slane %v1312, %v1316
    %v1318 = vlaneseq
    %v1319 = vshrl.u32 %v1318, 7
    %v1320 = vsub.s32 1, %v1319
    %v1321 = vrot.slane %v1312, %v1320
    %v1322 = vlaneseq
    %v1323 = vshrl.u32 %v1322, 7
    %v1324 = vsub.s32 2, %v1323
    %v1325 = vrot.slane %v1312, %v1324
    %v1326 = vlaneseq
    %v1327 = vshrl.u32 %v1326, 7
    %v1328 = vsub.s32 3, %v1327
    %v1329 = vrot.slane %v1312, %v1328
    %1334 = vmatprep.subr.mxu0 %v989
    %1335 = vmatpush1.msra.mxu0 %v988
    %1336 = vmatprep.subr.mxu0 %v985
    %1337 = vmatpush1.msra.mxu0 %v984
    %1338 = vmatprep.subr.mxu0 %v981
    %1339 = vmatpush1.msra.mxu0 %v980
    %1340 = vmatprep.subr.mxu0 %v977
    %1341 = vmatpush1.msra.mxu0 %v976
    %1342 = vmatprep.subr.mxu0 %v973
    %1343 = vmatpush1.msra.mxu0 %v972
    %1344 = vmatprep.subr.mxu0 %v969
    %1345 = vmatpush1.msra.mxu0 %v968
    %1346 = vmatprep.subr.mxu0 %v965
    %1347 = vmatpush1.msra.mxu0 %v964
    %1348 = vmatprep.subr.mxu0 %v961
    %1349 = vmatpush1.msra.mxu0 %v960
    %1350 = vmatprep.subr.mxu0 %v957
    %1351 = vmatpush1.msra.mxu0 %v956
    %1352 = vmatprep.subr.mxu0 %v953
    %1353 = vmatpush1.msra.mxu0 %v952
    %1354 = vmatprep.subr.mxu0 %v949
    %1355 = vmatpush1.msra.mxu0 %v948
    %1356 = vmatprep.subr.mxu0 %v945
    %1357 = vmatpush1.msra.mxu0 %v944
    %1358 = vmatprep.subr.mxu0 %v941
    %1359 = vmatpush1.msra.mxu0 %v940
    %1360 = vmatprep.subr.mxu0 %v937
    %1361 = vmatpush1.msra.mxu0 %v936
    %1362 = vmatprep.subr.mxu0 %v933
    %1363 = vmatpush1.msra.mxu0 %v932
    %1364 = vmatprep.subr.mxu0 %v929
    %1365 = vmatpush1.msra.mxu0 %v928
    %1366 = vmatprep.subr.mxu0 %v1053
    %1367 = vmatpush2.msra.mxu0 %v1052
    %1368 = vmatprep.subr.mxu0 %v1049
    %1369 = vmatpush2.msra.mxu0 %v1048
    %1370 = vmatprep.subr.mxu0 %v1045
    %1371 = vmatpush2.msra.mxu0 %v1044
    %1372 = vmatprep.subr.mxu0 %v1041
    %1373 = vmatpush2.msra.mxu0 %v1040
    %1374 = vmatprep.subr.mxu0 %v1037
    %1375 = vmatpush2.msra.mxu0 %v1036
    %1376 = vmatprep.subr.mxu0 %v1033
    %1377 = vmatpush2.msra.mxu0 %v1032
    %1378 = vmatprep.subr.mxu0 %v1029
    %1379 = vmatpush2.msra.mxu0 %v1028
    %1380 = vmatprep.subr.mxu0 %v1025
    %1381 = vmatpush2.msra.mxu0 %v1024
    %1382 = vmatprep.subr.mxu0 %v1021
    %1383 = vmatpush2.msra.mxu0 %v1020
    %1384 = vmatprep.subr.mxu0 %v1017
    %1385 = vmatpush2.msra.mxu0 %v1016
    %1386 = vmatprep.subr.mxu0 %v1013
    %1387 = vmatpush2.msra.mxu0 %v1012
    %1388 = vmatprep.subr.mxu0 %v1009
    %1389 = vmatpush2.msra.mxu0 %v1008
    %1390 = vmatprep.subr.mxu0 %v1005
    %1391 = vmatpush2.msra.mxu0 %v1004
    %1392 = vmatprep.subr.mxu0 %v1001
    %1393 = vmatpush2.msra.mxu0 %v1000
    %1394 = vmatprep.subr.mxu0 %v997
    %1395 = vmatpush2.msra.mxu0 %v996
    %1396 = vmatprep.subr.mxu0 %v993
    %1397 = vmatpush2.msra.mxu0 %v992
    %1398 = vmatprep.mubr.f32.mxu0 %v806
    %1399 = vmatmul.mubr.f32.gmra.mxu0 %v805
    %v1400 = vpop.f32.mrf.mxu0
    %v1401 = vadd.f32 %v1317, %v1400
    %v1402 = vpop.f32.mrf.mxu0
    %v1403 = vadd.f32 %v1321, %v1402
    %1404 = vmatprep.mubr.f32.mxu0 %v808
    %1405 = vmatmul.mubr.f32.gmra.mxu0 %v807
    %v1406 = vpop.f32.mrf.mxu0
    %v1407 = vadd.f32 %v1317, %v1406
    %v1408 = vpop.f32.mrf.mxu0
    %v1409 = vadd.f32 %v1321, %v1408
    %1410 = vmatprep.mubr.f32.mxu0 %v827
    %1411 = vmatmul.mubr.f32.gmra.mxu0 %v824
    %v1412 = vpop.f32.mrf.mxu0
    %v1413 = vadd.f32 %v1317, %v1412
    %v1414 = vpop.f32.mrf.mxu0
    %v1415 = vadd.f32 %v1321, %v1414
    %1416 = vmatprep.mubr.f32.mxu0 %v831
    %1417 = vmatmul.mubr.f32.gmra.mxu0 %v829
    %v1418 = vpop.f32.mrf.mxu0
    %v1419 = vadd.f32 %v1317, %v1418
    %v1420 = vpop.f32.mrf.mxu0
    %v1421 = vadd.f32 %v1321, %v1420
    %1422 = vdwg.mxu0
    %1423 = vmatprep.subr.mxu0 %v1117
    %1424 = vmatpush1.msra.mxu0 %v1116
    %1425 = vmatprep.subr.mxu0 %v1113
    %1426 = vmatpush1.msra.mxu0 %v1112
    %1427 = vmatprep.subr.mxu0 %v1109
    %1428 = vmatpush1.msra.mxu0 %v1108
    %1429 = vmatprep.subr.mxu0 %v1105
    %1430 = vmatpush1.msra.mxu0 %v1104
    %1431 = vmatprep.subr.mxu0 %v1101
    %1432 = vmatpush1.msra.mxu0 %v1100
    %1433 = vmatprep.subr.mxu0 %v1097
    %1434 = vmatpush1.msra.mxu0 %v1096
    %1435 = vmatprep.subr.mxu0 %v1093
    %1436 = vmatpush1.msra.mxu0 %v1092
    %1437 = vmatprep.subr.mxu0 %v1089
    %1438 = vmatpush1.msra.mxu0 %v1088
    %1439 = vmatprep.subr.mxu0 %v1085
    %1440 = vmatpush1.msra.mxu0 %v1084
    %1441 = vmatprep.subr.mxu0 %v1081
    %1442 = vmatpush1.msra.mxu0 %v1080
    %1443 = vmatprep.subr.mxu0 %v1077
    %1444 = vmatpush1.msra.mxu0 %v1076
    %1445 = vmatprep.subr.mxu0 %v1073
    %1446 = vmatpush1.msra.mxu0 %v1072
    %1447 = vmatprep.subr.mxu0 %v1069
    %1448 = vmatpush1.msra.mxu0 %v1068
    %1449 = vmatprep.subr.mxu0 %v1065
    %1450 = vmatpush1.msra.mxu0 %v1064
    %1451 = vmatprep.subr.mxu0 %v1061
    %1452 = vmatpush1.msra.mxu0 %v1060
    %1453 = vmatprep.subr.mxu0 %v1057
    %1454 = vmatpush1.msra.mxu0 %v1056
    %1455 = vmatprep.subr.mxu0 %v1181
    %1456 = vmatpush2.msra.mxu0 %v1180
    %1457 = vmatprep.subr.mxu0 %v1177
    %1458 = vmatpush2.msra.mxu0 %v1176
    %1459 = vmatprep.subr.mxu0 %v1173
    %1460 = vmatpush2.msra.mxu0 %v1172
    %1461 = vmatprep.subr.mxu0 %v1169
    %1462 = vmatpush2.msra.mxu0 %v1168
    %1463 = vmatprep.subr.mxu0 %v1165
    %1464 = vmatpush2.msra.mxu0 %v1164
    %1465 = vmatprep.subr.mxu0 %v1161
    %1466 = vmatpush2.msra.mxu0 %v1160
    %1467 = vmatprep.subr.mxu0 %v1157
    %1468 = vmatpush2.msra.mxu0 %v1156
    %1469 = vmatprep.subr.mxu0 %v1153
    %1470 = vmatpush2.msra.mxu0 %v1152
    %1471 = vmatprep.subr.mxu0 %v1149
    %1472 = vmatpush2.msra.mxu0 %v1148
    %1473 = vmatprep.subr.mxu0 %v1145
    %1474 = vmatpush2.msra.mxu0 %v1144
    %1475 = vmatprep.subr.mxu0 %v1141
    %1476 = vmatpush2.msra.mxu0 %v1140
    %1477 = vmatprep.subr.mxu0 %v1137
    %1478 = vmatpush2.msra.mxu0 %v1136
    %1479 = vmatprep.subr.mxu0 %v1133
    %1480 = vmatpush2.msra.mxu0 %v1132
    %1481 = vmatprep.subr.mxu0 %v1129
    %1482 = vmatpush2.msra.mxu0 %v1128
    %1483 = vmatprep.subr.mxu0 %v1125
    %1484 = vmatpush2.msra.mxu0 %v1124
    %1485 = vmatprep.subr.mxu0 %v1121
    %1486 = vmatpush2.msra.mxu0 %v1120
    %1487 = vmatprep.mubr.f32.mxu0 %v855
    %1488 = vmatmul.mubr.f32.gmra.mxu0 %v852
    %v1489 = vpop.f32.mrf.mxu0
    %v1490 = vadd.f32 %v1401, %v1489
    %v1491 = vpop.f32.mrf.mxu0
    %v1492 = vadd.f32 %v1403, %v1491
    %1493 = vmatprep.mubr.f32.mxu0 %v859
    %1494 = vmatmul.mubr.f32.gmra.mxu0 %v857
    %v1495 = vpop.f32.mrf.mxu0
    %v1496 = vadd.f32 %v1407, %v1495
    %v1497 = vpop.f32.mrf.mxu0
    %v1498 = vadd.f32 %v1409, %v1497
    %1499 = vmatprep.mubr.f32.mxu0 %v874
    %1500 = vmatmul.mubr.f32.gmra.mxu0 %v871
    %v1501 = vpop.f32.mrf.mxu0
    %v1502 = vadd.f32 %v1413, %v1501
    %v1503 = vpop.f32.mrf.mxu0
    %v1504 = vadd.f32 %v1415, %v1503
    %1505 = vmatprep.mubr.f32.mxu0 %v878
    %1506 = vmatmul.mubr.f32.gmra.mxu0 %v876
    %v1507 = vpop.f32.mrf.mxu0
    %v1508 = vadd.f32 %v1419, %v1507
    %v1509 = vpop.f32.mrf.mxu0
    %v1510 = vadd.f32 %v1421, %v1509
    %1511 = vdwg.mxu0
    %1512 = vmatprep.subr.mxu0 %v1245
    %1513 = vmatpush1.msra.mxu0 %v1244
    %1514 = vmatprep.subr.mxu0 %v1241
    %1515 = vmatpush1.msra.mxu0 %v1240
    %1516 = vmatprep.subr.mxu0 %v1237
    %1517 = vmatpush1.msra.mxu0 %v1236
    %1518 = vmatprep.subr.mxu0 %v1233
    %1519 = vmatpush1.msra.mxu0 %v1232
    %1520 = vmatprep.subr.mxu0 %v1229
    %1521 = vmatpush1.msra.mxu0 %v1228
    %1522 = vmatprep.subr.mxu0 %v1225
    %1523 = vmatpush1.msra.mxu0 %v1224
    %1524 = vmatprep.subr.mxu0 %v1221
    %1525 = vmatpush1.msra.mxu0 %v1220
    %1526 = vmatprep.subr.mxu0 %v1217
    %1527 = vmatpush1.msra.mxu0 %v1216
    %1528 = vmatprep.subr.mxu0 %v1213
    %1529 = vmatpush1.msra.mxu0 %v1212
    %1530 = vmatprep.subr.mxu0 %v1209
    %1531 = vmatpush1.msra.mxu0 %v1208
    %1532 = vmatprep.subr.mxu0 %v1205
    %1533 = vmatpush1.msra.mxu0 %v1204
    %1534 = vmatprep.subr.mxu0 %v1201
    %1535 = vmatpush1.msra.mxu0 %v1200
    %1536 = vmatprep.subr.mxu0 %v1197
    %1537 = vmatpush1.msra.mxu0 %v1196
    %1538 = vmatprep.subr.mxu0 %v1193
    %1539 = vmatpush1.msra.mxu0 %v1192
    %1540 = vmatprep.subr.mxu0 %v1189
    %1541 = vmatpush1.msra.mxu0 %v1188
    %1542 = vmatprep.subr.mxu0 %v1185
    %1543 = vmatpush1.msra.mxu0 %v1184
    %1544 = vmatprep.subr.mxu0 %v1309
    %1545 = vmatpush2.msra.mxu0 %v1308
    %1546 = vmatprep.subr.mxu0 %v1305
    %1547 = vmatpush2.msra.mxu0 %v1304
    %1548 = vmatprep.subr.mxu0 %v1301
    %1549 = vmatpush2.msra.mxu0 %v1300
    %1550 = vmatprep.subr.mxu0 %v1297
    %1551 = vmatpush2.msra.mxu0 %v1296
    %1552 = vmatprep.subr.mxu0 %v1293
    %1553 = vmatpush2.msra.mxu0 %v1292
    %1554 = vmatprep.subr.mxu0 %v1289
    %1555 = vmatpush2.msra.mxu0 %v1288
    %1556 = vmatprep.subr.mxu0 %v1285
    %1557 = vmatpush2.msra.mxu0 %v1284
    %1558 = vmatprep.subr.mxu0 %v1281
    %1559 = vmatpush2.msra.mxu0 %v1280
    %1560 = vmatprep.subr.mxu0 %v1277
    %1561 = vmatpush2.msra.mxu0 %v1276
    %1562 = vmatprep.subr.mxu0 %v1273
    %1563 = vmatpush2.msra.mxu0 %v1272
    %1564 = vmatprep.subr.mxu0 %v1269
    %1565 = vmatpush2.msra.mxu0 %v1268
    %1566 = vmatprep.subr.mxu0 %v1265
    %1567 = vmatpush2.msra.mxu0 %v1264
    %1568 = vmatprep.subr.mxu0 %v1261
    %1569 = vmatpush2.msra.mxu0 %v1260
    %1570 = vmatprep.subr.mxu0 %v1257
    %1571 = vmatpush2.msra.mxu0 %v1256
    %1572 = vmatprep.subr.mxu0 %v1253
    %1573 = vmatpush2.msra.mxu0 %v1252
    %1574 = vmatprep.subr.mxu0 %v1249
    %1575 = vmatpush2.msra.mxu0 %v1248
    %1576 = vmatprep.mubr.f32.mxu0 %v900
    %1577 = vmatmul.mubr.f32.gmra.mxu0 %v897
    %v1578 = vpop.f32.mrf.mxu0
    %v1579 = vadd.f32 %v1490, %v1578
    %v1580 = vpop.f32.mrf.mxu0
    %v1581 = vadd.f32 %v1492, %v1580
    %1582 = vmatprep.mubr.f32.mxu0 %v904
    %1583 = vmatmul.mubr.f32.gmra.mxu0 %v902
    %v1584 = vpop.f32.mrf.mxu0
    %v1585 = vadd.f32 %v1496, %v1584
    %v1586 = vpop.f32.mrf.mxu0
    %v1587 = vadd.f32 %v1498, %v1586
    %1588 = vmatprep.mubr.f32.mxu0 %v919
    %1589 = vmatmul.mubr.f32.gmra.mxu0 %v916
    %v1590 = vpop.f32.mrf.mxu0
    %v1591 = vadd.f32 %v1502, %v1590
    %v1592 = vpop.f32.mrf.mxu0
    %v1593 = vadd.f32 %v1504, %v1592
    %1594 = vmatprep.mubr.f32.mxu0 %v923
    %1595 = vmatmul.mubr.f32.gmra.mxu0 %v921
    %v1596 = vpop.f32.mrf.mxu0
    %v1597 = vadd.f32 %v1508, %v1596
    %v1598 = vpop.f32.mrf.mxu0
    %v1599 = vadd.f32 %v1510, %v1598
    %1600 = vdwg.mxu0
    %1601 = vmatprep.subr.mxu0 %v991
    %1602 = vmatpush1.msra.mxu0 %v990
    %1603 = vmatprep.subr.mxu0 %v987
    %1604 = vmatpush1.msra.mxu0 %v986
    %1605 = vmatprep.subr.mxu0 %v983
    %1606 = vmatpush1.msra.mxu0 %v982
    %1607 = vmatprep.subr.mxu0 %v979
    %1608 = vmatpush1.msra.mxu0 %v978
    %1609 = vmatprep.subr.mxu0 %v975
    %1610 = vmatpush1.msra.mxu0 %v974
    %1611 = vmatprep.subr.mxu0 %v971
    %1612 = vmatpush1.msra.mxu0 %v970
    %1613 = vmatprep.subr.mxu0 %v967
    %1614 = vmatpush1.msra.mxu0 %v966
    %1615 = vmatprep.subr.mxu0 %v963
    %1616 = vmatpush1.msra.mxu0 %v962
    %1617 = vmatprep.subr.mxu0 %v959
    %1618 = vmatpush1.msra.mxu0 %v958
    %1619 = vmatprep.subr.mxu0 %v955
    %1620 = vmatpush1.msra.mxu0 %v954
    %1621 = vmatprep.subr.mxu0 %v951
    %1622 = vmatpush1.msra.mxu0 %v950
    %1623 = vmatprep.subr.mxu0 %v947
    %1624 = vmatpush1.msra.mxu0 %v946
    %1625 = vmatprep.subr.mxu0 %v943
    %1626 = vmatpush1.msra.mxu0 %v942
    %1627 = vmatprep.subr.mxu0 %v939
    %1628 = vmatpush1.msra.mxu0 %v938
    %1629 = vmatprep.subr.mxu0 %v935
    %1630 = vmatpush1.msra.mxu0 %v934
    %1631 = vmatprep.subr.mxu0 %v931
    %1632 = vmatpush1.msra.mxu0 %v930
    %1633 = vmatprep.subr.mxu0 %v1055
    %1634 = vmatpush2.msra.mxu0 %v1054
    %1635 = vmatprep.subr.mxu0 %v1051
    %1636 = vmatpush2.msra.mxu0 %v1050
    %1637 = vmatprep.subr.mxu0 %v1047
    %1638 = vmatpush2.msra.mxu0 %v1046
    %1639 = vmatprep.subr.mxu0 %v1043
    %1640 = vmatpush2.msra.mxu0 %v1042
    %1641 = vmatprep.subr.mxu0 %v1039
    %1642 = vmatpush2.msra.mxu0 %v1038
    %1643 = vmatprep.subr.mxu0 %v1035
    %1644 = vmatpush2.msra.mxu0 %v1034
    %1645 = vmatprep.subr.mxu0 %v1031
    %1646 = vmatpush2.msra.mxu0 %v1030
    %1647 = vmatprep.subr.mxu0 %v1027
    %1648 = vmatpush2.msra.mxu0 %v1026
    %1649 = vmatprep.subr.mxu0 %v1023
    %1650 = vmatpush2.msra.mxu0 %v1022
    %1651 = vmatprep.subr.mxu0 %v1019
    %1652 = vmatpush2.msra.mxu0 %v1018
    %1653 = vmatprep.subr.mxu0 %v1015
    %1654 = vmatpush2.msra.mxu0 %v1014
    %1655 = vmatprep.subr.mxu0 %v1011
    %1656 = vmatpush2.msra.mxu0 %v1010
    %1657 = vmatprep.subr.mxu0 %v1007
    %1658 = vmatpush2.msra.mxu0 %v1006
    %1659 = vmatprep.subr.mxu0 %v1003
    %1660 = vmatpush2.msra.mxu0 %v1002
    %1661 = vmatprep.subr.mxu0 %v999
    %1662 = vmatpush2.msra.mxu0 %v998
    %1663 = vmatprep.subr.mxu0 %v995
    %1664 = vmatpush2.msra.mxu0 %v994
    %1665 = vmatprep.mubr.f32.mxu0 %v806
    %1666 = vmatmul.mubr.f32.gmra.mxu0 %v805
    %v1667 = vpop.f32.mrf.mxu0
    %v1668 = vadd.f32 %v1325, %v1667
    %v1669 = vpop.f32.mrf.mxu0
    %v1670 = vadd.f32 %v1329, %v1669
    %1671 = vmatprep.mubr.f32.mxu0 %v808
    %1672 = vmatmul.mubr.f32.gmra.mxu0 %v807
    %v1673 = vpop.f32.mrf.mxu0
    %v1674 = vadd.f32 %v1325, %v1673
    %v1675 = vpop.f32.mrf.mxu0
    %v1676 = vadd.f32 %v1329, %v1675
    %1677 = vmatprep.mubr.f32.mxu0 %v827
    %1678 = vmatmul.mubr.f32.gmra.mxu0 %v824
    %v1679 = vpop.f32.mrf.mxu0
    %v1680 = vadd.f32 %v1325, %v1679
    %v1681 = vpop.f32.mrf.mxu0
    %v1682 = vadd.f32 %v1329, %v1681
    %1683 = vmatprep.mubr.f32.mxu0 %v831
    %1684 = vmatmul.mubr.f32.gmra.mxu0 %v829
    %v1685 = vpop.f32.mrf.mxu0
    %v1686 = vadd.f32 %v1325, %v1685
    %v1687 = vpop.f32.mrf.mxu0
    %v1688 = vadd.f32 %v1329, %v1687
    %1689 = vdwg.mxu0
    %1690 = vmatprep.subr.mxu0 %v1119
    %1691 = vmatpush1.msra.mxu0 %v1118
    %1692 = vmatprep.subr.mxu0 %v1115
    %1693 = vmatpush1.msra.mxu0 %v1114
    %1694 = vmatprep.subr.mxu0 %v1111
    %1695 = vmatpush1.msra.mxu0 %v1110
    %1696 = vmatprep.subr.mxu0 %v1107
    %1697 = vmatpush1.msra.mxu0 %v1106
    %1698 = vmatprep.subr.mxu0 %v1103
    %1699 = vmatpush1.msra.mxu0 %v1102
    %1700 = vmatprep.subr.mxu0 %v1099
    %1701 = vmatpush1.msra.mxu0 %v1098
    %1702 = vmatprep.subr.mxu0 %v1095
    %1703 = vmatpush1.msra.mxu0 %v1094
    %1704 = vmatprep.subr.mxu0 %v1091
    %1705 = vmatpush1.msra.mxu0 %v1090
    %1706 = vmatprep.subr.mxu0 %v1087
    %1707 = vmatpush1.msra.mxu0 %v1086
    %1708 = vmatprep.subr.mxu0 %v1083
    %1709 = vmatpush1.msra.mxu0 %v1082
    %1710 = vmatprep.subr.mxu0 %v1079
    %1711 = vmatpush1.msra.mxu0 %v1078
    %1712 = vmatprep.subr.mxu0 %v1075
    %1713 = vmatpush1.msra.mxu0 %v1074
    %1714 = vmatprep.subr.mxu0 %v1071
    %1715 = vmatpush1.msra.mxu0 %v1070
    %1716 = vmatprep.subr.mxu0 %v1067
    %1717 = vmatpush1.msra.mxu0 %v1066
    %1718 = vmatprep.subr.mxu0 %v1063
    %1719 = vmatpush1.msra.mxu0 %v1062
    %1720 = vmatprep.subr.mxu0 %v1059
    %1721 = vmatpush1.msra.mxu0 %v1058
    %1722 = vmatprep.subr.mxu0 %v1183
    %1723 = vmatpush2.msra.mxu0 %v1182
    %1724 = vmatprep.subr.mxu0 %v1179
    %1725 = vmatpush2.msra.mxu0 %v1178
    %1726 = vmatprep.subr.mxu0 %v1175
    %1727 = vmatpush2.msra.mxu0 %v1174
    %1728 = vmatprep.subr.mxu0 %v1171
    %1729 = vmatpush2.msra.mxu0 %v1170
    %1730 = vmatprep.subr.mxu0 %v1167
    %1731 = vmatpush2.msra.mxu0 %v1166
    %1732 = vmatprep.subr.mxu0 %v1163
    %1733 = vmatpush2.msra.mxu0 %v1162
    %1734 = vmatprep.subr.mxu0 %v1159
    %1735 = vmatpush2.msra.mxu0 %v1158
    %1736 = vmatprep.subr.mxu0 %v1155
    %1737 = vmatpush2.msra.mxu0 %v1154
    %1738 = vmatprep.subr.mxu0 %v1151
    %1739 = vmatpush2.msra.mxu0 %v1150
    %1740 = vmatprep.subr.mxu0 %v1147
    %1741 = vmatpush2.msra.mxu0 %v1146
    %1742 = vmatprep.subr.mxu0 %v1143
    %1743 = vmatpush2.msra.mxu0 %v1142
    %1744 = vmatprep.subr.mxu0 %v1139
    %1745 = vmatpush2.msra.mxu0 %v1138
    %1746 = vmatprep.subr.mxu0 %v1135
    %1747 = vmatpush2.msra.mxu0 %v1134
    %1748 = vmatprep.subr.mxu0 %v1131
    %1749 = vmatpush2.msra.mxu0 %v1130
    %1750 = vmatprep.subr.mxu0 %v1127
    %1751 = vmatpush2.msra.mxu0 %v1126
    %1752 = vmatprep.subr.mxu0 %v1123
    %1753 = vmatpush2.msra.mxu0 %v1122
    %1754 = vmatprep.mubr.f32.mxu0 %v855
    %1755 = vmatmul.mubr.f32.gmra.mxu0 %v852
    %v1756 = vpop.f32.mrf.mxu0
    %v1757 = vadd.f32 %v1668, %v1756
    %v1758 = vpop.f32.mrf.mxu0
    %v1759 = vadd.f32 %v1670, %v1758
    %1760 = vmatprep.mubr.f32.mxu0 %v859
    %1761 = vmatmul.mubr.f32.gmra.mxu0 %v857
    %v1762 = vpop.f32.mrf.mxu0
    %v1763 = vadd.f32 %v1674, %v1762
    %v1764 = vpop.f32.mrf.mxu0
    %v1765 = vadd.f32 %v1676, %v1764
    %1766 = vmatprep.mubr.f32.mxu0 %v874
    %1767 = vmatmul.mubr.f32.gmra.mxu0 %v871
    %v1768 = vpop.f32.mrf.mxu0
    %v1769 = vadd.f32 %v1680, %v1768
    %v1770 = vpop.f32.mrf.mxu0
    %v1771 = vadd.f32 %v1682, %v1770
    %1772 = vmatprep.mubr.f32.mxu0 %v878
    %1773 = vmatmul.mubr.f32.gmra.mxu0 %v876
    %v1774 = vpop.f32.mrf.mxu0
    %v1775 = vadd.f32 %v1686, %v1774
    %v1776 = vpop.f32.mrf.mxu0
    %v1777 = vadd.f32 %v1688, %v1776
    %1778 = vdwg.mxu0
    %1779 = vmatprep.subr.mxu0 %v1247
    %1780 = vmatpush1.msra.mxu0 %v1246
    %1781 = vmatprep.subr.mxu0 %v1243
    %1782 = vmatpush1.msra.mxu0 %v1242
    %1783 = vmatprep.subr.mxu0 %v1239
    %1784 = vmatpush1.msra.mxu0 %v1238
    %1785 = vmatprep.subr.mxu0 %v1235
    %1786 = vmatpush1.msra.mxu0 %v1234
    %1787 = vmatprep.subr.mxu0 %v1231
    %1788 = vmatpush1.msra.mxu0 %v1230
    %1789 = vmatprep.subr.mxu0 %v1227
    %1790 = vmatpush1.msra.mxu0 %v1226
    %1791 = vmatprep.subr.mxu0 %v1223
    %1792 = vmatpush1.msra.mxu0 %v1222
    %1793 = vmatprep.subr.mxu0 %v1219
    %1794 = vmatpush1.msra.mxu0 %v1218
    %1795 = vmatprep.subr.mxu0 %v1215
    %1796 = vmatpush1.msra.mxu0 %v1214
    %1797 = vmatprep.subr.mxu0 %v1211
    %1798 = vmatpush1.msra.mxu0 %v1210
    %1799 = vmatprep.subr.mxu0 %v1207
    %1800 = vmatpush1.msra.mxu0 %v1206
    %1801 = vmatprep.subr.mxu0 %v1203
    %1802 = vmatpush1.msra.mxu0 %v1202
    %1803 = vmatprep.subr.mxu0 %v1199
    %1804 = vmatpush1.msra.mxu0 %v1198
    %1805 = vmatprep.subr.mxu0 %v1195
    %1806 = vmatpush1.msra.mxu0 %v1194
    %1807 = vmatprep.subr.mxu0 %v1191
    %1808 = vmatpush1.msra.mxu0 %v1190
    %1809 = vmatprep.subr.mxu0 %v1187
    %1810 = vmatpush1.msra.mxu0 %v1186
    %1811 = vmatprep.subr.mxu0 %v1311
    %1812 = vmatpush2.msra.mxu0 %v1310
    %1813 = vmatprep.subr.mxu0 %v1307
    %1814 = vmatpush2.msra.mxu0 %v1306
    %1815 = vmatprep.subr.mxu0 %v1303
    %1816 = vmatpush2.msra.mxu0 %v1302
    %1817 = vmatprep.subr.mxu0 %v1299
    %1818 = vmatpush2.msra.mxu0 %v1298
    %1819 = vmatprep.subr.mxu0 %v1295
    %1820 = vmatpush2.msra.mxu0 %v1294
    %1821 = vmatprep.subr.mxu0 %v1291
    %1822 = vmatpush2.msra.mxu0 %v1290
    %1823 = vmatprep.subr.mxu0 %v1287
    %1824 = vmatpush2.msra.mxu0 %v1286
    %1825 = vmatprep.subr.mxu0 %v1283
    %1826 = vmatpush2.msra.mxu0 %v1282
    %1827 = vmatprep.subr.mxu0 %v1279
    %1828 = vmatpush2.msra.mxu0 %v1278
    %1829 = vmatprep.subr.mxu0 %v1275
    %1830 = vmatpush2.msra.mxu0 %v1274
    %1831 = vmatprep.subr.mxu0 %v1271
    %1832 = vmatpush2.msra.mxu0 %v1270
    %1833 = vmatprep.subr.mxu0 %v1267
    %1834 = vmatpush2.msra.mxu0 %v1266
    %1835 = vmatprep.subr.mxu0 %v1263
    %1836 = vmatpush2.msra.mxu0 %v1262
    %1837 = vmatprep.subr.mxu0 %v1259
    %1838 = vmatpush2.msra.mxu0 %v1258
    %1839 = vmatprep.subr.mxu0 %v1255
    %1840 = vmatpush2.msra.mxu0 %v1254
    %1841 = vmatprep.subr.mxu0 %v1251
    %1842 = vmatpush2.msra.mxu0 %v1250
    %1843 = vmatprep.mubr.f32.mxu0 %v900
    %1844 = vmatmul.mubr.f32.gmra.mxu0 %v897
    %v1845 = vpop.f32.mrf.mxu0
    %v1846 = vadd.f32 %v1757, %v1845
    %v1847 = vpop.f32.mrf.mxu0
    %v1848 = vadd.f32 %v1759, %v1847
    %1849 = vmatprep.mubr.f32.mxu0 %v904
    %1850 = vmatmul.mubr.f32.gmra.mxu0 %v902
    %v1851 = vpop.f32.mrf.mxu0
    %v1852 = vadd.f32 %v1763, %v1851
    %v1853 = vpop.f32.mrf.mxu0
    %v1854 = vadd.f32 %v1765, %v1853
    %1855 = vmatprep.mubr.f32.mxu0 %v919
    %1856 = vmatmul.mubr.f32.gmra.mxu0 %v916
    %v1857 = vpop.f32.mrf.mxu0
    %v1858 = vadd.f32 %v1769, %v1857
    %v1859 = vpop.f32.mrf.mxu0
    %v1860 = vadd.f32 %v1771, %v1859
    %1861 = vmatprep.mubr.f32.mxu0 %v923
    %1862 = vmatmul.mubr.f32.gmra.mxu0 %v921
    %v1863 = vpop.f32.mrf.mxu0
    %v1864 = vadd.f32 %v1775, %v1863
    %v1865 = vpop.f32.mrf.mxu0
    %v1866 = vadd.f32 %v1777, %v1865
    %1867 = vdwg.mxu0
    %vm1868 = vcmp.ge.f32.partialorder %v1579, 0.0
    %vm1869 = vcmp.ge.f32.partialorder %v1581, 0.0
    %vm1870 = vcmp.ge.f32.partialorder %v1846, 0.0
    %vm1871 = vcmp.ge.f32.partialorder %v1848, 0.0
    %vm1872 = vcmp.ge.f32.partialorder %v1585, 0.0
    %vm1873 = vcmp.ge.f32.partialorder %v1587, 0.0
    %vm1874 = vcmp.ge.f32.partialorder %v1852, 0.0
    %vm1875 = vcmp.ge.f32.partialorder %v1854, 0.0
    %vm1876 = vcmp.ge.f32.partialorder %v1591, 0.0
    %vm1877 = vcmp.ge.f32.partialorder %v1593, 0.0
    %vm1878 = vcmp.ge.f32.partialorder %v1858, 0.0
    %vm1879 = vcmp.ge.f32.partialorder %v1860, 0.0
    %vm1880 = vcmp.ge.f32.partialorder %v1597, 0.0
    %vm1881 = vcmp.ge.f32.partialorder %v1599, 0.0
    %vm1882 = vcmp.ge.f32.partialorder %v1864, 0.0
    %vm1883 = vcmp.ge.f32.partialorder %v1866, 0.0
    %v1884 = vmul.f32 %v1579, 0.2
    %v1885 = vmul.f32 %v1581, 0.2
    %v1886 = vmul.f32 %v1846, 0.2
    %v1887 = vmul.f32 %v1848, 0.2
    %v1888 = vmul.f32 %v1585, 0.2
    %v1889 = vmul.f32 %v1587, 0.2
    %v1890 = vmul.f32 %v1852, 0.2
    %v1891 = vmul.f32 %v1854, 0.2
    %v1892 = vmul.f32 %v1591, 0.2
    %v1893 = vmul.f32 %v1593, 0.2
    %v1894 = vmul.f32 %v1858, 0.2
    %v1895 = vmul.f32 %v1860, 0.2
    %v1896 = vmul.f32 %v1597, 0.2
    %v1897 = vmul.f32 %v1599, 0.2
    %v1898 = vmul.f32 %v1864, 0.2
    %v1899 = vmul.f32 %v1866, 0.2
    %v1900 = vsel %vm1868, %v1579, %v1884
    %v1901 = vsel %vm1869, %v1581, %v1885
    %v1902 = vsel %vm1870, %v1846, %v1886
    %v1903 = vsel %vm1871, %v1848, %v1887
    %v1904 = vsel %vm1872, %v1585, %v1888
    %v1905 = vsel %vm1873, %v1587, %v1889
    %v1906 = vsel %vm1874, %v1852, %v1890
    %v1907 = vsel %vm1875, %v1854, %v1891
    %v1908 = vsel %vm1876, %v1591, %v1892
    %v1909 = vsel %vm1877, %v1593, %v1893
    %v1910 = vsel %vm1878, %v1858, %v1894
    %v1911 = vsel %vm1879, %v1860, %v1895
    %v1912 = vsel %vm1880, %v1597, %v1896
    %v1913 = vsel %vm1881, %v1599, %v1897
    %v1914 = vsel %vm1882, %v1864, %v1898
    %v1915 = vsel %vm1883, %v1866, %v1899
    %v1916 = vld [vmem:[#allocation15] sm:$0xff]
    %v1917 = vld [vmem:[#allocation15 + $0x8] sm:$0xff]
    %v1918 = vld [vmem:[#allocation15 + $0x10] sm:$0xff]
    %v1919 = vld [vmem:[#allocation15 + $0x18] sm:$0xff]
    %v1920 = vld [vmem:[#allocation15 + $0x20] sm:$0xff]
    %v1921 = vld [vmem:[#allocation15 + $0x28] sm:$0xff]
    %v1922 = vld [vmem:[#allocation15 + $0x30] sm:$0xff]
    %v1923 = vld [vmem:[#allocation15 + $0x38] sm:$0xff]
    %v1924 = vmul.f32 %v1900, %v1916
    %v1925 = vmul.f32 %v1901, %v1917
    %v1926 = vmul.f32 %v1902, %v1918
    %v1927 = vmul.f32 %v1903, %v1919
    %v1928 = vmul.f32 %v1904, %v1920
    %v1929 = vmul.f32 %v1905, %v1921
    %v1930 = vmul.f32 %v1906, %v1922
    %v1931 = vmul.f32 %v1907, %v1923
    %v1932 = vadd.f32 %v1924, %v1928
    %v1933 = vrot.slane %v1932, 4
    %v1934 = vadd.f32 %v1932, %v1933
    %v1935 = vrot.slane %v1934, 2
    %v1936 = vadd.f32 %v1934, %v1935
    %v1937 = vrot.slane %v1936, 1
    %v1938 = vadd.f32 %v1936, %v1937
    %v1939 = vadd.f32 %v1925, %v1929
    %v1940 = vrot.slane %v1939, 4
    %v1941 = vadd.f32 %v1939, %v1940
    %v1942 = vrot.slane %v1941, 2
    %v1943 = vadd.f32 %v1941, %v1942
    %v1944 = vrot.slane %v1943, 1
    %v1945 = vadd.f32 %v1943, %v1944
    %v1946 = vadd.f32 %v1926, %v1930
    %v1947 = vrot.slane %v1946, 4
    %v1948 = vadd.f32 %v1946, %v1947
    %v1949 = vrot.slane %v1948, 2
    %v1950 = vadd.f32 %v1948, %v1949
    %v1951 = vrot.slane %v1950, 1
    %v1952 = vadd.f32 %v1950, %v1951
    %v1953 = vadd.f32 %v1927, %v1931
    %v1954 = vrot.slane %v1953, 4
    %v1955 = vadd.f32 %v1953, %v1954
    %v1956 = vrot.slane %v1955, 2
    %v1957 = vadd.f32 %v1955, %v1956
    %v1958 = vrot.slane %v1957, 1
    %v1959 = vadd.f32 %v1957, %v1958
    %v1960 = vadd.f32 %v1938, %v1945
    %v1961 = vadd.f32 %v1960, %v1952
    %v1962 = vadd.f32 %v1961, %v1959
    %1963 = vadd.xlane.f32.xlu0 %v1962
    %v1964 = vpop.xlane.xlu0 %1963
    %v1965 = vld [vmem:[#allocation4] sm:$0x1]
    %v1966 = vadd.f32 %v1964, %v1965
    %vm1967 = vcmask 0
    %1968 = vst.msk [vmem:[%s9] sm:$0x1] %vm1967, %v1966
    %v1969 = vmul.f32 %v1908, %v1916
    %v1970 = vmul.f32 %v1909, %v1917
    %v1971 = vmul.f32 %v1910, %v1918
    %v1972 = vmul.f32 %v1911, %v1919
    %v1973 = vmul.f32 %v1912, %v1920
    %v1974 = vmul.f32 %v1913, %v1921
    %v1975 = vmul.f32 %v1914, %v1922
    %v1976 = vmul.f32 %v1915, %v1923
    %v1977 = vadd.f32 %v1969, %v1973
    %v1978 = vrot.slane %v1977, 4
    %v1979 = vadd.f32 %v1977, %v1978
    %v1980 = vrot.slane %v1979, 2
    %v1981 = vadd.f32 %v1979, %v1980
    %v1982 = vrot.slane %v1981, 1
    %v1983 = vadd.f32 %v1981, %v1982
    %v1984 = vadd.f32 %v1970, %v1974
    %v1985 = vrot.slane %v1984, 4
    %v1986 = vadd.f32 %v1984, %v1985
    %v1987 = vrot.slane %v1986, 2
    %v1988 = vadd.f32 %v1986, %v1987
    %v1989 = vrot.slane %v1988, 1
    %v1990 = vadd.f32 %v1988, %v1989
    %v1991 = vadd.f32 %v1971, %v1975
    %v1992 = vrot.slane %v1991, 4
    %v1993 = vadd.f32 %v1991, %v1992
    %v1994 = vrot.slane %v1993, 2
    %v1995 = vadd.f32 %v1993, %v1994
    %v1996 = vrot.slane %v1995, 1
    %v1997 = vadd.f32 %v1995, %v1996
    %v1998 = vadd.f32 %v1972, %v1976
    %v1999 = vrot.slane %v1998, 4
    %v2000 = vadd.f32 %v1998, %v1999
    %v2001 = vrot.slane %v2000, 2
    %v2002 = vadd.f32 %v2000, %v2001
    %v2003 = vrot.slane %v2002, 1
    %v2004 = vadd.f32 %v2002, %v2003
    %v2005 = vadd.f32 %v1983, %v1990
    %v2006 = vadd.f32 %v2005, %v1997
    %v2007 = vadd.f32 %v2006, %v2004
    %2008 = vadd.xlane.f32.xlu0 %v2007
    %v2009 = vpop.xlane.xlu0 %2008
    %v2010 = vld [vmem:[#allocation4] sm:$0x1]
    %v2011 = vadd.f32 %v2009, %v2010
    %s2012 = scalar_lea.vmem %s9, 1
    %2013 = vst.msk [vmem:[%s2012] sm:$0x1] %vm1967, %v2011
    // Predicated region
    $region66: #{tpu_custom_call.1} parent=1 // pred_check
      _
    $region67: #{tpu_custom_call.1} parent=1 // pred_check_branch
      %2015 = sbr.rel (0) target = $region69
    $region68: #{tpu_custom_call.1} parent=1 // pred_region
      _
    $region69: #{tpu_custom_call.1} parent=1 // pred_fallthru
      _
    // Predicated region
    $region70: #{tpu_custom_call.1} parent=1 // pred_check
      _
    $region71: #{tpu_custom_call.1} parent=1 // pred_check_branch
      %2017 = sbr.rel (0) target = $region73
    $region72: #{tpu_custom_call.1} parent=1 // pred_region
      _
    $region73: #{tpu_custom_call.1} parent=1 // pred_fallthru
      _
    %2018 = vsyncpa [#allocation6], 1
    %2019 = vsyncpa [#allocation8], 1
    %2020 = vsyncpa [#allocation11], 1
    %2021 = vsyncpa [#allocation14], 1

// kernel: tpu_custom_call.1
$region0: #{tpu_custom_call.1}
  #allocation0 [shape = 'u32[]', space=smem, size = 0x4, offset = 0x4, fixed_abs, tag = 'smem constant byte address 0x4 - core index']
  #allocation1 [shape = 'u32[144,128]{1,0:T(1,128)}', space=vmem, size = 0x12000, scoped, tag = 'internal scratch']
  #allocation2 [shape = 'f32[40,128]{1,0:T(8,128)}', space=vmem, size = 0x5000, scoped, tag = 'scratch operand']
  #allocation3 [shape = 'f32[36,256]{1,0:T(8,128)}', space=vmem, size = 0xa000, scoped, tag = 'scratch operand']
  #allocation4 [shape = 'f32[1,1]{1,0:T(1,128)S(1)}', space=vmem, size = 0x200, scoped, tag = 'scoped memory for tpu_custom_call.1']
  %s0 = inlined_call_operand.vmem [shape: f32[32,15], index: 0, kind: input, shape index: {}]
  %s1 = inlined_call_operand.hbm [shape: f32[15,128], index: 1, kind: input, shape index: {}]
  %s2 = inlined_call_operand.hbm [shape: f32[16,128], index: 2, kind: input, shape index: {}]
  %s3 = inlined_call_operand.hbm [shape: f32[640,256], index: 3, kind: input, shape index: {}]
  %s4 = inlined_call_operand.hbm [shape: f32[1,256], index: 4, kind: input, shape index: {}]
  %s5 = inlined_call_operand.hbm [shape: f32[768,512], index: 5, kind: input, shape index: {}]
  %s6 = inlined_call_operand.hbm [shape: f32[1,512], index: 6, kind: input, shape index: {}]
  %s7 = inlined_call_operand.hbm [shape: f32[16,512], index: 7, kind: input, shape index: {}]
  %s8 = inlined_call_operand.<no memory space> [shape: f32[1,1], index: 8, kind: input, shape index: {}]
  %s9 = inlined_call_operand.vmem [shape: f32[2,1,1], index: 9, kind: output, shape index: {}]
  %s10 = sld [smem:[#allocation0]]
  $region74: #{tpu_custom_call.1} parent=0
    _
  %s12 = ssub.s32 1, %s10
  %s13 = scalar_select 0, %s12, %s10
  %v14 = vstv %s8
  %15 = vst [vmem:[#allocation4] sm:$0x1] %v14
  $region1: #{tpu_custom_call.1} parent=0
    #allocation5 [shape = 'u8[8192]{0}', space=vmem, size = 0x2000, scoped, tag = 'input window, operand 1, single buffered']
    #allocation6 [shape = 's32[1]{0}', space=sflag, size = 0x4, scoped, tag = 'scoped memory for tpu_custom_call.1']
    #allocation7 [shape = 'u8[8192]{0}', space=vmem, size = 0x2000, scoped, tag = 'input window, operand 2, single buffered']
    #allocation8 [shape = 's32[1]{0}', space=sflag, size = 0x4, scoped, tag = 'scoped memory for tpu_custom_call.1']
    #allocation9 [shape = 'u8[655360]{0}', space=vmem, size = 0xa0000, scoped, tag = 'input window, operand 3, single buffered']
    #allocation10 [shape = 'u8[1024]{0}', space=vmem, size = 0x400, scoped, tag = 'input window, operand 4, single buffered']
    #allocation11 [shape = 's32[1]{0}', space=sflag, size = 0x4, scoped, tag = 'scoped memory for tpu_custom_call.1']
    #allocation12 [shape = 'u8[1572864]{0}', space=vmem, size = 0x180000, scoped, tag = 'input window, operand 5, single buffered']
    #allocation13 [shape = 'u8[2048]{0}', space=vmem, size = 0x800, scoped, tag = 'input window, operand 6, single buffered']
    #allocation14 [shape = 's32[1]{0}', space=sflag, size = 0x4, scoped, tag = 'scoped memory for tpu_custom_call.1']
    #allocation15 [shape = 'u8[32768]{0}', space=vmem, size = 0x8000, scoped, tag = 'input window, operand 7, single buffered']
    %16 = vsyncpa [#allocation6], 0
    %17 = vsyncpa [#allocation8], 0
    %18 = vsyncpa [#allocation11], 0
    %19 = vsyncpa [#allocation14], 0
    // Predicated region
    $region2: #{tpu_custom_call.1} parent=1 // pred_check
      _
    $region3: #{tpu_custom_call.1} parent=1 // pred_check_branch
      %21 = sbr.rel (0) target = $region5
    $region4: #{tpu_custom_call.1} parent=1 // pred_region
      _
    $region5: #{tpu_custom_call.1} parent=1 // pred_fallthru
      _
    // Predicated region
    $region6: #{tpu_custom_call.1} parent=1 // pred_check
      _
    $region7: #{tpu_custom_call.1} parent=1 // pred_check_branch
      %23 = sbr.rel (0) target = $region9
    $region8: #{tpu_custom_call.1} parent=1 // pred_region
      %s25 = ssub.s32 256, 256
      %26 = vsyncadd [#allocation6], %s25
      %s27 = sshll.u32 [#allocation5], 4
      %s28 = int_to_ptr.vmem [resolvable:$true] %s27
      %33 = dma.hbm_to_vmem [thread:$0]  %s1, 256, %s28, [#allocation6], 128, 128, 8
    $region9: #{tpu_custom_call.1} parent=1 // pred_fallthru
      _
    // Predicated region
    $region10: #{tpu_custom_call.1} parent=1 // pred_check
      _
    $region11: #{tpu_custom_call.1} parent=1 // pred_check_branch
      %35 = sbr.rel (0) target = $region13
    $region12: #{tpu_custom_call.1} parent=1 // pred_region
      %s37 = ssub.s32 256, 256
      %38 = vsyncadd [#allocation8], %s37
      %s39 = sshll.u32 [#allocation7], 4
      %s40 = int_to_ptr.vmem [resolvable:$true] %s39
      %45 = dma.hbm_to_vmem [thread:$0]  %s2, 256, %s40, [#allocation8], 128, 128, 8
    $region13: #{tpu_custom_call.1} parent=1 // pred_fallthru
      _
    // Predicated region
    $region14: #{tpu_custom_call.1} parent=1 // pred_check
      _
    $region15: #{tpu_custom_call.1} parent=1 // pred_check_branch
      %47 = sbr.rel (0) target = $region17
    $region16: #{tpu_custom_call.1} parent=1 // pred_region
      %s49 = ssub.s32 20480, 20480
      %50 = vsyncadd [#allocation8], %s49
      %s51 = sshll.u32 [#allocation9], 4
      %s52 = int_to_ptr.vmem [resolvable:$true] %s51
      %57 = dma.hbm_to_vmem [thread:$0]  %s3, 20480, %s52, [#allocation8], 256, 256, 16
    $region17: #{tpu_custom_call.1} parent=1 // pred_fallthru
      _
    // Predicated region
    $region18: #{tpu_custom_call.1} parent=1 // pred_check
      _
    $region19: #{tpu_custom_call.1} parent=1 // pred_check_branch
      %59 = sbr.rel (0) target = $region21
    $region20: #{tpu_custom_call.1} parent=1 // pred_region
      %s61 = ssub.s32 32, 32
      %62 = vsyncadd [#allocation11], %s61
      %s64 = sshll.u32 [#allocation10], 4
      %s65 = int_to_ptr.vmem [resolvable:$true] %s64
      %67 = dma.hbm_to_vmem [thread:$0]  %s4, 32, %s65, [#allocation11]
    $region21: #{tpu_custom_call.1} parent=1 // pred_fallthru
      _
    // Predicated region
    $region22: #{tpu_custom_call.1} parent=1 // pred_check
      _
    $region23: #{tpu_custom_call.1} parent=1 // pred_check_branch
      %69 = sbr.rel (0) target = $region25
    $region24: #{tpu_custom_call.1} parent=1 // pred_region
      %s71 = ssub.s32 49152, 49152
      %72 = vsyncadd [#allocation11], %s71
      %s73 = sshll.u32 [#allocation12], 4
      %s74 = int_to_ptr.vmem [resolvable:$true] %s73
      %79 = dma.hbm_to_vmem [thread:$0]  %s5, 49152, %s74, [#allocation11], 512, 512, 32
    $region25: #{tpu_custom_call.1} parent=1 // pred_fallthru
      _
    // Predicated region
    $region26: #{tpu_custom_call.1} parent=1 // pred_check
      _
    $region27: #{tpu_custom_call.1} parent=1 // pred_check_branch
      %81 = sbr.rel (0) target = $region29
    $region28: #{tpu_custom_call.1} parent=1 // pred_region
      %s83 = ssub.s32 64, 64
      %84 = vsyncadd [#allocation14], %s83
      %s86 = sshll.u32 [#allocation13], 4
      %s87 = int_to_ptr.vmem [resolvable:$true] %s86
      %89 = dma.hbm_to_vmem [thread:$0]  %s6, 64, %s87, [#allocation14]
    $region29: #{tpu_custom_call.1} parent=1 // pred_fallthru
      _
    // Predicated region
    $region30: #{tpu_custom_call.1} parent=1 // pred_check
      _
    $region31: #{tpu_custom_call.1} parent=1 // pred_check_branch
      %91 = sbr.rel (0) target = $region33
    $region32: #{tpu_custom_call.1} parent=1 // pred_region
      %s93 = ssub.s32 1024, 1024
      %94 = vsyncadd [#allocation14], %s93
      %s95 = sshll.u32 [#allocation15], 4
      %s96 = int_to_ptr.vmem [resolvable:$true] %s95
      %101 = dma.hbm_to_vmem [thread:$0]  %s7, 1024, %s96, [#allocation14], 512, 512, 32
    $region33: #{tpu_custom_call.1} parent=1 // pred_fallthru
      _
    // Predicated region
    $region34: #{tpu_custom_call.1} parent=1 // pred_check
      _
    $region35: #{tpu_custom_call.1} parent=1 // pred_check_branch
      %103 = sbr.rel (0) target = $region37
    $region36: #{tpu_custom_call.1} parent=1 // pred_region
      _
    $region37: #{tpu_custom_call.1} parent=1 // pred_fallthru
      _
    // Predicated region
    $region38: #{tpu_custom_call.1} parent=1 // pred_check
      _
    $region39: #{tpu_custom_call.1} parent=1 // pred_check_branch
      %105 = sbr.rel (0) target = $region41
    $region40: #{tpu_custom_call.1} parent=1 // pred_region
      %106 = dma.done [#allocation6], 256
    $region41: #{tpu_custom_call.1} parent=1 // pred_fallthru
      _
    // Predicated region
    $region42: #{tpu_custom_call.1} parent=1 // pred_check
      _
    $region43: #{tpu_custom_call.1} parent=1 // pred_check_branch
      %108 = sbr.rel (0) target = $region45
    $region44: #{tpu_custom_call.1} parent=1 // pred_region
      %109 = dma.done [#allocation8], 256
    $region45: #{tpu_custom_call.1} parent=1 // pred_fallthru
      _
    // Predicated region
    $region46: #{tpu_custom_call.1} parent=1 // pred_check
      _
    $region47: #{tpu_custom_call.1} parent=1 // pred_check_branch
      %111 = sbr.rel (0) target = $region49
    $region48: #{tpu_custom_call.1} parent=1 // pred_region
      %112 = dma.done [#allocation8], 20480
    $region49: #{tpu_custom_call.1} parent=1 // pred_fallthru
      _
    // Predicated region
    $region50: #{tpu_custom_call.1} parent=1 // pred_check
      _
    $region51: #{tpu_custom_call.1} parent=1 // pred_check_branch
      %114 = sbr.rel (0) target = $region53
    $region52: #{tpu_custom_call.1} parent=1 // pred_region
      %115 = dma.done [#allocation11], 32
    $region53: #{tpu_custom_call.1} parent=1 // pred_fallthru
      _
    // Predicated region
    $region54: #{tpu_custom_call.1} parent=1 // pred_check
      _
    $region55: #{tpu_custom_call.1} parent=1 // pred_check_branch
      %117 = sbr.rel (0) target = $region57
    $region56: #{tpu_custom_call.1} parent=1 // pred_region
      %118 = dma.done [#allocation11], 49152
    $region57: #{tpu_custom_call.1} parent=1 // pred_fallthru
      _
    // Predicated region
    $region58: #{tpu_custom_call.1} parent=1 // pred_check
      _
    $region59: #{tpu_custom_call.1} parent=1 // pred_check_branch
      %120 = sbr.rel (0) target = $region61
    $region60: #{tpu_custom_call.1} parent=1 // pred_region
      %121 = dma.done [#allocation14], 64
    $region61: #{tpu_custom_call.1} parent=1 // pred_fallthru
      _
    // Predicated region
    $region62: #{tpu_custom_call.1} parent=1 // pred_check
      _
    $region63: #{tpu_custom_call.1} parent=1 // pred_check_branch
      %123 = sbr.rel (0) target = $region65
    $region64: #{tpu_custom_call.1} parent=1 // pred_region
      %124 = dma.done [#allocation14], 1024
    $region65: #{tpu_custom_call.1} parent=1 // pred_fallthru
      _
    %125 = vst [vmem:[#allocation2] sm:$0x3] 0.0
    %126 = vst [vmem:[#allocation2 + $0x12] sm:$0x3] 0.0
    %v127 = vlaneseq
    %vm128 = vcmp.ge.s32.totalorder %v127, 0
    %vm129 = vcmp.lt.s32.totalorder %v127, 256
    %vm130 = vmand %vm128, %vm129
    %131 = vst.msk [vmem:[#allocation3] ss:$8 sm:$0x3] %vm130, 0.0
    %132 = vst.msk [vmem:[#allocation3] ss:$8 sm:$0x0] %vm130, 0.0
    %s133 = scalar_lea.vmem [#allocation3], 33
    %134 = vst.msk [vmem:[%s133] ss:$8 sm:$0x3] %vm130, 0.0
    %135 = vst.msk [vmem:[%s133] ss:$8 sm:$0x0] %vm130, 0.0
    %136 = vst [vmem:[#allocation2 + $0x14] sm:$0x3] 0.0
    %137 = vst [vmem:[#allocation2 + $0x26] sm:$0x3] 0.0
    %s138 = scalar_lea.vmem [#allocation3], 34
    %139 = vst.msk [vmem:[%s138] ss:$8 sm:$0x3] %vm130, 0.0
    %140 = vst.msk [vmem:[%s138] ss:$8 sm:$0x0] %vm130, 0.0
    %s141 = scalar_lea.vmem [#allocation3], 67
    %142 = vst.msk [vmem:[%s141] ss:$8 sm:$0x3] %vm130, 0.0
    %143 = vst.msk [vmem:[%s141] ss:$8 sm:$0x0] %vm130, 0.0
    %v144 = vld [vmem:[%s0] sm:$0xff]
    %v145 = vld [vmem:[%s0 + $0x8] sm:$0xff]
    %v146 = vld [vmem:[%s0 + $0x10] sm:$0xff]
    %v147 = vld [vmem:[%s0 + $0x18] sm:$0xff]
    %v148 = vld [vmem:[#allocation5] sm:$0xff]
    %v149 = vld [vmem:[#allocation5 + $0x8] sm:$0x7f]
    %vm150 = vcmask 121856
    %v152 = vsel %vm150, %v144, 0
    %v155 = vsel %vm150, %v145, 0
    %v158 = vsel %vm150, %v146, 0
    %v161 = vsel %vm150, %v147, 0
    %vm163 = vcmask 1046528
    %v165 = vsel %vm163, %v149, 0
    %167 = vmatprep.subr.mxu0 0.0
    %168 = vmatpush1.msra.mxu0 0.0
    %169 = vmatprep.subr.mxu0 0.0
    %170 = vmatpush1.msra.mxu0 0.0
    %171 = vmatprep.subr.mxu0 0.0
    %172 = vmatpush1.msra.mxu0 0.0
    %173 = vmatprep.subr.mxu0 0.0
    %174 = vmatpush1.msra.mxu0 0.0
    %175 = vmatprep.subr.mxu0 0.0
    %176 = vmatpush1.msra.mxu0 0.0
    %177 = vmatprep.subr.mxu0 0.0
    %178 = vmatpush1.msra.mxu0 0.0
    %179 = vmatprep.subr.mxu0 0.0
    %180 = vmatpush1.msra.mxu0 0.0
    %181 = vmatprep.subr.mxu0 0.0
    %182 = vmatpush1.msra.mxu0 0.0
    %183 = vmatprep.subr.mxu0 0.0
    %184 = vmatpush1.msra.mxu0 0.0
    %185 = vmatprep.subr.mxu0 0.0
    %186 = vmatpush1.msra.mxu0 0.0
    %187 = vmatprep.subr.mxu0 0.0
    %188 = vmatpush1.msra.mxu0 0.0
    %189 = vmatprep.subr.mxu0 0.0
    %190 = vmatpush1.msra.mxu0 0.0
    %191 = vmatprep.subr.mxu0 0.0
    %192 = vmatpush1.msra.mxu0 0.0
    %193 = vmatprep.subr.mxu0 0.0
    %194 = vmatpush1.msra.mxu0 0.0
    %195 = vmatprep.subr.mxu0 0.0
    %196 = vmatpush1.msra.mxu0 %v165
    %197 = vmatprep.subr.mxu0 0.0
    %198 = vmatpush1.msra.mxu0 %v148
    %199 = vmatprep.subr.mxu0 0.0
    %200 = vmatpush2.msra.mxu0 0.0
    %201 = vmatprep.subr.mxu0 0.0
    %202 = vmatpush2.msra.mxu0 0.0
    %203 = vmatprep.subr.mxu0 0.0
    %204 = vmatpush2.msra.mxu0 0.0
    %205 = vmatprep.subr.mxu0 0.0
    %206 = vmatpush2.msra.mxu0 0.0
    %207 = vmatprep.subr.mxu0 0.0
    %208 = vmatpush2.msra.mxu0 0.0
    %209 = vmatprep.subr.mxu0 0.0
    %210 = vmatpush2.msra.mxu0 0.0
    %211 = vmatprep.subr.mxu0 0.0
    %212 = vmatpush2.msra.mxu0 0.0
    %213 = vmatprep.subr.mxu0 0.0
    %214 = vmatpush2.msra.mxu0 0.0
    %215 = vmatprep.subr.mxu0 0.0
    %216 = vmatpush2.msra.mxu0 0.0
    %217 = vmatprep.subr.mxu0 0.0
    %218 = vmatpush2.msra.mxu0 0.0
    %219 = vmatprep.subr.mxu0 0.0
    %220 = vmatpush2.msra.mxu0 0.0
    %221 = vmatprep.subr.mxu0 0.0
    %222 = vmatpush2.msra.mxu0 0.0
    %223 = vmatprep.subr.mxu0 0.0
    %224 = vmatpush2.msra.mxu0 0.0
    %225 = vmatprep.subr.mxu0 0.0
    %226 = vmatpush2.msra.mxu0 0.0
    %227 = vmatprep.subr.mxu0 0.0
    %228 = vmatpush2.msra.mxu0 0.0
    %229 = vmatprep.subr.mxu0 0.0
    %230 = vmatpush2.msra.mxu0 0.0
    %231 = vmatprep.mubr.f32.mxu0 0.0
    %232 = vmatmul.mubr.f32.gmra.mxu0 %v152
    %v233 = vpop.f32.mrf.mxu0
    %v234 = vadd.f32 0.0, %v233
    %v235 = vpop.f32.mrf.mxu0
    %236 = vmatprep.mubr.f32.mxu0 0.0
    %237 = vmatmul.mubr.f32.gmra.mxu0 %v155
    %v238 = vpop.f32.mrf.mxu0
    %v239 = vadd.f32 0.0, %v238
    %v240 = vpop.f32.mrf.mxu0
    %241 = vmatprep.mubr.f32.mxu0 0.0
    %242 = vmatmul.mubr.f32.gmra.mxu0 %v158
    %v243 = vpop.f32.mrf.mxu0
    %v244 = vadd.f32 0.0, %v243
    %v245 = vpop.f32.mrf.mxu0
    %246 = vmatprep.mubr.f32.mxu0 0.0
    %247 = vmatmul.mubr.f32.gmra.mxu0 %v161
    %v248 = vpop.f32.mrf.mxu0
    %v249 = vadd.f32 0.0, %v248
    %v250 = vpop.f32.mrf.mxu0
    %251 = vdwg.mxu0
    %v252 = vld [vmem:[#allocation7] sm:$0xff]
    %v253 = vld [vmem:[#allocation7 + $0x8] sm:$0xff]
    %v254 = vadd.f32 %v234, %v252
    %v255 = vadd.f32 %v239, %v253
    %vm256 = vcmp.ge.f32.partialorder %v254, 0.0
    %vm257 = vcmp.ge.f32.partialorder %v255, 0.0
    %v258 = vmul.f32 %v254, 0.2
    %v259 = vmul.f32 %v255, 0.2
    %v260 = vsel %vm256, %v254, %v258
    %v261 = vsel %vm257, %v255, %v259
    %262 = vst [vmem:[#allocation2 + $0x2] sm:$0xff] %v260
    %263 = vst [vmem:[#allocation2 + $0xa] sm:$0xff] %v261
    %v264 = vld [vmem:[#allocation7] sm:$0xff]
    %v265 = vld [vmem:[#allocation7 + $0x8] sm:$0xff]
    %v266 = vadd.f32 %v244, %v264
    %v267 = vadd.f32 %v249, %v265
    %vm268 = vcmp.ge.f32.partialorder %v266, 0.0
    %vm269 = vcmp.ge.f32.partialorder %v267, 0.0
    %v270 = vmul.f32 %v266, 0.2
    %v271 = vmul.f32 %v267, 0.2
    %v272 = vsel %vm268, %v266, %v270
    %v273 = vsel %vm269, %v267, %v271
    %274 = vst [vmem:[#allocation2 + $0x16] sm:$0xff] %v272
    %275 = vst [vmem:[#allocation2 + $0x1e] sm:$0xff] %v273
    %v276 = vld [vmem:[#allocation2] sm:$0xff]
    %v277 = vld [vmem:[#allocation2 + $0x8] sm:$0xff]
    %v278 = vld [vmem:[#allocation2 + $0x14] sm:$0xff]
    %v279 = vld [vmem:[#allocation2 + $0x1c] sm:$0xff]
    %v280 = vld [vmem:[#allocation2 + $0x1] sm:$0xff]
    %v281 = vld [vmem:[#allocation2 + $0x9] sm:$0xff]
    %v282 = vld [vmem:[#allocation2 + $0x15] sm:$0xff]
    %v283 = vld [vmem:[#allocation2 + $0x1d] sm:$0xff]
    %v284 = vld [vmem:[#allocation2 + $0x2] sm:$0xff]
    %v285 = vld [vmem:[#allocation2 + $0xa] sm:$0xff]
    %v286 = vld [vmem:[#allocation2 + $0x16] sm:$0xff]
    %v287 = vld [vmem:[#allocation2 + $0x1e] sm:$0xff]
    %v288 = vld [vmem:[#allocation2 + $0x3] sm:$0xff]
    %v289 = vld [vmem:[#allocation2 + $0xb] sm:$0xff]
    %v290 = vld [vmem:[#allocation2 + $0x17] sm:$0xff]
    %v291 = vld [vmem:[#allocation2 + $0x1f] sm:$0xff]
    %v292 = vld [vmem:[#allocation2 + $0x4] sm:$0xff]
    %v293 = vld [vmem:[#allocation2 + $0xc] sm:$0xff]
    %v294 = vld [vmem:[#allocation2 + $0x18] sm:$0xff]
    %v295 = vld [vmem:[#allocation2 + $0x20] sm:$0xff]
    %v296 = vld [vmem:[#allocation9] sm:$0xff]
    %v297 = vld [vmem:[#allocation9 + $0x8] sm:$0xff]
    %v298 = vld [vmem:[#allocation9 + $0x10] sm:$0xff]
    %v299 = vld [vmem:[#allocation9 + $0x18] sm:$0xff]
    %v300 = vld [vmem:[#allocation9 + $0x20] sm:$0xff]
    %v301 = vld [vmem:[#allocation9 + $0x28] sm:$0xff]
    %v302 = vld [vmem:[#allocation9 + $0x30] sm:$0xff]
    %v303 = vld [vmem:[#allocation9 + $0x38] sm:$0xff]
    %v304 = vld [vmem:[#allocation9 + $0x40] sm:$0xff]
    %v305 = vld [vmem:[#allocation9 + $0x48] sm:$0xff]
    %v306 = vld [vmem:[#allocation9 + $0x50] sm:$0xff]
    %v307 = vld [vmem:[#allocation9 + $0x58] sm:$0xff]
    %v308 = vld [vmem:[#allocation9 + $0x60] sm:$0xff]
    %v309 = vld [vmem:[#allocation9 + $0x68] sm:$0xff]
    %v310 = vld [vmem:[#allocation9 + $0x70] sm:$0xff]
    %v311 = vld [vmem:[#allocation9 + $0x78] sm:$0xff]
    %v312 = vld [vmem:[#allocation9 + $0x80] sm:$0xff]
    %v313 = vld [vmem:[#allocation9 + $0x88] sm:$0xff]
    %v314 = vld [vmem:[#allocation9 + $0x90] sm:$0xff]
    %v315 = vld [vmem:[#allocation9 + $0x98] sm:$0xff]
    %v316 = vld [vmem:[#allocation9 + $0xa0] sm:$0xff]
    %v317 = vld [vmem:[#allocation9 + $0xa8] sm:$0xff]
    %v318 = vld [vmem:[#allocation9 + $0xb0] sm:$0xff]
    %v319 = vld [vmem:[#allocation9 + $0xb8] sm:$0xff]
    %v320 = vld [vmem:[#allocation9 + $0xc0] sm:$0xff]
    %v321 = vld [vmem:[#allocation9 + $0xc8] sm:$0xff]
    %v322 = vld [vmem:[#allocation9 + $0xd0] sm:$0xff]
    %v323 = vld [vmem:[#allocation9 + $0xd8] sm:$0xff]
    %v324 = vld [vmem:[#allocation9 + $0xe0] sm:$0xff]
    %v325 = vld [vmem:[#allocation9 + $0xe8] sm:$0xff]
    %v326 = vld [vmem:[#allocation9 + $0xf0] sm:$0xff]
    %v327 = vld [vmem:[#allocation9 + $0xf8] sm:$0xff]
    %v328 = vld [vmem:[#allocation9 + $0x100] sm:$0xff]
    %v329 = vld [vmem:[#allocation9 + $0x108] sm:$0xff]
    %v330 = vld [vmem:[#allocation9 + $0x110] sm:$0xff]
    %v331 = vld [vmem:[#allocation9 + $0x118] sm:$0xff]
    %v332 = vld [vmem:[#allocation9 + $0x120] sm:$0xff]
    %v333 = vld [vmem:[#allocation9 + $0x128] sm:$0xff]
    %v334 = vld [vmem:[#allocation9 + $0x130] sm:$0xff]
    %v335 = vld [vmem:[#allocation9 + $0x138] sm:$0xff]
    %v336 = vld [vmem:[#allocation9 + $0x140] sm:$0xff]
    %v337 = vld [vmem:[#allocation9 + $0x148] sm:$0xff]
    %v338 = vld [vmem:[#allocation9 + $0x150] sm:$0xff]
    %v339 = vld [vmem:[#allocation9 + $0x158] sm:$0xff]
    %v340 = vld [vmem:[#allocation9 + $0x160] sm:$0xff]
    %v341 = vld [vmem:[#allocation9 + $0x168] sm:$0xff]
    %v342 = vld [vmem:[#allocation9 + $0x170] sm:$0xff]
    %v343 = vld [vmem:[#allocation9 + $0x178] sm:$0xff]
    %v344 = vld [vmem:[#allocation9 + $0x180] sm:$0xff]
    %v345 = vld [vmem:[#allocation9 + $0x188] sm:$0xff]
    %v346 = vld [vmem:[#allocation9 + $0x190] sm:$0xff]
    %v347 = vld [vmem:[#allocation9 + $0x198] sm:$0xff]
    %v348 = vld [vmem:[#allocation9 + $0x1a0] sm:$0xff]
    %v349 = vld [vmem:[#allocation9 + $0x1a8] sm:$0xff]
    %v350 = vld [vmem:[#allocation9 + $0x1b0] sm:$0xff]
    %v351 = vld [vmem:[#allocation9 + $0x1b8] sm:$0xff]
    %v352 = vld [vmem:[#allocation9 + $0x1c0] sm:$0xff]
    %v353 = vld [vmem:[#allocation9 + $0x1c8] sm:$0xff]
    %v354 = vld [vmem:[#allocation9 + $0x1d0] sm:$0xff]
    %v355 = vld [vmem:[#allocation9 + $0x1d8] sm:$0xff]
    %v356 = vld [vmem:[#allocation9 + $0x1e0] sm:$0xff]
    %v357 = vld [vmem:[#allocation9 + $0x1e8] sm:$0xff]
    %v358 = vld [vmem:[#allocation9 + $0x1f0] sm:$0xff]
    %v359 = vld [vmem:[#allocation9 + $0x1f8] sm:$0xff]
    %v360 = vld [vmem:[#allocation9 + $0x200] sm:$0xff]
    %v361 = vld [vmem:[#allocation9 + $0x208] sm:$0xff]
    %v362 = vld [vmem:[#allocation9 + $0x210] sm:$0xff]
    %v363 = vld [vmem:[#allocation9 + $0x218] sm:$0xff]
    %v364 = vld [vmem:[#allocation9 + $0x220] sm:$0xff]
    %v365 = vld [vmem:[#allocation9 + $0x228] sm:$0xff]
    %v366 = vld [vmem:[#allocation9 + $0x230] sm:$0xff]
    %v367 = vld [vmem:[#allocation9 + $0x238] sm:$0xff]
    %v368 = vld [vmem:[#allocation9 + $0x240] sm:$0xff]
    %v369 = vld [vmem:[#allocation9 + $0x248] sm:$0xff]
    %v370 = vld [vmem:[#allocation9 + $0x250] sm:$0xff]
    %v371 = vld [vmem:[#allocation9 + $0x258] sm:$0xff]
    %v372 = vld [vmem:[#allocation9 + $0x260] sm:$0xff]
    %v373 = vld [vmem:[#allocation9 + $0x268] sm:$0xff]
    %v374 = vld [vmem:[#allocation9 + $0x270] sm:$0xff]
    %v375 = vld [vmem:[#allocation9 + $0x278] sm:$0xff]
    %v376 = vld [vmem:[#allocation9 + $0x280] sm:$0xff]
    %v377 = vld [vmem:[#allocation9 + $0x288] sm:$0xff]
    %v378 = vld [vmem:[#allocation9 + $0x290] sm:$0xff]
    %v379 = vld [vmem:[#allocation9 + $0x298] sm:$0xff]
    %v380 = vld [vmem:[#allocation9 + $0x2a0] sm:$0xff]
    %v381 = vld [vmem:[#allocation9 + $0x2a8] sm:$0xff]
    %v382 = vld [vmem:[#allocation9 + $0x2b0] sm:$0xff]
    %v383 = vld [vmem:[#allocation9 + $0x2b8] sm:$0xff]
    %v384 = vld [vmem:[#allocation9 + $0x2c0] sm:$0xff]
    %v385 = vld [vmem:[#allocation9 + $0x2c8] sm:$0xff]
    %v386 = vld [vmem:[#allocation9 + $0x2d0] sm:$0xff]
    %v387 = vld [vmem:[#allocation9 + $0x2d8] sm:$0xff]
    %v388 = vld [vmem:[#allocation9 + $0x2e0] sm:$0xff]
    %v389 = vld [vmem:[#allocation9 + $0x2e8] sm:$0xff]
    %v390 = vld [vmem:[#allocation9 + $0x2f0] sm:$0xff]
    %v391 = vld [vmem:[#allocation9 + $0x2f8] sm:$0xff]
    %v392 = vld [vmem:[#allocation9 + $0x300] sm:$0xff]
    %v393 = vld [vmem:[#allocation9 + $0x308] sm:$0xff]
    %v394 = vld [vmem:[#allocation9 + $0x310] sm:$0xff]
    %v395 = vld [vmem:[#allocation9 + $0x318] sm:$0xff]
    %v396 = vld [vmem:[#allocation9 + $0x320] sm:$0xff]
    %v397 = vld [vmem:[#allocation9 + $0x328] sm:$0xff]
    %v398 = vld [vmem:[#allocation9 + $0x330] sm:$0xff]
    %v399 = vld [vmem:[#allocation9 + $0x338] sm:$0xff]
    %v400 = vld [vmem:[#allocation9 + $0x340] sm:$0xff]
    %v401 = vld [vmem:[#allocation9 + $0x348] sm:$0xff]
    %v402 = vld [vmem:[#allocation9 + $0x350] sm:$0xff]
    %v403 = vld [vmem:[#allocation9 + $0x358] sm:$0xff]
    %v404 = vld [vmem:[#allocation9 + $0x360] sm:$0xff]
    %v405 = vld [vmem:[#allocation9 + $0x368] sm:$0xff]
    %v406 = vld [vmem:[#allocation9 + $0x370] sm:$0xff]
    %v407 = vld [vmem:[#allocation9 + $0x378] sm:$0xff]
    %v408 = vld [vmem:[#allocation9 + $0x380] sm:$0xff]
    %v409 = vld [vmem:[#allocation9 + $0x388] sm:$0xff]
    %v410 = vld [vmem:[#allocation9 + $0x390] sm:$0xff]
    %v411 = vld [vmem:[#allocation9 + $0x398] sm:$0xff]
    %v412 = vld [vmem:[#allocation9 + $0x3a0] sm:$0xff]
    %v413 = vld [vmem:[#allocation9 + $0x3a8] sm:$0xff]
    %v414 = vld [vmem:[#allocation9 + $0x3b0] sm:$0xff]
    %v415 = vld [vmem:[#allocation9 + $0x3b8] sm:$0xff]
    %v416 = vld [vmem:[#allocation9 + $0x3c0] sm:$0xff]
    %v417 = vld [vmem:[#allocation9 + $0x3c8] sm:$0xff]
    %v418 = vld [vmem:[#allocation9 + $0x3d0] sm:$0xff]
    %v419 = vld [vmem:[#allocation9 + $0x3d8] sm:$0xff]
    %v420 = vld [vmem:[#allocation9 + $0x3e0] sm:$0xff]
    %v421 = vld [vmem:[#allocation9 + $0x3e8] sm:$0xff]
    %v422 = vld [vmem:[#allocation9 + $0x3f0] sm:$0xff]
    %v423 = vld [vmem:[#allocation9 + $0x3f8] sm:$0xff]
    %v424 = vld [vmem:[#allocation9 + $0x400] sm:$0xff]
    %v425 = vld [vmem:[#allocation9 + $0x408] sm:$0xff]
    %v426 = vld [vmem:[#allocation9 + $0x410] sm:$0xff]
    %v427 = vld [vmem:[#allocation9 + $0x418] sm:$0xff]
    %v428 = vld [vmem:[#allocation9 + $0x420] sm:$0xff]
    %v429 = vld [vmem:[#allocation9 + $0x428] sm:$0xff]
    %v430 = vld [vmem:[#allocation9 + $0x430] sm:$0xff]
    %v431 = vld [vmem:[#allocation9 + $0x438] sm:$0xff]
    %v432 = vld [vmem:[#allocation9 + $0x440] sm:$0xff]
    %v433 = vld [vmem:[#allocation9 + $0x448] sm:$0xff]
    %v434 = vld [vmem:[#allocation9 + $0x450] sm:$0xff]
    %v435 = vld [vmem:[#allocation9 + $0x458] sm:$0xff]
    %v436 = vld [vmem:[#allocation9 + $0x460] sm:$0xff]
    %v437 = vld [vmem:[#allocation9 + $0x468] sm:$0xff]
    %v438 = vld [vmem:[#allocation9 + $0x470] sm:$0xff]
    %v439 = vld [vmem:[#allocation9 + $0x478] sm:$0xff]
    %v440 = vld [vmem:[#allocation9 + $0x480] sm:$0xff]
    %v441 = vld [vmem:[#allocation9 + $0x488] sm:$0xff]
    %v442 = vld [vmem:[#allocation9 + $0x490] sm:$0xff]
    %v443 = vld [vmem:[#allocation9 + $0x498] sm:$0xff]
    %v444 = vld [vmem:[#allocation9 + $0x4a0] sm:$0xff]
    %v445 = vld [vmem:[#allocation9 + $0x4a8] sm:$0xff]
    %v446 = vld [vmem:[#allocation9 + $0x4b0] sm:$0xff]
    %v447 = vld [vmem:[#allocation9 + $0x4b8] sm:$0xff]
    %v448 = vld [vmem:[#allocation9 + $0x4c0] sm:$0xff]
    %v449 = vld [vmem:[#allocation9 + $0x4c8] sm:$0xff]
    %v450 = vld [vmem:[#allocation9 + $0x4d0] sm:$0xff]
    %v451 = vld [vmem:[#allocation9 + $0x4d8] sm:$0xff]
    %v452 = vld [vmem:[#allocation9 + $0x4e0] sm:$0xff]
    %v453 = vld [vmem:[#allocation9 + $0x4e8] sm:$0xff]
    %v454 = vld [vmem:[#allocation9 + $0x4f0] sm:$0xff]
    %v455 = vld [vmem:[#allocation9 + $0x4f8] sm:$0xff]
    %v456 = vld [vmem:[#allocation10] sm:$0x3]
    %v458 = vlaneseq
    %v459 = vshrl.u32 %v458, 7
    %v460 = vsub.s32 0, %v459
    %v461 = vrot.slane %v456, %v460
    %v462 = vlaneseq
    %v463 = vshrl.u32 %v462, 7
    %v464 = vsub.s32 1, %v463
    %v465 = vrot.slane %v456, %v464
    %468 = vmatprep.subr.mxu0 %v327
    %469 = vmatpush1.msra.mxu0 %v326
    %470 = vmatprep.subr.mxu0 %v325
    %471 = vmatpush1.msra.mxu0 %v324
    %472 = vmatprep.subr.mxu0 %v323
    %473 = vmatpush1.msra.mxu0 %v322
    %474 = vmatprep.subr.mxu0 %v321
    %475 = vmatpush1.msra.mxu0 %v320
    %476 = vmatprep.subr.mxu0 %v319
    %477 = vmatpush1.msra.mxu0 %v318
    %478 = vmatprep.subr.mxu0 %v317
    %479 = vmatpush1.msra.mxu0 %v316
    %480 = vmatprep.subr.mxu0 %v315
    %481 = vmatpush1.msra.mxu0 %v314
    %482 = vmatprep.subr.mxu0 %v313
    %483 = vmatpush1.msra.mxu0 %v312
    %484 = vmatprep.subr.mxu0 %v311
    %485 = vmatpush1.msra.mxu0 %v310
    %486 = vmatprep.subr.mxu0 %v309
    %487 = vmatpush1.msra.mxu0 %v308
    %488 = vmatprep.subr.mxu0 %v307
    %489 = vmatpush1.msra.mxu0 %v306
    %490 = vmatprep.subr.mxu0 %v305
    %491 = vmatpush1.msra.mxu0 %v304
    %492 = vmatprep.subr.mxu0 %v303
    %493 = vmatpush1.msra.mxu0 %v302
    %494 = vmatprep.subr.mxu0 %v301
    %495 = vmatpush1.msra.mxu0 %v300
    %496 = vmatprep.subr.mxu0 %v299
    %497 = vmatpush1.msra.mxu0 %v298
    %498 = vmatprep.subr.mxu0 %v297
    %499 = vmatpush1.msra.mxu0 %v296
    %500 = vmatprep.subr.mxu0 %v359
    %501 = vmatpush2.msra.mxu0 %v358
    %502 = vmatprep.subr.mxu0 %v357
    %503 = vmatpush2.msra.mxu0 %v356
    %504 = vmatprep.subr.mxu0 %v355
    %505 = vmatpush2.msra.mxu0 %v354
    %506 = vmatprep.subr.mxu0 %v353
    %507 = vmatpush2.msra.mxu0 %v352
    %508 = vmatprep.subr.mxu0 %v351
    %509 = vmatpush2.msra.mxu0 %v350
    %510 = vmatprep.subr.mxu0 %v349
    %511 = vmatpush2.msra.mxu0 %v348
    %512 = vmatprep.subr.mxu0 %v347
    %513 = vmatpush2.msra.mxu0 %v346
    %514 = vmatprep.subr.mxu0 %v345
    %515 = vmatpush2.msra.mxu0 %v344
    %516 = vmatprep.subr.mxu0 %v343
    %517 = vmatpush2.msra.mxu0 %v342
    %518 = vmatprep.subr.mxu0 %v341
    %519 = vmatpush2.msra.mxu0 %v340
    %520 = vmatprep.subr.mxu0 %v339
    %521 = vmatpush2.msra.mxu0 %v338
    %522 = vmatprep.subr.mxu0 %v337
    %523 = vmatpush2.msra.mxu0 %v336
    %524 = vmatprep.subr.mxu0 %v335
    %525 = vmatpush2.msra.mxu0 %v334
    %526 = vmatprep.subr.mxu0 %v333
    %527 = vmatpush2.msra.mxu0 %v332
    %528 = vmatprep.subr.mxu0 %v331
    %529 = vmatpush2.msra.mxu0 %v330
    %530 = vmatprep.subr.mxu0 %v329
    %531 = vmatpush2.msra.mxu0 %v328
    %532 = vmatprep.mubr.f32.mxu0 %v280
    %533 = vmatmul.mubr.f32.gmra.mxu0 %v276
    %v534 = vpop.f32.mrf.mxu0
    %v535 = vadd.f32 %v461, %v534
    %v536 = vpop.f32.mrf.mxu0
    %v537 = vadd.f32 %v465, %v536
    %538 = vmatprep.mubr.f32.mxu0 %v281
    %539 = vmatmul.mubr.f32.gmra.mxu0 %v277
    %v540 = vpop.f32.mrf.mxu0
    %v541 = vadd.f32 %v461, %v540
    %v542 = vpop.f32.mrf.mxu0
    %v543 = vadd.f32 %v465, %v542
    %544 = vmatprep.mubr.f32.mxu0 %v282
    %545 = vmatmul.mubr.f32.gmra.mxu0 %v278
    %v546 = vpop.f32.mrf.mxu0
    %v547 = vadd.f32 %v461, %v546
    %v548 = vpop.f32.mrf.mxu0
    %v549 = vadd.f32 %v465, %v548
    %550 = vmatprep.mubr.f32.mxu0 %v283
    %551 = vmatmul.mubr.f32.gmra.mxu0 %v279
    %v552 = vpop.f32.mrf.mxu0
    %v553 = vadd.f32 %v461, %v552
    %v554 = vpop.f32.mrf.mxu0
    %v555 = vadd.f32 %v465, %v554
    %556 = vdwg.mxu0
    %557 = vmatprep.subr.mxu0 %v391
    %558 = vmatpush1.msra.mxu0 %v390
    %559 = vmatprep.subr.mxu0 %v389
    %560 = vmatpush1.msra.mxu0 %v388
    %561 = vmatprep.subr.mxu0 %v387
    %562 = vmatpush1.msra.mxu0 %v386
    %563 = vmatprep.subr.mxu0 %v385
    %564 = vmatpush1.msra.mxu0 %v384
    %565 = vmatprep.subr.mxu0 %v383
    %566 = vmatpush1.msra.mxu0 %v382
    %567 = vmatprep.subr.mxu0 %v381
    %568 = vmatpush1.msra.mxu0 %v380
    %569 = vmatprep.subr.mxu0 %v379
    %570 = vmatpush1.msra.mxu0 %v378
    %571 = vmatprep.subr.mxu0 %v377
    %572 = vmatpush1.msra.mxu0 %v376
    %573 = vmatprep.subr.mxu0 %v375
    %574 = vmatpush1.msra.mxu0 %v374
    %575 = vmatprep.subr.mxu0 %v373
    %576 = vmatpush1.msra.mxu0 %v372
    %577 = vmatprep.subr.mxu0 %v371
    %578 = vmatpush1.msra.mxu0 %v370
    %579 = vmatprep.subr.mxu0 %v369
    %580 = vmatpush1.msra.mxu0 %v368
    %581 = vmatprep.subr.mxu0 %v367
    %582 = vmatpush1.msra.mxu0 %v366
    %583 = vmatprep.subr.mxu0 %v365
    %584 = vmatpush1.msra.mxu0 %v364
    %585 = vmatprep.subr.mxu0 %v363
    %586 = vmatpush1.msra.mxu0 %v362
    %587 = vmatprep.subr.mxu0 %v361
    %588 = vmatpush1.msra.mxu0 %v360
    %589 = vmatprep.subr.mxu0 %v423
    %590 = vmatpush2.msra.mxu0 %v422
    %591 = vmatprep.subr.mxu0 %v421
    %592 = vmatpush2.msra.mxu0 %v420
    %593 = vmatprep.subr.mxu0 %v419
    %594 = vmatpush2.msra.mxu0 %v418
    %595 = vmatprep.subr.mxu0 %v417
    %596 = vmatpush2.msra.mxu0 %v416
    %597 = vmatprep.subr.mxu0 %v415
    %598 = vmatpush2.msra.mxu0 %v414
    %599 = vmatprep.subr.mxu0 %v413
    %600 = vmatpush2.msra.mxu0 %v412
    %601 = vmatprep.subr.mxu0 %v411
    %602 = vmatpush2.msra.mxu0 %v410
    %603 = vmatprep.subr.mxu0 %v409
    %604 = vmatpush2.msra.mxu0 %v408
    %605 = vmatprep.subr.mxu0 %v407
    %606 = vmatpush2.msra.mxu0 %v406
    %607 = vmatprep.subr.mxu0 %v405
    %608 = vmatpush2.msra.mxu0 %v404
    %609 = vmatprep.subr.mxu0 %v403
    %610 = vmatpush2.msra.mxu0 %v402
    %611 = vmatprep.subr.mxu0 %v401
    %612 = vmatpush2.msra.mxu0 %v400
    %613 = vmatprep.subr.mxu0 %v399
    %614 = vmatpush2.msra.mxu0 %v398
    %615 = vmatprep.subr.mxu0 %v397
    %616 = vmatpush2.msra.mxu0 %v396
    %617 = vmatprep.subr.mxu0 %v395
    %618 = vmatpush2.msra.mxu0 %v394
    %619 = vmatprep.subr.mxu0 %v393
    %620 = vmatpush2.msra.mxu0 %v392
    %621 = vmatprep.mubr.f32.mxu0 %v288
    %622 = vmatmul.mubr.f32.gmra.mxu0 %v284
    %v623 = vpop.f32.mrf.mxu0
    %v624 = vadd.f32 %v535, %v623
    %v625 = vpop.f32.mrf.mxu0
    %v626 = vadd.f32 %v537, %v625
    %627 = vmatprep.mubr.f32.mxu0 %v289
    %628 = vmatmul.mubr.f32.gmra.mxu0 %v285
    %v629 = vpop.f32.mrf.mxu0
    %v630 = vadd.f32 %v541, %v629
    %v631 = vpop.f32.mrf.mxu0
    %v632 = vadd.f32 %v543, %v631
    %633 = vmatprep.mubr.f32.mxu0 %v290
    %634 = vmatmul.mubr.f32.gmra.mxu0 %v286
    %v635 = vpop.f32.mrf.mxu0
    %v636 = vadd.f32 %v547, %v635
    %v637 = vpop.f32.mrf.mxu0
    %v638 = vadd.f32 %v549, %v637
    %639 = vmatprep.mubr.f32.mxu0 %v291
    %640 = vmatmul.mubr.f32.gmra.mxu0 %v287
    %v641 = vpop.f32.mrf.mxu0
    %v642 = vadd.f32 %v553, %v641
    %v643 = vpop.f32.mrf.mxu0
    %v644 = vadd.f32 %v555, %v643
    %645 = vdwg.mxu0
    %646 = vmatprep.subr.mxu0 %v455
    %647 = vmatpush1.msra.mxu0 %v454
    %648 = vmatprep.subr.mxu0 %v453
    %649 = vmatpush1.msra.mxu0 %v452
    %650 = vmatprep.subr.mxu0 %v451
    %651 = vmatpush1.msra.mxu0 %v450
    %652 = vmatprep.subr.mxu0 %v449
    %653 = vmatpush1.msra.mxu0 %v448
    %654 = vmatprep.subr.mxu0 %v447
    %655 = vmatpush1.msra.mxu0 %v446
    %656 = vmatprep.subr.mxu0 %v445
    %657 = vmatpush1.msra.mxu0 %v444
    %658 = vmatprep.subr.mxu0 %v443
    %659 = vmatpush1.msra.mxu0 %v442
    %660 = vmatprep.subr.mxu0 %v441
    %661 = vmatpush1.msra.mxu0 %v440
    %662 = vmatprep.subr.mxu0 %v439
    %663 = vmatpush1.msra.mxu0 %v438
    %664 = vmatprep.subr.mxu0 %v437
    %665 = vmatpush1.msra.mxu0 %v436
    %666 = vmatprep.subr.mxu0 %v435
    %667 = vmatpush1.msra.mxu0 %v434
    %668 = vmatprep.subr.mxu0 %v433
    %669 = vmatpush1.msra.mxu0 %v432
    %670 = vmatprep.subr.mxu0 %v431
    %671 = vmatpush1.msra.mxu0 %v430
    %672 = vmatprep.subr.mxu0 %v429
    %673 = vmatpush1.msra.mxu0 %v428
    %674 = vmatprep.subr.mxu0 %v427
    %675 = vmatpush1.msra.mxu0 %v426
    %676 = vmatprep.subr.mxu0 %v425
    %677 = vmatpush1.msra.mxu0 %v424
    %678 = vmatprep.subr.mxu0 0.0
    %679 = vmatpush2.msra.mxu0 0.0
    %680 = vmatprep.subr.mxu0 0.0
    %681 = vmatpush2.msra.mxu0 0.0
    %682 = vmatprep.subr.mxu0 0.0
    %683 = vmatpush2.msra.mxu0 0.0
    %684 = vmatprep.subr.mxu0 0.0
    %685 = vmatpush2.msra.mxu0 0.0
    %686 = vmatprep.subr.mxu0 0.0
    %687 = vmatpush2.msra.mxu0 0.0
    %688 = vmatprep.subr.mxu0 0.0
    %689 = vmatpush2.msra.mxu0 0.0
    %690 = vmatprep.subr.mxu0 0.0
    %691 = vmatpush2.msra.mxu0 0.0
    %692 = vmatprep.subr.mxu0 0.0
    %693 = vmatpush2.msra.mxu0 0.0
    %694 = vmatprep.subr.mxu0 0.0
    %695 = vmatpush2.msra.mxu0 0.0
    %696 = vmatprep.subr.mxu0 0.0
    %697 = vmatpush2.msra.mxu0 0.0
    %698 = vmatprep.subr.mxu0 0.0
    %699 = vmatpush2.msra.mxu0 0.0
    %700 = vmatprep.subr.mxu0 0.0
    %701 = vmatpush2.msra.mxu0 0.0
    %702 = vmatprep.subr.mxu0 0.0
    %703 = vmatpush2.msra.mxu0 0.0
    %704 = vmatprep.subr.mxu0 0.0
    %705 = vmatpush2.msra.mxu0 0.0
    %706 = vmatprep.subr.mxu0 0.0
    %707 = vmatpush2.msra.mxu0 0.0
    %708 = vmatprep.subr.mxu0 0.0
    %709 = vmatpush2.msra.mxu0 0.0
    %710 = vmatprep.mubr.f32.mxu0 0.0
    %711 = vmatmul.mubr.f32.gmra.mxu0 %v292
    %v712 = vpop.f32.mrf.mxu0
    %v713 = vadd.f32 %v624, %v712
    %v714 = vpop.f32.mrf.mxu0
    %v715 = vadd.f32 %v626, %v714
    %716 = vmatprep.mubr.f32.mxu0 0.0
    %717 = vmatmul.mubr.f32.gmra.mxu0 %v293
    %v718 = vpop.f32.mrf.mxu0
    %v719 = vadd.f32 %v630, %v718
    %v720 = vpop.f32.mrf.mxu0
    %v721 = vadd.f32 %v632, %v720
    %722 = vmatprep.mubr.f32.mxu0 0.0
    %723 = vmatmul.mubr.f32.gmra.mxu0 %v294
    %v724 = vpop.f32.mrf.mxu0
    %v725 = vadd.f32 %v636, %v724
    %v726 = vpop.f32.mrf.mxu0
    %v727 = vadd.f32 %v638, %v726
    %728 = vmatprep.mubr.f32.mxu0 0.0
    %729 = vmatmul.mubr.f32.gmra.mxu0 %v295
    %v730 = vpop.f32.mrf.mxu0
    %v731 = vadd.f32 %v642, %v730
    %v732 = vpop.f32.mrf.mxu0
    %v733 = vadd.f32 %v644, %v732
    %734 = vdwg.mxu0
    %vm735 = vcmp.ge.f32.partialorder %v713, 0.0
    %vm736 = vcmp.ge.f32.partialorder %v715, 0.0
    %vm737 = vcmp.ge.f32.partialorder %v719, 0.0
    %vm738 = vcmp.ge.f32.partialorder %v721, 0.0
    %vm739 = vcmp.ge.f32.partialorder %v725, 0.0
    %vm740 = vcmp.ge.f32.partialorder %v727, 0.0
    %vm741 = vcmp.ge.f32.partialorder %v731, 0.0
    %vm742 = vcmp.ge.f32.partialorder %v733, 0.0
    %v743 = vmul.f32 %v713, 0.2
    %v744 = vmul.f32 %v715, 0.2
    %v745 = vmul.f32 %v719, 0.2
    %v746 = vmul.f32 %v721, 0.2
    %v747 = vmul.f32 %v725, 0.2
    %v748 = vmul.f32 %v727, 0.2
    %v749 = vmul.f32 %v731, 0.2
    %v750 = vmul.f32 %v733, 0.2
    %v751 = vsel %vm735, %v713, %v743
    %v752 = vsel %vm736, %v715, %v744
    %v753 = vsel %vm737, %v719, %v745
    %v754 = vsel %vm738, %v721, %v746
    %v755 = vsel %vm739, %v725, %v747
    %v756 = vsel %vm740, %v727, %v748
    %v757 = vsel %vm741, %v731, %v749
    %v758 = vsel %vm742, %v733, %v750
    %vm763 = vcmask 1040384
    %v764 = vrot.slane %v751, 7
    %v765 = vrot.slane %v752, 7
    %v766 = vrot.slane %v753, 7
    %v767 = vsel %vm763, %v764, %v766
    %v768 = vrot.slane %v754, 7
    %v769 = vsel %vm763, %v765, %v768
    %776 = vst [vmem:[#allocation3] sm:$0xfe] %v764
    %777 = vst [vmem:[#allocation3 + $0x8] sm:$0xfe] %v765
    %778 = vst [vmem:[#allocation3 + $0x10] sm:$0xff] %v767
    %779 = vst [vmem:[#allocation3 + $0x18] sm:$0xff] %v769
    %780 = vst [vmem:[#allocation3 + $0x20] sm:$0x1] %v766
    %781 = vst [vmem:[#allocation3 + $0x28] sm:$0x1] %v768
    %vm786 = vcmask 1042432
    %v787 = vrot.slane %v755, 5
    %v788 = vrot.slane %v756, 5
    %v789 = vrot.slane %v757, 5
    %v790 = vsel %vm786, %v787, %v789
    %v791 = vrot.slane %v758, 5
    %v792 = vsel %vm786, %v788, %v791
    %799 = vst [vmem:[#allocation3 + $0x20] sm:$0xf8] %v787
    %800 = vst [vmem:[#allocation3 + $0x28] sm:$0xf8] %v788
    %801 = vst [vmem:[#allocation3 + $0x30] sm:$0xff] %v790
    %802 = vst [vmem:[#allocation3 + $0x38] sm:$0xff] %v792
    %803 = vst [vmem:[#allocation3 + $0x40] sm:$0x7] %v789
    %804 = vst [vmem:[#allocation3 + $0x48] sm:$0x7] %v791
    %v805 = vld [vmem:[#allocation3] sm:$0xff]
    %v806 = vld [vmem:[#allocation3 + $0x8] sm:$0xff]
    %v807 = vld [vmem:[#allocation3 + $0x10] sm:$0xff]
    %v808 = vld [vmem:[#allocation3 + $0x18] sm:$0xff]
    %v809 = vld [vmem:[#allocation3 + $0x20] sm:$0xfc]
    %v810 = vld [vmem:[#allocation3 + $0x28] sm:$0xfc]
    %v811 = vld [vmem:[#allocation3 + $0x30] sm:$0xff]
    %v812 = vld [vmem:[#allocation3 + $0x38] sm:$0xff]
    %v813 = vld [vmem:[#allocation3 + $0x40] sm:$0x3]
    %v814 = vld [vmem:[#allocation3 + $0x48] sm:$0x3]
    %vm821 = vcmask 1045504
    %v822 = vrot.slane %v809, 2
    %v823 = vrot.slane %v811, 2
    %v824 = vsel %vm821, %v822, %v823
    %v825 = vrot.slane %v810, 2
    %v826 = vrot.slane %v812, 2
    %v827 = vsel %vm821, %v825, %v826
    %v828 = vrot.slane %v813, 2
    %v829 = vsel %vm821, %v823, %v828
    %v830 = vrot.slane %v814, 2
    %v831 = vsel %vm821, %v826, %v830
    %v836 = vld [vmem:[#allocation3] sm:$0xfe]
    %v837 = vld [vmem:[#allocation3 + $0x8] sm:$0xfe]
    %v838 = vld [vmem:[#allocation3 + $0x20] sm:$0x1]
    %v839 = vld [vmem:[#allocation3 + $0x28] sm:$0x1]
    %v840 = vld [vmem:[#allocation3 + $0x20] sm:$0xf8]
    %v841 = vld [vmem:[#allocation3 + $0x28] sm:$0xf8]
    %v842 = vld [vmem:[#allocation3 + $0x40] sm:$0x7]
    %v843 = vld [vmem:[#allocation3 + $0x48] sm:$0x7]
    %v850 = vrot.slane %v836, 1
    %v851 = vrot.slane %v807, 1
    %v852 = vsel %vm163, %v850, %v851
    %v853 = vrot.slane %v837, 1
    %v854 = vrot.slane %v808, 1
    %v855 = vsel %vm163, %v853, %v854
    %v856 = vrot.slane %v838, 1
    %v857 = vsel %vm163, %v851, %v856
    %v858 = vrot.slane %v839, 1
    %v859 = vsel %vm163, %v854, %v858
    %vm868 = vcmask 1044480
    %v869 = vrot.slane %v840, 3
    %v870 = vrot.slane %v811, 3
    %v871 = vsel %vm868, %v869, %v870
    %v872 = vrot.slane %v841, 3
    %v873 = vrot.slane %v812, 3
    %v874 = vsel %vm868, %v872, %v873
    %v875 = vrot.slane %v842, 3
    %v876 = vsel %vm868, %v870, %v875
    %v877 = vrot.slane %v843, 3
    %v878 = vsel %vm868, %v873, %v877
    %v883 = vld [vmem:[#allocation3] sm:$0xfc]
    %v884 = vld [vmem:[#allocation3 + $0x8] sm:$0xfc]
    %v885 = vld [vmem:[#allocation3 + $0x20] sm:$0x3]
    %v886 = vld [vmem:[#allocation3 + $0x28] sm:$0x3]
    %v887 = vld [vmem:[#allocation3 + $0x20] sm:$0xf0]
    %v888 = vld [vmem:[#allocation3 + $0x28] sm:$0xf0]
    %v889 = vld [vmem:[#allocation3 + $0x40] sm:$0xf]
    %v890 = vld [vmem:[#allocation3 + $0x48] sm:$0xf]
    %v895 = vrot.slane %v883, 2
    %v896 = vrot.slane %v807, 2
    %v897 = vsel %vm821, %v895, %v896
    %v898 = vrot.slane %v884, 2
    %v899 = vrot.slane %v808, 2
    %v900 = vsel %vm821, %v898, %v899
    %v901 = vrot.slane %v885, 2
    %v902 = vsel %vm821, %v896, %v901
    %v903 = vrot.slane %v886, 2
    %v904 = vsel %vm821, %v899, %v903
    %vm913 = vcmask 1043456
    %v914 = vrot.slane %v887, 4
    %v915 = vrot.slane %v811, 4
    %v916 = vsel %vm913, %v914, %v915
    %v917 = vrot.slane %v888, 4
    %v918 = vrot.slane %v812, 4
    %v919 = vsel %vm913, %v917, %v918
    %v920 = vrot.slane %v889, 4
    %v921 = vsel %vm913, %v915, %v920
    %v922 = vrot.slane %v890, 4
    %v923 = vsel %vm913, %v918, %v922
    %v928 = vld [vmem:[#allocation12] sm:$0xff]
    %v929 = vld [vmem:[#allocation12 + $0x8] sm:$0xff]
    %v930 = vld [vmem:[#allocation12 + $0x10] sm:$0xff]
    %v931 = vld [vmem:[#allocation12 + $0x18] sm:$0xff]
    %v932 = vld [vmem:[#allocation12 + $0x20] sm:$0xff]
    %v933 = vld [vmem:[#allocation12 + $0x28] sm:$0xff]
    %v934 = vld [vmem:[#allocation12 + $0x30] sm:$0xff]
    %v935 = vld [vmem:[#allocation12 + $0x38] sm:$0xff]
    %v936 = vld [vmem:[#allocation12 + $0x40] sm:$0xff]
    %v937 = vld [vmem:[#allocation12 + $0x48] sm:$0xff]
    %v938 = vld [vmem:[#allocation12 + $0x50] sm:$0xff]
    %v939 = vld [vmem:[#allocation12 + $0x58] sm:$0xff]
    %v940 = vld [vmem:[#allocation12 + $0x60] sm:$0xff]
    %v941 = vld [vmem:[#allocation12 + $0x68] sm:$0xff]
    %v942 = vld [vmem:[#allocation12 + $0x70] sm:$0xff]
    %v943 = vld [vmem:[#allocation12 + $0x78] sm:$0xff]
    %v944 = vld [vmem:[#allocation12 + $0x80] sm:$0xff]
    %v945 = vld [vmem:[#allocation12 + $0x88] sm:$0xff]
    %v946 = vld [vmem:[#allocation12 + $0x90] sm:$0xff]
    %v947 = vld [vmem:[#allocation12 + $0x98] sm:$0xff]
    %v948 = vld [vmem:[#allocation12 + $0xa0] sm:$0xff]
    %v949 = vld [vmem:[#allocation12 + $0xa8] sm:$0xff]
    %v950 = vld [vmem:[#allocation12 + $0xb0] sm:$0xff]
    %v951 = vld [vmem:[#allocation12 + $0xb8] sm:$0xff]
    %v952 = vld [vmem:[#allocation12 + $0xc0] sm:$0xff]
    %v953 = vld [vmem:[#allocation12 + $0xc8] sm:$0xff]
    %v954 = vld [vmem:[#allocation12 + $0xd0] sm:$0xff]
    %v955 = vld [vmem:[#allocation12 + $0xd8] sm:$0xff]
    %v956 = vld [vmem:[#allocation12 + $0xe0] sm:$0xff]
    %v957 = vld [vmem:[#allocation12 + $0xe8] sm:$0xff]
    %v958 = vld [vmem:[#allocation12 + $0xf0] sm:$0xff]
    %v959 = vld [vmem:[#allocation12 + $0xf8] sm:$0xff]
    %v960 = vld [vmem:[#allocation12 + $0x100] sm:$0xff]
    %v961 = vld [vmem:[#allocation12 + $0x108] sm:$0xff]
    %v962 = vld [vmem:[#allocation12 + $0x110] sm:$0xff]
    %v963 = vld [vmem:[#allocation12 + $0x118] sm:$0xff]
    %v964 = vld [vmem:[#allocation12 + $0x120] sm:$0xff]
    %v965 = vld [vmem:[#allocation12 + $0x128] sm:$0xff]
    %v966 = vld [vmem:[#allocation12 + $0x130] sm:$0xff]
    %v967 = vld [vmem:[#allocation12 + $0x138] sm:$0xff]
    %v968 = vld [vmem:[#allocation12 + $0x140] sm:$0xff]
    %v969 = vld [vmem:[#allocation12 + $0x148] sm:$0xff]
    %v970 = vld [vmem:[#allocation12 + $0x150] sm:$0xff]
    %v971 = vld [vmem:[#allocation12 + $0x158] sm:$0xff]
    %v972 = vld [vmem:[#allocation12 + $0x160] sm:$0xff]
    %v973 = vld [vmem:[#allocation12 + $0x168] sm:$0xff]
    %v974 = vld [vmem:[#allocation12 + $0x170] sm:$0xff]
    %v975 = vld [vmem:[#allocation12 + $0x178] sm:$0xff]
    %v976 = vld [vmem:[#allocation12 + $0x180] sm:$0xff]
    %v977 = vld [vmem:[#allocation12 + $0x188] sm:$0xff]
    %v978 = vld [vmem:[#allocation12 + $0x190] sm:$0xff]
    %v979 = vld [vmem:[#allocation12 + $0x198] sm:$0xff]
    %v980 = vld [vmem:[#allocation12 + $0x1a0] sm:$0xff]
    %v981 = vld [vmem:[#allocation12 + $0x1a8] sm:$0xff]
    %v982 = vld [vmem:[#allocation12 + $0x1b0] sm:$0xff]
    %v983 = vld [vmem:[#allocation12 + $0x1b8] sm:$0xff]
    %v984 = vld [vmem:[#allocation12 + $0x1c0] sm:$0xff]
    %v985 = vld [vmem:[#allocation12 + $0x1c8] sm:$0xff]
    %v986 = vld [vmem:[#allocation12 + $0x1d0] sm:$0xff]
    %v987 = vld [vmem:[#allocation12 + $0x1d8] sm:$0xff]
    %v988 = vld [vmem:[#allocation12 + $0x1e0] sm:$0xff]
    %v989 = vld [vmem:[#allocation12 + $0x1e8] sm:$0xff]
    %v990 = vld [vmem:[#allocation12 + $0x1f0] sm:$0xff]
    %v991 = vld [vmem:[#allocation12 + $0x1f8] sm:$0xff]
    %v992 = vld [vmem:[#allocation12 + $0x200] sm:$0xff]
    %v993 = vld [vmem:[#allocation12 + $0x208] sm:$0xff]
    %v994 = vld [vmem:[#allocation12 + $0x210] sm:$0xff]
    %v995 = vld [vmem:[#allocation12 + $0x218] sm:$0xff]
    %v996 = vld [vmem:[#allocation12 + $0x220] sm:$0xff]
    %v997 = vld [vmem:[#allocation12 + $0x228] sm:$0xff]
    %v998 = vld [vmem:[#allocation12 + $0x230] sm:$0xff]
    %v999 = vld [vmem:[#allocation12 + $0x238] sm:$0xff]
    %v1000 = vld [vmem:[#allocation12 + $0x240] sm:$0xff]
    %v1001 = vld [vmem:[#allocation12 + $0x248] sm:$0xff]
    %v1002 = vld [vmem:[#allocation12 + $0x250] sm:$0xff]
    %v1003 = vld [vmem:[#allocation12 + $0x258] sm:$0xff]
    %v1004 = vld [vmem:[#allocation12 + $0x260] sm:$0xff]
    %v1005 = vld [vmem:[#allocation12 + $0x268] sm:$0xff]
    %v1006 = vld [vmem:[#allocation12 + $0x270] sm:$0xff]
    %v1007 = vld [vmem:[#allocation12 + $0x278] sm:$0xff]
    %v1008 = vld [vmem:[#allocation12 + $0x280] sm:$0xff]
    %v1009 = vld [vmem:[#allocation12 + $0x288] sm:$0xff]
    %v1010 = vld [vmem:[#allocation12 + $0x290] sm:$0xff]
    %v1011 = vld [vmem:[#allocation12 + $0x298] sm:$0xff]
    %v1012 = vld [vmem:[#allocation12 + $0x2a0] sm:$0xff]
    %v1013 = vld [vmem:[#allocation12 + $0x2a8] sm:$0xff]
    %v1014 = vld [vmem:[#allocation12 + $0x2b0] sm:$0xff]
    %v1015 = vld [vmem:[#allocation12 + $0x2b8] sm:$0xff]
    %v1016 = vld [vmem:[#allocation12 + $0x2c0] sm:$0xff]
    %v1017 = vld [vmem:[#allocation12 + $0x2c8] sm:$0xff]
    %v1018 = vld [vmem:[#allocation12 + $0x2d0] sm:$0xff]
    %v1019 = vld [vmem:[#allocation12 + $0x2d8] sm:$0xff]
    %v1020 = vld [vmem:[#allocation12 + $0x2e0] sm:$0xff]
    %v1021 = vld [vmem:[#allocation12 + $0x2e8] sm:$0xff]
    %v1022 = vld [vmem:[#allocation12 + $0x2f0] sm:$0xff]
    %v1023 = vld [vmem:[#allocation12 + $0x2f8] sm:$0xff]
    %v1024 = vld [vmem:[#allocation12 + $0x300] sm:$0xff]
    %v1025 = vld [vmem:[#allocation12 + $0x308] sm:$0xff]
    %v1026 = vld [vmem:[#allocation12 + $0x310] sm:$0xff]
    %v1027 = vld [vmem:[#allocation12 + $0x318] sm:$0xff]
    %v1028 = vld [vmem:[#allocation12 + $0x320] sm:$0xff]
    %v1029 = vld [vmem:[#allocation12 + $0x328] sm:$0xff]
    %v1030 = vld [vmem:[#allocation12 + $0x330] sm:$0xff]
    %v1031 = vld [vmem:[#allocation12 + $0x338] sm:$0xff]
    %v1032 = vld [vmem:[#allocation12 + $0x340] sm:$0xff]
    %v1033 = vld [vmem:[#allocation12 + $0x348] sm:$0xff]
    %v1034 = vld [vmem:[#allocation12 + $0x350] sm:$0xff]
    %v1035 = vld [vmem:[#allocation12 + $0x358] sm:$0xff]
    %v1036 = vld [vmem:[#allocation12 + $0x360] sm:$0xff]
    %v1037 = vld [vmem:[#allocation12 + $0x368] sm:$0xff]
    %v1038 = vld [vmem:[#allocation12 + $0x370] sm:$0xff]
    %v1039 = vld [vmem:[#allocation12 + $0x378] sm:$0xff]
    %v1040 = vld [vmem:[#allocation12 + $0x380] sm:$0xff]
    %v1041 = vld [vmem:[#allocation12 + $0x388] sm:$0xff]
    %v1042 = vld [vmem:[#allocation12 + $0x390] sm:$0xff]
    %v1043 = vld [vmem:[#allocation12 + $0x398] sm:$0xff]
    %v1044 = vld [vmem:[#allocation12 + $0x3a0] sm:$0xff]
    %v1045 = vld [vmem:[#allocation12 + $0x3a8] sm:$0xff]
    %v1046 = vld [vmem:[#allocation12 + $0x3b0] sm:$0xff]
    %v1047 = vld [vmem:[#allocation12 + $0x3b8] sm:$0xff]
    %v1048 = vld [vmem:[#allocation12 + $0x3c0] sm:$0xff]
    %v1049 = vld [vmem:[#allocation12 + $0x3c8] sm:$0xff]
    %v1050 = vld [vmem:[#allocation12 + $0x3d0] sm:$0xff]
    %v1051 = vld [vmem:[#allocation12 + $0x3d8] sm:$0xff]
    %v1052 = vld [vmem:[#allocation12 + $0x3e0] sm:$0xff]
    %v1053 = vld [vmem:[#allocation12 + $0x3e8] sm:$0xff]
    %v1054 = vld [vmem:[#allocation12 + $0x3f0] sm:$0xff]
    %v1055 = vld [vmem:[#allocation12 + $0x3f8] sm:$0xff]
    %v1056 = vld [vmem:[#allocation12 + $0x400] sm:$0xff]
    %v1057 = vld [vmem:[#allocation12 + $0x408] sm:$0xff]
    %v1058 = vld [vmem:[#allocation12 + $0x410] sm:$0xff]
    %v1059 = vld [vmem:[#allocation12 + $0x418] sm:$0xff]
    %v1060 = vld [vmem:[#allocation12 + $0x420] sm:$0xff]
    %v1061 = vld [vmem:[#allocation12 + $0x428] sm:$0xff]
    %v1062 = vld [vmem:[#allocation12 + $0x430] sm:$0xff]
    %v1063 = vld [vmem:[#allocation12 + $0x438] sm:$0xff]
    %v1064 = vld [vmem:[#allocation12 + $0x440] sm:$0xff]
    %v1065 = vld [vmem:[#allocation12 + $0x448] sm:$0xff]
    %v1066 = vld [vmem:[#allocation12 + $0x450] sm:$0xff]
    %v1067 = vld [vmem:[#allocation12 + $0x458] sm:$0xff]
    %v1068 = vld [vmem:[#allocation12 + $0x460] sm:$0xff]
    %v1069 = vld [vmem:[#allocation12 + $0x468] sm:$0xff]
    %v1070 = vld [vmem:[#allocation12 + $0x470] sm:$0xff]
    %v1071 = vld [vmem:[#allocation12 + $0x478] sm:$0xff]
    %v1072 = vld [vmem:[#allocation12 + $0x480] sm:$0xff]
    %v1073 = vld [vmem:[#allocation12 + $0x488] sm:$0xff]
    %v1074 = vld [vmem:[#allocation12 + $0x490] sm:$0xff]
    %v1075 = vld [vmem:[#allocation12 + $0x498] sm:$0xff]
    %v1076 = vld [vmem:[#allocation12 + $0x4a0] sm:$0xff]
    %v1077 = vld [vmem:[#allocation12 + $0x4a8] sm:$0xff]
    %v1078 = vld [vmem:[#allocation12 + $0x4b0] sm:$0xff]
    %v1079 = vld [vmem:[#allocation12 + $0x4b8] sm:$0xff]
    %v1080 = vld [vmem:[#allocation12 + $0x4c0] sm:$0xff]
    %v1081 = vld [vmem:[#allocation12 + $0x4c8] sm:$0xff]
    %v1082 = vld [vmem:[#allocation12 + $0x4d0] sm:$0xff]
    %v1083 = vld [vmem:[#allocation12 + $0x4d8] sm:$0xff]
    %v1084 = vld [vmem:[#allocation12 + $0x4e0] sm:$0xff]
    %v1085 = vld [vmem:[#allocation12 + $0x4e8] sm:$0xff]
    %v1086 = vld [vmem:[#allocation12 + $0x4f0] sm:$0xff]
    %v1087 = vld [vmem:[#allocation12 + $0x4f8] sm:$0xff]
    %v1088 = vld [vmem:[#allocation12 + $0x500] sm:$0xff]
    %v1089 = vld [vmem:[#allocation12 + $0x508] sm:$0xff]
    %v1090 = vld [vmem:[#allocation12 + $0x510] sm:$0xff]
    %v1091 = vld [vmem:[#allocation12 + $0x518] sm:$0xff]
    %v1092 = vld [vmem:[#allocation12 + $0x520] sm:$0xff]
    %v1093 = vld [vmem:[#allocation12 + $0x528] sm:$0xff]
    %v1094 = vld [vmem:[#allocation12 + $0x530] sm:$0xff]
    %v1095 = vld [vmem:[#allocation12 + $0x538] sm:$0xff]
    %v1096 = vld [vmem:[#allocation12 + $0x540] sm:$0xff]
    %v1097 = vld [vmem:[#allocation12 + $0x548] sm:$0xff]
    %v1098 = vld [vmem:[#allocation12 + $0x550] sm:$0xff]
    %v1099 = vld [vmem:[#allocation12 + $0x558] sm:$0xff]
    %v1100 = vld [vmem:[#allocation12 + $0x560] sm:$0xff]
    %v1101 = vld [vmem:[#allocation12 + $0x568] sm:$0xff]
    %v1102 = vld [vmem:[#allocation12 + $0x570] sm:$0xff]
    %v1103 = vld [vmem:[#allocation12 + $0x578] sm:$0xff]
    %v1104 = vld [vmem:[#allocation12 + $0x580] sm:$0xff]
    %v1105 = vld [vmem:[#allocation12 + $0x588] sm:$0xff]
    %v1106 = vld [vmem:[#allocation12 + $0x590] sm:$0xff]
    %v1107 = vld [vmem:[#allocation12 + $0x598] sm:$0xff]
    %v1108 = vld [vmem:[#allocation12 + $0x5a0] sm:$0xff]
    %v1109 = vld [vmem:[#allocation12 + $0x5a8] sm:$0xff]
    %v1110 = vld [vmem:[#allocation12 + $0x5b0] sm:$0xff]
    %v1111 = vld [vmem:[#allocation12 + $0x5b8] sm:$0xff]
    %v1112 = vld [vmem:[#allocation12 + $0x5c0] sm:$0xff]
    %v1113 = vld [vmem:[#allocation12 + $0x5c8] sm:$0xff]
    %v1114 = vld [vmem:[#allocation12 + $0x5d0] sm:$0xff]
    %v1115 = vld [vmem:[#allocation12 + $0x5d8] sm:$0xff]
    %v1116 = vld [vmem:[#allocation12 + $0x5e0] sm:$0xff]
    %v1117 = vld [vmem:[#allocation12 + $0x5e8] sm:$0xff]
    %v1118 = vld [vmem:[#allocation12 + $0x5f0] sm:$0xff]
    %v1119 = vld [vmem:[#allocation12 + $0x5f8] sm:$0xff]
    %v1120 = vld [vmem:[#allocation12 + $0x600] sm:$0xff]
    %v1121 = vld [vmem:[#allocation12 + $0x608] sm:$0xff]
    %v1122 = vld [vmem:[#allocation12 + $0x610] sm:$0xff]
    %v1123 = vld [vmem:[#allocation12 + $0x618] sm:$0xff]
    %v1124 = vld [vmem:[#allocation12 + $0x620] sm:$0xff]
    %v1125 = vld [vmem:[#allocation12 + $0x628] sm:$0xff]
    %v1126 = vld [vmem:[#allocation12 + $0x630] sm:$0xff]
    %v1127 = vld [vmem:[#allocation12 + $0x638] sm:$0xff]
    %v1128 = vld [vmem:[#allocation12 + $0x640] sm:$0xff]
    %v1129 = vld [vmem:[#allocation12 + $0x648] sm:$0xff]
    %v1130 = vld [vmem:[#allocation12 + $0x650] sm:$0xff]
    %v1131 = vld [vmem:[#allocation12 + $0x658] sm:$0xff]
    %v1132 = vld [vmem:[#allocation12 + $0x660] sm:$0xff]
    %v1133 = vld [vmem:[#allocation12 + $0x668] sm:$0xff]
    %v1134 = vld [vmem:[#allocation12 + $0x670] sm:$0xff]
    %v1135 = vld [vmem:[#allocation12 + $0x678] sm:$0xff]
    %v1136 = vld [vmem:[#allocation12 + $0x680] sm:$0xff]
    %v1137 = vld [vmem:[#allocation12 + $0x688] sm:$0xff]
    %v1138 = vld [vmem:[#allocation12 + $0x690] sm:$0xff]
    %v1139 = vld [vmem:[#allocation12 + $0x698] sm:$0xff]
    %v1140 = vld [vmem:[#allocation12 + $0x6a0] sm:$0xff]
    %v1141 = vld [vmem:[#allocation12 + $0x6a8] sm:$0xff]
    %v1142 = vld [vmem:[#allocation12 + $0x6b0] sm:$0xff]
    %v1143 = vld [vmem:[#allocation12 + $0x6b8] sm:$0xff]
    %v1144 = vld [vmem:[#allocation12 + $0x6c0] sm:$0xff]
    %v1145 = vld [vmem:[#allocation12 + $0x6c8] sm:$0xff]
    %v1146 = vld [vmem:[#allocation12 + $0x6d0] sm:$0xff]
    %v1147 = vld [vmem:[#allocation12 + $0x6d8] sm:$0xff]
    %v1148 = vld [vmem:[#allocation12 + $0x6e0] sm:$0xff]
    %v1149 = vld [vmem:[#allocation12 + $0x6e8] sm:$0xff]
    %v1150 = vld [vmem:[#allocation12 + $0x6f0] sm:$0xff]
    %v1151 = vld [vmem:[#allocation12 + $0x6f8] sm:$0xff]
    %v1152 = vld [vmem:[#allocation12 + $0x700] sm:$0xff]
    %v1153 = vld [vmem:[#allocation12 + $0x708] sm:$0xff]
    %v1154 = vld [vmem:[#allocation12 + $0x710] sm:$0xff]
    %v1155 = vld [vmem:[#allocation12 + $0x718] sm:$0xff]
    %v1156 = vld [vmem:[#allocation12 + $0x720] sm:$0xff]
    %v1157 = vld [vmem:[#allocation12 + $0x728] sm:$0xff]
    %v1158 = vld [vmem:[#allocation12 + $0x730] sm:$0xff]
    %v1159 = vld [vmem:[#allocation12 + $0x738] sm:$0xff]
    %v1160 = vld [vmem:[#allocation12 + $0x740] sm:$0xff]
    %v1161 = vld [vmem:[#allocation12 + $0x748] sm:$0xff]
    %v1162 = vld [vmem:[#allocation12 + $0x750] sm:$0xff]
    %v1163 = vld [vmem:[#allocation12 + $0x758] sm:$0xff]
    %v1164 = vld [vmem:[#allocation12 + $0x760] sm:$0xff]
    %v1165 = vld [vmem:[#allocation12 + $0x768] sm:$0xff]
    %v1166 = vld [vmem:[#allocation12 + $0x770] sm:$0xff]
    %v1167 = vld [vmem:[#allocation12 + $0x778] sm:$0xff]
    %v1168 = vld [vmem:[#allocation12 + $0x780] sm:$0xff]
    %v1169 = vld [vmem:[#allocation12 + $0x788] sm:$0xff]
    %v1170 = vld [vmem:[#allocation12 + $0x790] sm:$0xff]
    %v1171 = vld [vmem:[#allocation12 + $0x798] sm:$0xff]
    %v1172 = vld [vmem:[#allocation12 + $0x7a0] sm:$0xff]
    %v1173 = vld [vmem:[#allocation12 + $0x7a8] sm:$0xff]
    %v1174 = vld [vmem:[#allocation12 + $0x7b0] sm:$0xff]
    %v1175 = vld [vmem:[#allocation12 + $0x7b8] sm:$0xff]
    %v1176 = vld [vmem:[#allocation12 + $0x7c0] sm:$0xff]
    %v1177 = vld [vmem:[#allocation12 + $0x7c8] sm:$0xff]
    %v1178 = vld [vmem:[#allocation12 + $0x7d0] sm:$0xff]
    %v1179 = vld [vmem:[#allocation12 + $0x7d8] sm:$0xff]
    %v1180 = vld [vmem:[#allocation12 + $0x7e0] sm:$0xff]
    %v1181 = vld [vmem:[#allocation12 + $0x7e8] sm:$0xff]
    %v1182 = vld [vmem:[#allocation12 + $0x7f0] sm:$0xff]
    %v1183 = vld [vmem:[#allocation12 + $0x7f8] sm:$0xff]
    %v1184 = vld [vmem:[#allocation12 + $0x800] sm:$0xff]
    %v1185 = vld [vmem:[#allocation12 + $0x808] sm:$0xff]
    %v1186 = vld [vmem:[#allocation12 + $0x810] sm:$0xff]
    %v1187 = vld [vmem:[#allocation12 + $0x818] sm:$0xff]
    %v1188 = vld [vmem:[#allocation12 + $0x820] sm:$0xff]
    %v1189 = vld [vmem:[#allocation12 + $0x828] sm:$0xff]
    %v1190 = vld [vmem:[#allocation12 + $0x830] sm:$0xff]
    %v1191 = vld [vmem:[#allocation12 + $0x838] sm:$0xff]
    %v1192 = vld [vmem:[#allocation12 + $0x840] sm:$0xff]
    %v1193 = vld [vmem:[#allocation12 + $0x848] sm:$0xff]
    %v1194 = vld [vmem:[#allocation12 + $0x850] sm:$0xff]
    %v1195 = vld [vmem:[#allocation12 + $0x858] sm:$0xff]
    %v1196 = vld [vmem:[#allocation12 + $0x860] sm:$0xff]
    %v1197 = vld [vmem:[#allocation12 + $0x868] sm:$0xff]
    %v1198 = vld [vmem:[#allocation12 + $0x870] sm:$0xff]
    %v1199 = vld [vmem:[#allocation12 + $0x878] sm:$0xff]
    %v1200 = vld [vmem:[#allocation12 + $0x880] sm:$0xff]
    %v1201 = vld [vmem:[#allocation12 + $0x888] sm:$0xff]
    %v1202 = vld [vmem:[#allocation12 + $0x890] sm:$0xff]
    %v1203 = vld [vmem:[#allocation12 + $0x898] sm:$0xff]
    %v1204 = vld [vmem:[#allocation12 + $0x8a0] sm:$0xff]
    %v1205 = vld [vmem:[#allocation12 + $0x8a8] sm:$0xff]
    %v1206 = vld [vmem:[#allocation12 + $0x8b0] sm:$0xff]
    %v1207 = vld [vmem:[#allocation12 + $0x8b8] sm:$0xff]
    %v1208 = vld [vmem:[#allocation12 + $0x8c0] sm:$0xff]
    %v1209 = vld [vmem:[#allocation12 + $0x8c8] sm:$0xff]
    %v1210 = vld [vmem:[#allocation12 + $0x8d0] sm:$0xff]
    %v1211 = vld [vmem:[#allocation12 + $0x8d8] sm:$0xff]
    %v1212 = vld [vmem:[#allocation12 + $0x8e0] sm:$0xff]
    %v1213 = vld [vmem:[#allocation12 + $0x8e8] sm:$0xff]
    %v1214 = vld [vmem:[#allocation12 + $0x8f0] sm:$0xff]
    %v1215 = vld [vmem:[#allocation12 + $0x8f8] sm:$0xff]
    %v1216 = vld [vmem:[#allocation12 + $0x900] sm:$0xff]
    %v1217 = vld [vmem:[#allocation12 + $0x908] sm:$0xff]
    %v1218 = vld [vmem:[#allocation12 + $0x910] sm:$0xff]
    %v1219 = vld [vmem:[#allocation12 + $0x918] sm:$0xff]
    %v1220 = vld [vmem:[#allocation12 + $0x920] sm:$0xff]
    %v1221 = vld [vmem:[#allocation12 + $0x928] sm:$0xff]
    %v1222 = vld [vmem:[#allocation12 + $0x930] sm:$0xff]
    %v1223 = vld [vmem:[#allocation12 + $0x938] sm:$0xff]
    %v1224 = vld [vmem:[#allocation12 + $0x940] sm:$0xff]
    %v1225 = vld [vmem:[#allocation12 + $0x948] sm:$0xff]
    %v1226 = vld [vmem:[#allocation12 + $0x950] sm:$0xff]
    %v1227 = vld [vmem:[#allocation12 + $0x958] sm:$0xff]
    %v1228 = vld [vmem:[#allocation12 + $0x960] sm:$0xff]
    %v1229 = vld [vmem:[#allocation12 + $0x968] sm:$0xff]
    %v1230 = vld [vmem:[#allocation12 + $0x970] sm:$0xff]
    %v1231 = vld [vmem:[#allocation12 + $0x978] sm:$0xff]
    %v1232 = vld [vmem:[#allocation12 + $0x980] sm:$0xff]
    %v1233 = vld [vmem:[#allocation12 + $0x988] sm:$0xff]
    %v1234 = vld [vmem:[#allocation12 + $0x990] sm:$0xff]
    %v1235 = vld [vmem:[#allocation12 + $0x998] sm:$0xff]
    %v1236 = vld [vmem:[#allocation12 + $0x9a0] sm:$0xff]
    %v1237 = vld [vmem:[#allocation12 + $0x9a8] sm:$0xff]
    %v1238 = vld [vmem:[#allocation12 + $0x9b0] sm:$0xff]
    %v1239 = vld [vmem:[#allocation12 + $0x9b8] sm:$0xff]
    %v1240 = vld [vmem:[#allocation12 + $0x9c0] sm:$0xff]
    %v1241 = vld [vmem:[#allocation12 + $0x9c8] sm:$0xff]
    %v1242 = vld [vmem:[#allocation12 + $0x9d0] sm:$0xff]
    %v1243 = vld [vmem:[#allocation12 + $0x9d8] sm:$0xff]
    %v1244 = vld [vmem:[#allocation12 + $0x9e0] sm:$0xff]
    %v1245 = vld [vmem:[#allocation12 + $0x9e8] sm:$0xff]
    %v1246 = vld [vmem:[#allocation12 + $0x9f0] sm:$0xff]
    %v1247 = vld [vmem:[#allocation12 + $0x9f8] sm:$0xff]
    %v1248 = vld [vmem:[#allocation12 + $0xa00] sm:$0xff]
    %v1249 = vld [vmem:[#allocation12 + $0xa08] sm:$0xff]
    %v1250 = vld [vmem:[#allocation12 + $0xa10] sm:$0xff]
    %v1251 = vld [vmem:[#allocation12 + $0xa18] sm:$0xff]
    %v1252 = vld [vmem:[#allocation12 + $0xa20] sm:$0xff]
    %v1253 = vld [vmem:[#allocation12 + $0xa28] sm:$0xff]
    %v1254 = vld [vmem:[#allocation12 + $0xa30] sm:$0xff]
    %v1255 = vld [vmem:[#allocation12 + $0xa38] sm:$0xff]
    %v1256 = vld [vmem:[#allocation12 + $0xa40] sm:$0xff]
    %v1257 = vld [vmem:[#allocation12 + $0xa48] sm:$0xff]
    %v1258 = vld [vmem:[#allocation12 + $0xa50] sm:$0xff]
    %v1259 = vld [vmem:[#allocation12 + $0xa58] sm:$0xff]
    %v1260 = vld [vmem:[#allocation12 + $0xa60] sm:$0xff]
    %v1261 = vld [vmem:[#allocation12 + $0xa68] sm:$0xff]
    %v1262 = vld [vmem:[#allocation12 + $0xa70] sm:$0xff]
    %v1263 = vld [vmem:[#allocation12 + $0xa78] sm:$0xff]
    %v1264 = vld [vmem:[#allocation12 + $0xa80] sm:$0xff]
    %v1265 = vld [vmem:[#allocation12 + $0xa88] sm:$0xff]
    %v1266 = vld [vmem:[#allocation12 + $0xa90] sm:$0xff]
    %v1267 = vld [vmem:[#allocation12 + $0xa98] sm:$0xff]
    %v1268 = vld [vmem:[#allocation12 + $0xaa0] sm:$0xff]
    %v1269 = vld [vmem:[#allocation12 + $0xaa8] sm:$0xff]
    %v1270 = vld [vmem:[#allocation12 + $0xab0] sm:$0xff]
    %v1271 = vld [vmem:[#allocation12 + $0xab8] sm:$0xff]
    %v1272 = vld [vmem:[#allocation12 + $0xac0] sm:$0xff]
    %v1273 = vld [vmem:[#allocation12 + $0xac8] sm:$0xff]
    %v1274 = vld [vmem:[#allocation12 + $0xad0] sm:$0xff]
    %v1275 = vld [vmem:[#allocation12 + $0xad8] sm:$0xff]
    %v1276 = vld [vmem:[#allocation12 + $0xae0] sm:$0xff]
    %v1277 = vld [vmem:[#allocation12 + $0xae8] sm:$0xff]
    %v1278 = vld [vmem:[#allocation12 + $0xaf0] sm:$0xff]
    %v1279 = vld [vmem:[#allocation12 + $0xaf8] sm:$0xff]
    %v1280 = vld [vmem:[#allocation12 + $0xb00] sm:$0xff]
    %v1281 = vld [vmem:[#allocation12 + $0xb08] sm:$0xff]
    %v1282 = vld [vmem:[#allocation12 + $0xb10] sm:$0xff]
    %v1283 = vld [vmem:[#allocation12 + $0xb18] sm:$0xff]
    %v1284 = vld [vmem:[#allocation12 + $0xb20] sm:$0xff]
    %v1285 = vld [vmem:[#allocation12 + $0xb28] sm:$0xff]
    %v1286 = vld [vmem:[#allocation12 + $0xb30] sm:$0xff]
    %v1287 = vld [vmem:[#allocation12 + $0xb38] sm:$0xff]
    %v1288 = vld [vmem:[#allocation12 + $0xb40] sm:$0xff]
    %v1289 = vld [vmem:[#allocation12 + $0xb48] sm:$0xff]
    %v1290 = vld [vmem:[#allocation12 + $0xb50] sm:$0xff]
    %v1291 = vld [vmem:[#allocation12 + $0xb58] sm:$0xff]
    %v1292 = vld [vmem:[#allocation12 + $0xb60] sm:$0xff]
    %v1293 = vld [vmem:[#allocation12 + $0xb68] sm:$0xff]
    %v1294 = vld [vmem:[#allocation12 + $0xb70] sm:$0xff]
    %v1295 = vld [vmem:[#allocation12 + $0xb78] sm:$0xff]
    %v1296 = vld [vmem:[#allocation12 + $0xb80] sm:$0xff]
    %v1297 = vld [vmem:[#allocation12 + $0xb88] sm:$0xff]
    %v1298 = vld [vmem:[#allocation12 + $0xb90] sm:$0xff]
    %v1299 = vld [vmem:[#allocation12 + $0xb98] sm:$0xff]
    %v1300 = vld [vmem:[#allocation12 + $0xba0] sm:$0xff]
    %v1301 = vld [vmem:[#allocation12 + $0xba8] sm:$0xff]
    %v1302 = vld [vmem:[#allocation12 + $0xbb0] sm:$0xff]
    %v1303 = vld [vmem:[#allocation12 + $0xbb8] sm:$0xff]
    %v1304 = vld [vmem:[#allocation12 + $0xbc0] sm:$0xff]
    %v1305 = vld [vmem:[#allocation12 + $0xbc8] sm:$0xff]
    %v1306 = vld [vmem:[#allocation12 + $0xbd0] sm:$0xff]
    %v1307 = vld [vmem:[#allocation12 + $0xbd8] sm:$0xff]
    %v1308 = vld [vmem:[#allocation12 + $0xbe0] sm:$0xff]
    %v1309 = vld [vmem:[#allocation12 + $0xbe8] sm:$0xff]
    %v1310 = vld [vmem:[#allocation12 + $0xbf0] sm:$0xff]
    %v1311 = vld [vmem:[#allocation12 + $0xbf8] sm:$0xff]
    %v1312 = vld [vmem:[#allocation13] sm:$0xf]
    %v1314 = vlaneseq
    %v1315 = vshrl.u32 %v1314, 7
    %v1316 = vsub.s32 0, %v1315
    %v1317 = vrot.slane %v1312, %v1316
    %v1318 = vlaneseq
    %v1319 = vshrl.u32 %v1318, 7
    %v1320 = vsub.s32 1, %v1319
    %v1321 = vrot.slane %v1312, %v1320
    %v1322 = vlaneseq
    %v1323 = vshrl.u32 %v1322, 7
    %v1324 = vsub.s32 2, %v1323
    %v1325 = vrot.slane %v1312, %v1324
    %v1326 = vlaneseq
    %v1327 = vshrl.u32 %v1326, 7
    %v1328 = vsub.s32 3, %v1327
    %v1329 = vrot.slane %v1312, %v1328
    %1334 = vmatprep.subr.mxu0 %v989
    %1335 = vmatpush1.msra.mxu0 %v988
    %1336 = vmatprep.subr.mxu0 %v985
    %1337 = vmatpush1.msra.mxu0 %v984
    %1338 = vmatprep.subr.mxu0 %v981
    %1339 = vmatpush1.msra.mxu0 %v980
    %1340 = vmatprep.subr.mxu0 %v977
    %1341 = vmatpush1.msra.mxu0 %v976
    %1342 = vmatprep.subr.mxu0 %v973
    %1343 = vmatpush1.msra.mxu0 %v972
    %1344 = vmatprep.subr.mxu0 %v969
    %1345 = vmatpush1.msra.mxu0 %v968
    %1346 = vmatprep.subr.mxu0 %v965
    %1347 = vmatpush1.msra.mxu0 %v964
    %1348 = vmatprep.subr.mxu0 %v961
    %1349 = vmatpush1.msra.mxu0 %v960
    %1350 = vmatprep.subr.mxu0 %v957
    %1351 = vmatpush1.msra.mxu0 %v956
    %1352 = vmatprep.subr.mxu0 %v953
    %1353 = vmatpush1.msra.mxu0 %v952
    %1354 = vmatprep.subr.mxu0 %v949
    %1355 = vmatpush1.msra.mxu0 %v948
    %1356 = vmatprep.subr.mxu0 %v945
    %1357 = vmatpush1.msra.mxu0 %v944
    %1358 = vmatprep.subr.mxu0 %v941
    %1359 = vmatpush1.msra.mxu0 %v940
    %1360 = vmatprep.subr.mxu0 %v937
    %1361 = vmatpush1.msra.mxu0 %v936
    %1362 = vmatprep.subr.mxu0 %v933
    %1363 = vmatpush1.msra.mxu0 %v932
    %1364 = vmatprep.subr.mxu0 %v929
    %1365 = vmatpush1.msra.mxu0 %v928
    %1366 = vmatprep.subr.mxu0 %v1053
    %1367 = vmatpush2.msra.mxu0 %v1052
    %1368 = vmatprep.subr.mxu0 %v1049
    %1369 = vmatpush2.msra.mxu0 %v1048
    %1370 = vmatprep.subr.mxu0 %v1045
    %1371 = vmatpush2.msra.mxu0 %v1044
    %1372 = vmatprep.subr.mxu0 %v1041
    %1373 = vmatpush2.msra.mxu0 %v1040
    %1374 = vmatprep.subr.mxu0 %v1037
    %1375 = vmatpush2.msra.mxu0 %v1036
    %1376 = vmatprep.subr.mxu0 %v1033
    %1377 = vmatpush2.msra.mxu0 %v1032
    %1378 = vmatprep.subr.mxu0 %v1029
    %1379 = vmatpush2.msra.mxu0 %v1028
    %1380 = vmatprep.subr.mxu0 %v1025
    %1381 = vmatpush2.msra.mxu0 %v1024
    %1382 = vmatprep.subr.mxu0 %v1021
    %1383 = vmatpush2.msra.mxu0 %v1020
    %1384 = vmatprep.subr.mxu0 %v1017
    %1385 = vmatpush2.msra.mxu0 %v1016
    %1386 = vmatprep.subr.mxu0 %v1013
    %1387 = vmatpush2.msra.mxu0 %v1012
    %1388 = vmatprep.subr.mxu0 %v1009
    %1389 = vmatpush2.msra.mxu0 %v1008
    %1390 = vmatprep.subr.mxu0 %v1005
    %1391 = vmatpush2.msra.mxu0 %v1004
    %1392 = vmatprep.subr.mxu0 %v1001
    %1393 = vmatpush2.msra.mxu0 %v1000
    %1394 = vmatprep.subr.mxu0 %v997
    %1395 = vmatpush2.msra.mxu0 %v996
    %1396 = vmatprep.subr.mxu0 %v993
    %1397 = vmatpush2.msra.mxu0 %v992
    %1398 = vmatprep.mubr.f32.mxu0 %v806
    %1399 = vmatmul.mubr.f32.gmra.mxu0 %v805
    %v1400 = vpop.f32.mrf.mxu0
    %v1401 = vadd.f32 %v1317, %v1400
    %v1402 = vpop.f32.mrf.mxu0
    %v1403 = vadd.f32 %v1321, %v1402
    %1404 = vmatprep.mubr.f32.mxu0 %v808
    %1405 = vmatmul.mubr.f32.gmra.mxu0 %v807
    %v1406 = vpop.f32.mrf.mxu0
    %v1407 = vadd.f32 %v1317, %v1406
    %v1408 = vpop.f32.mrf.mxu0
    %v1409 = vadd.f32 %v1321, %v1408
    %1410 = vmatprep.mubr.f32.mxu0 %v827
    %1411 = vmatmul.mubr.f32.gmra.mxu0 %v824
    %v1412 = vpop.f32.mrf.mxu0
    %v1413 = vadd.f32 %v1317, %v1412
    %v1414 = vpop.f32.mrf.mxu0
    %v1415 = vadd.f32 %v1321, %v1414
    %1416 = vmatprep.mubr.f32.mxu0 %v831
    %1417 = vmatmul.mubr.f32.gmra.mxu0 %v829
    %v1418 = vpop.f32.mrf.mxu0
    %v1419 = vadd.f32 %v1317, %v1418
    %v1420 = vpop.f32.mrf.mxu0
    %v1421 = vadd.f32 %v1321, %v1420
    %1422 = vdwg.mxu0
    %1423 = vmatprep.subr.mxu0 %v1117
    %1424 = vmatpush1.msra.mxu0 %v1116
    %1425 = vmatprep.subr.mxu0 %v1113
    %1426 = vmatpush1.msra.mxu0 %v1112
    %1427 = vmatprep.subr.mxu0 %v1109
    %1428 = vmatpush1.msra.mxu0 %v1108
    %1429 = vmatprep.subr.mxu0 %v1105
    %1430 = vmatpush1.msra.mxu0 %v1104
    %1431 = vmatprep.subr.mxu0 %v1101
    %1432 = vmatpush1.msra.mxu0 %v1100
    %1433 = vmatprep.subr.mxu0 %v1097
    %1434 = vmatpush1.msra.mxu0 %v1096
    %1435 = vmatprep.subr.mxu0 %v1093
    %1436 = vmatpush1.msra.mxu0 %v1092
    %1437 = vmatprep.subr.mxu0 %v1089
    %1438 = vmatpush1.msra.mxu0 %v1088
    %1439 = vmatprep.subr.mxu0 %v1085
    %1440 = vmatpush1.msra.mxu0 %v1084
    %1441 = vmatprep.subr.mxu0 %v1081
    %1442 = vmatpush1.msra.mxu0 %v1080
    %1443 = vmatprep.subr.mxu0 %v1077
    %1444 = vmatpush1.msra.mxu0 %v1076
    %1445 = vmatprep.subr.mxu0 %v1073
    %1446 = vmatpush1.msra.mxu0 %v1072
    %1447 = vmatprep.subr.mxu0 %v1069
    %1448 = vmatpush1.msra.mxu0 %v1068
    %1449 = vmatprep.subr.mxu0 %v1065
    %1450 = vmatpush1.msra.mxu0 %v1064
    %1451 = vmatprep.subr.mxu0 %v1061
    %1452 = vmatpush1.msra.mxu0 %v1060
    %1453 = vmatprep.subr.mxu0 %v1057
    %1454 = vmatpush1.msra.mxu0 %v1056
    %1455 = vmatprep.subr.mxu0 %v1181
    %1456 = vmatpush2.msra.mxu0 %v1180
    %1457 = vmatprep.subr.mxu0 %v1177
    %1458 = vmatpush2.msra.mxu0 %v1176
    %1459 = vmatprep.subr.mxu0 %v1173
    %1460 = vmatpush2.msra.mxu0 %v1172
    %1461 = vmatprep.subr.mxu0 %v1169
    %1462 = vmatpush2.msra.mxu0 %v1168
    %1463 = vmatprep.subr.mxu0 %v1165
    %1464 = vmatpush2.msra.mxu0 %v1164
    %1465 = vmatprep.subr.mxu0 %v1161
    %1466 = vmatpush2.msra.mxu0 %v1160
    %1467 = vmatprep.subr.mxu0 %v1157
    %1468 = vmatpush2.msra.mxu0 %v1156
    %1469 = vmatprep.subr.mxu0 %v1153
    %1470 = vmatpush2.msra.mxu0 %v1152
    %1471 = vmatprep.subr.mxu0 %v1149
    %1472 = vmatpush2.msra.mxu0 %v1148
    %1473 = vmatprep.subr.mxu0 %v1145
    %1474 = vmatpush2.msra.mxu0 %v1144
    %1475 = vmatprep.subr.mxu0 %v1141
    %1476 = vmatpush2.msra.mxu0 %v1140
    %1477 = vmatprep.subr.mxu0 %v1137
    %1478 = vmatpush2.msra.mxu0 %v1136
    %1479 = vmatprep.subr.mxu0 %v1133
    %1480 = vmatpush2.msra.mxu0 %v1132
    %1481 = vmatprep.subr.mxu0 %v1129
    %1482 = vmatpush2.msra.mxu0 %v1128
    %1483 = vmatprep.subr.mxu0 %v1125
    %1484 = vmatpush2.msra.mxu0 %v1124
    %1485 = vmatprep.subr.mxu0 %v1121
    %1486 = vmatpush2.msra.mxu0 %v1120
    %1487 = vmatprep.mubr.f32.mxu0 %v855
    %1488 = vmatmul.mubr.f32.gmra.mxu0 %v852
    %v1489 = vpop.f32.mrf.mxu0
    %v1490 = vadd.f32 %v1401, %v1489
    %v1491 = vpop.f32.mrf.mxu0
    %v1492 = vadd.f32 %v1403, %v1491
    %1493 = vmatprep.mubr.f32.mxu0 %v859
    %1494 = vmatmul.mubr.f32.gmra.mxu0 %v857
    %v1495 = vpop.f32.mrf.mxu0
    %v1496 = vadd.f32 %v1407, %v1495
    %v1497 = vpop.f32.mrf.mxu0
    %v1498 = vadd.f32 %v1409, %v1497
    %1499 = vmatprep.mubr.f32.mxu0 %v874
    %1500 = vmatmul.mubr.f32.gmra.mxu0 %v871
    %v1501 = vpop.f32.mrf.mxu0
    %v1502 = vadd.f32 %v1413, %v1501
    %v1503 = vpop.f32.mrf.mxu0
    %v1504 = vadd.f32 %v1415, %v1503
    %1505 = vmatprep.mubr.f32.mxu0 %v878
    %1506 = vmatmul.mubr.f32.gmra.mxu0 %v876
    %v1507 = vpop.f32.mrf.mxu0
    %v1508 = vadd.f32 %v1419, %v1507
    %v1509 = vpop.f32.mrf.mxu0
    %v1510 = vadd.f32 %v1421, %v1509
    %1511 = vdwg.mxu0
    %1512 = vmatprep.subr.mxu0 %v1245
    %1513 = vmatpush1.msra.mxu0 %v1244
    %1514 = vmatprep.subr.mxu0 %v1241
    %1515 = vmatpush1.msra.mxu0 %v1240
    %1516 = vmatprep.subr.mxu0 %v1237
    %1517 = vmatpush1.msra.mxu0 %v1236
    %1518 = vmatprep.subr.mxu0 %v1233
    %1519 = vmatpush1.msra.mxu0 %v1232
    %1520 = vmatprep.subr.mxu0 %v1229
    %1521 = vmatpush1.msra.mxu0 %v1228
    %1522 = vmatprep.subr.mxu0 %v1225
    %1523 = vmatpush1.msra.mxu0 %v1224
    %1524 = vmatprep.subr.mxu0 %v1221
    %1525 = vmatpush1.msra.mxu0 %v1220
    %1526 = vmatprep.subr.mxu0 %v1217
    %1527 = vmatpush1.msra.mxu0 %v1216
    %1528 = vmatprep.subr.mxu0 %v1213
    %1529 = vmatpush1.msra.mxu0 %v1212
    %1530 = vmatprep.subr.mxu0 %v1209
    %1531 = vmatpush1.msra.mxu0 %v1208
    %1532 = vmatprep.subr.mxu0 %v1205
    %1533 = vmatpush1.msra.mxu0 %v1204
    %1534 = vmatprep.subr.mxu0 %v1201
    %1535 = vmatpush1.msra.mxu0 %v1200
    %1536 = vmatprep.subr.mxu0 %v1197
    %1537 = vmatpush1.msra.mxu0 %v1196
    %1538 = vmatprep.subr.mxu0 %v1193
    %1539 = vmatpush1.msra.mxu0 %v1192
    %1540 = vmatprep.subr.mxu0 %v1189
    %1541 = vmatpush1.msra.mxu0 %v1188
    %1542 = vmatprep.subr.mxu0 %v1185
    %1543 = vmatpush1.msra.mxu0 %v1184
    %1544 = vmatprep.subr.mxu0 %v1309
    %1545 = vmatpush2.msra.mxu0 %v1308
    %1546 = vmatprep.subr.mxu0 %v1305
    %1547 = vmatpush2.msra.mxu0 %v1304
    %1548 = vmatprep.subr.mxu0 %v1301
    %1549 = vmatpush2.msra.mxu0 %v1300
    %1550 = vmatprep.subr.mxu0 %v1297
    %1551 = vmatpush2.msra.mxu0 %v1296
    %1552 = vmatprep.subr.mxu0 %v1293
    %1553 = vmatpush2.msra.mxu0 %v1292
    %1554 = vmatprep.subr.mxu0 %v1289
    %1555 = vmatpush2.msra.mxu0 %v1288
    %1556 = vmatprep.subr.mxu0 %v1285
    %1557 = vmatpush2.msra.mxu0 %v1284
    %1558 = vmatprep.subr.mxu0 %v1281
    %1559 = vmatpush2.msra.mxu0 %v1280
    %1560 = vmatprep.subr.mxu0 %v1277
    %1561 = vmatpush2.msra.mxu0 %v1276
    %1562 = vmatprep.subr.mxu0 %v1273
    %1563 = vmatpush2.msra.mxu0 %v1272
    %1564 = vmatprep.subr.mxu0 %v1269
    %1565 = vmatpush2.msra.mxu0 %v1268
    %1566 = vmatprep.subr.mxu0 %v1265
    %1567 = vmatpush2.msra.mxu0 %v1264
    %1568 = vmatprep.subr.mxu0 %v1261
    %1569 = vmatpush2.msra.mxu0 %v1260
    %1570 = vmatprep.subr.mxu0 %v1257
    %1571 = vmatpush2.msra.mxu0 %v1256
    %1572 = vmatprep.subr.mxu0 %v1253
    %1573 = vmatpush2.msra.mxu0 %v1252
    %1574 = vmatprep.subr.mxu0 %v1249
    %1575 = vmatpush2.msra.mxu0 %v1248
    %1576 = vmatprep.mubr.f32.mxu0 %v900
    %1577 = vmatmul.mubr.f32.gmra.mxu0 %v897
    %v1578 = vpop.f32.mrf.mxu0
    %v1579 = vadd.f32 %v1490, %v1578
    %v1580 = vpop.f32.mrf.mxu0
    %v1581 = vadd.f32 %v1492, %v1580
    %1582 = vmatprep.mubr.f32.mxu0 %v904
    %1583 = vmatmul.mubr.f32.gmra.mxu0 %v902
    %v1584 = vpop.f32.mrf.mxu0
    %v1585 = vadd.f32 %v1496, %v1584
    %v1586 = vpop.f32.mrf.mxu0
    %v1587 = vadd.f32 %v1498, %v1586
    %1588 = vmatprep.mubr.f32.mxu0 %v919
    %1589 = vmatmul.mubr.f32.gmra.mxu0 %v916
    %v1590 = vpop.f32.mrf.mxu0
    %v1591 = vadd.f32 %v1502, %v1590
    %v1592 = vpop.f32.mrf.mxu0
    %v1593 = vadd.f32 %v1504, %v1592
    %1594 = vmatprep.mubr.f32.mxu0 %v923
    %1595 = vmatmul.mubr.f32.gmra.mxu0 %v921
    %v1596 = vpop.f32.mrf.mxu0
    %v1597 = vadd.f32 %v1508, %v1596
    %v1598 = vpop.f32.mrf.mxu0
    %v1599 = vadd.f32 %v1510, %v1598
    %1600 = vdwg.mxu0
    %1601 = vmatprep.subr.mxu0 %v991
    %1602 = vmatpush1.msra.mxu0 %v990
    %1603 = vmatprep.subr.mxu0 %v987
    %1604 = vmatpush1.msra.mxu0 %v986
    %1605 = vmatprep.subr.mxu0 %v983
    %1606 = vmatpush1.msra.mxu0 %v982
    %1607 = vmatprep.subr.mxu0 %v979
    %1608 = vmatpush1.msra.mxu0 %v978
    %1609 = vmatprep.subr.mxu0 %v975
    %1610 = vmatpush1.msra.mxu0 %v974
    %1611 = vmatprep.subr.mxu0 %v971
    %1612 = vmatpush1.msra.mxu0 %v970
    %1613 = vmatprep.subr.mxu0 %v967
    %1614 = vmatpush1.msra.mxu0 %v966
    %1615 = vmatprep.subr.mxu0 %v963
    %1616 = vmatpush1.msra.mxu0 %v962
    %1617 = vmatprep.subr.mxu0 %v959
    %1618 = vmatpush1.msra.mxu0 %v958
    %1619 = vmatprep.subr.mxu0 %v955
    %1620 = vmatpush1.msra.mxu0 %v954
    %1621 = vmatprep.subr.mxu0 %v951
    %1622 = vmatpush1.msra.mxu0 %v950
    %1623 = vmatprep.subr.mxu0 %v947
    %1624 = vmatpush1.msra.mxu0 %v946
    %1625 = vmatprep.subr.mxu0 %v943
    %1626 = vmatpush1.msra.mxu0 %v942
    %1627 = vmatprep.subr.mxu0 %v939
    %1628 = vmatpush1.msra.mxu0 %v938
    %1629 = vmatprep.subr.mxu0 %v935
    %1630 = vmatpush1.msra.mxu0 %v934
    %1631 = vmatprep.subr.mxu0 %v931
    %1632 = vmatpush1.msra.mxu0 %v930
    %1633 = vmatprep.subr.mxu0 %v1055
    %1634 = vmatpush2.msra.mxu0 %v1054
    %1635 = vmatprep.subr.mxu0 %v1051
    %1636 = vmatpush2.msra.mxu0 %v1050
    %1637 = vmatprep.subr.mxu0 %v1047
    %1638 = vmatpush2.msra.mxu0 %v1046
    %1639 = vmatprep.subr.mxu0 %v1043
    %1640 = vmatpush2.msra.mxu0 %v1042
    %1641 = vmatprep.subr.mxu0 %v1039
    %1642 = vmatpush2.msra.mxu0 %v1038
    %1643 = vmatprep.subr.mxu0 %v1035
    %1644 = vmatpush2.msra.mxu0 %v1034
    %1645 = vmatprep.subr.mxu0 %v1031
    %1646 = vmatpush2.msra.mxu0 %v1030
    %1647 = vmatprep.subr.mxu0 %v1027
    %1648 = vmatpush2.msra.mxu0 %v1026
    %1649 = vmatprep.subr.mxu0 %v1023
    %1650 = vmatpush2.msra.mxu0 %v1022
    %1651 = vmatprep.subr.mxu0 %v1019
    %1652 = vmatpush2.msra.mxu0 %v1018
    %1653 = vmatprep.subr.mxu0 %v1015
    %1654 = vmatpush2.msra.mxu0 %v1014
    %1655 = vmatprep.subr.mxu0 %v1011
    %1656 = vmatpush2.msra.mxu0 %v1010
    %1657 = vmatprep.subr.mxu0 %v1007
    %1658 = vmatpush2.msra.mxu0 %v1006
    %1659 = vmatprep.subr.mxu0 %v1003
    %1660 = vmatpush2.msra.mxu0 %v1002
    %1661 = vmatprep.subr.mxu0 %v999
    %1662 = vmatpush2.msra.mxu0 %v998
    %1663 = vmatprep.subr.mxu0 %v995
    %1664 = vmatpush2.msra.mxu0 %v994
    %1665 = vmatprep.mubr.f32.mxu0 %v806
    %1666 = vmatmul.mubr.f32.gmra.mxu0 %v805
    %v1667 = vpop.f32.mrf.mxu0
    %v1668 = vadd.f32 %v1325, %v1667
    %v1669 = vpop.f32.mrf.mxu0
    %v1670 = vadd.f32 %v1329, %v1669
    %1671 = vmatprep.mubr.f32.mxu0 %v808
    %1672 = vmatmul.mubr.f32.gmra.mxu0 %v807
    %v1673 = vpop.f32.mrf.mxu0
    %v1674 = vadd.f32 %v1325, %v1673
    %v1675 = vpop.f32.mrf.mxu0
    %v1676 = vadd.f32 %v1329, %v1675
    %1677 = vmatprep.mubr.f32.mxu0 %v827
    %1678 = vmatmul.mubr.f32.gmra.mxu0 %v824
    %v1679 = vpop.f32.mrf.mxu0
    %v1680 = vadd.f32 %v1325, %v1679
    %v1681 = vpop.f32.mrf.mxu0
    %v1682 = vadd.f32 %v1329, %v1681
    %1683 = vmatprep.mubr.f32.mxu0 %v831
    %1684 = vmatmul.mubr.f32.gmra.mxu0 %v829
    %v1685 = vpop.f32.mrf.mxu0
    %v1686 = vadd.f32 %v1325, %v1685
    %v1687 = vpop.f32.mrf.mxu0
    %v1688 = vadd.f32 %v1329, %v1687
    %1689 = vdwg.mxu0
    %1690 = vmatprep.subr.mxu0 %v1119
    %1691 = vmatpush1.msra.mxu0 %v1118
    %1692 = vmatprep.subr.mxu0 %v1115
    %1693 = vmatpush1.msra.mxu0 %v1114
    %1694 = vmatprep.subr.mxu0 %v1111
    %1695 = vmatpush1.msra.mxu0 %v1110
    %1696 = vmatprep.subr.mxu0 %v1107
    %1697 = vmatpush1.msra.mxu0 %v1106
    %1698 = vmatprep.subr.mxu0 %v1103
    %1699 = vmatpush1.msra.mxu0 %v1102
    %1700 = vmatprep.subr.mxu0 %v1099
    %1701 = vmatpush1.msra.mxu0 %v1098
    %1702 = vmatprep.subr.mxu0 %v1095
    %1703 = vmatpush1.msra.mxu0 %v1094
    %1704 = vmatprep.subr.mxu0 %v1091
    %1705 = vmatpush1.msra.mxu0 %v1090
    %1706 = vmatprep.subr.mxu0 %v1087
    %1707 = vmatpush1.msra.mxu0 %v1086
    %1708 = vmatprep.subr.mxu0 %v1083
    %1709 = vmatpush1.msra.mxu0 %v1082
    %1710 = vmatprep.subr.mxu0 %v1079
    %1711 = vmatpush1.msra.mxu0 %v1078
    %1712 = vmatprep.subr.mxu0 %v1075
    %1713 = vmatpush1.msra.mxu0 %v1074
    %1714 = vmatprep.subr.mxu0 %v1071
    %1715 = vmatpush1.msra.mxu0 %v1070
    %1716 = vmatprep.subr.mxu0 %v1067
    %1717 = vmatpush1.msra.mxu0 %v1066
    %1718 = vmatprep.subr.mxu0 %v1063
    %1719 = vmatpush1.msra.mxu0 %v1062
    %1720 = vmatprep.subr.mxu0 %v1059
    %1721 = vmatpush1.msra.mxu0 %v1058
    %1722 = vmatprep.subr.mxu0 %v1183
    %1723 = vmatpush2.msra.mxu0 %v1182
    %1724 = vmatprep.subr.mxu0 %v1179
    %1725 = vmatpush2.msra.mxu0 %v1178
    %1726 = vmatprep.subr.mxu0 %v1175
    %1727 = vmatpush2.msra.mxu0 %v1174
    %1728 = vmatprep.subr.mxu0 %v1171
    %1729 = vmatpush2.msra.mxu0 %v1170
    %1730 = vmatprep.subr.mxu0 %v1167
    %1731 = vmatpush2.msra.mxu0 %v1166
    %1732 = vmatprep.subr.mxu0 %v1163
    %1733 = vmatpush2.msra.mxu0 %v1162
    %1734 = vmatprep.subr.mxu0 %v1159
    %1735 = vmatpush2.msra.mxu0 %v1158
    %1736 = vmatprep.subr.mxu0 %v1155
    %1737 = vmatpush2.msra.mxu0 %v1154
    %1738 = vmatprep.subr.mxu0 %v1151
    %1739 = vmatpush2.msra.mxu0 %v1150
    %1740 = vmatprep.subr.mxu0 %v1147
    %1741 = vmatpush2.msra.mxu0 %v1146
    %1742 = vmatprep.subr.mxu0 %v1143
    %1743 = vmatpush2.msra.mxu0 %v1142
    %1744 = vmatprep.subr.mxu0 %v1139
    %1745 = vmatpush2.msra.mxu0 %v1138
    %1746 = vmatprep.subr.mxu0 %v1135
    %1747 = vmatpush2.msra.mxu0 %v1134
    %1748 = vmatprep.subr.mxu0 %v1131
    %1749 = vmatpush2.msra.mxu0 %v1130
    %1750 = vmatprep.subr.mxu0 %v1127
    %1751 = vmatpush2.msra.mxu0 %v1126
    %1752 = vmatprep.subr.mxu0 %v1123
    %1753 = vmatpush2.msra.mxu0 %v1122
    %1754 = vmatprep.mubr.f32.mxu0 %v855
    %1755 = vmatmul.mubr.f32.gmra.mxu0 %v852
    %v1756 = vpop.f32.mrf.mxu0
    %v1757 = vadd.f32 %v1668, %v1756
    %v1758 = vpop.f32.mrf.mxu0
    %v1759 = vadd.f32 %v1670, %v1758
    %1760 = vmatprep.mubr.f32.mxu0 %v859
    %1761 = vmatmul.mubr.f32.gmra.mxu0 %v857
    %v1762 = vpop.f32.mrf.mxu0
    %v1763 = vadd.f32 %v1674, %v1762
    %v1764 = vpop.f32.mrf.mxu0
    %v1765 = vadd.f32 %v1676, %v1764
    %1766 = vmatprep.mubr.f32.mxu0 %v874
    %1767 = vmatmul.mubr.f32.gmra.mxu0 %v871
    %v1768 = vpop.f32.mrf.mxu0
    %v1769 = vadd.f32 %v1680, %v1768
    %v1770 = vpop.f32.mrf.mxu0
    %v1771 = vadd.f32 %v1682, %v1770
    %1772 = vmatprep.mubr.f32.mxu0 %v878
    %1773 = vmatmul.mubr.f32.gmra.mxu0 %v876
    %v1774 = vpop.f32.mrf.mxu0
    %v1775 = vadd.f32 %v1686, %v1774
    %v1776 = vpop.f32.mrf.mxu0
    %v1777 = vadd.f32 %v1688, %v1776
    %1778 = vdwg.mxu0
    %1779 = vmatprep.subr.mxu0 %v1247
    %1780 = vmatpush1.msra.mxu0 %v1246
    %1781 = vmatprep.subr.mxu0 %v1243
    %1782 = vmatpush1.msra.mxu0 %v1242
    %1783 = vmatprep.subr.mxu0 %v1239
    %1784 = vmatpush1.msra.mxu0 %v1238
    %1785 = vmatprep.subr.mxu0 %v1235
    %1786 = vmatpush1.msra.mxu0 %v1234
    %1787 = vmatprep.subr.mxu0 %v1231
    %1788 = vmatpush1.msra.mxu0 %v1230
    %1789 = vmatprep.subr.mxu0 %v1227
    %1790 = vmatpush1.msra.mxu0 %v1226
    %1791 = vmatprep.subr.mxu0 %v1223
    %1792 = vmatpush1.msra.mxu0 %v1222
    %1793 = vmatprep.subr.mxu0 %v1219
    %1794 = vmatpush1.msra.mxu0 %v1218
    %1795 = vmatprep.subr.mxu0 %v1215
    %1796 = vmatpush1.msra.mxu0 %v1214
    %1797 = vmatprep.subr.mxu0 %v1211
    %1798 = vmatpush1.msra.mxu0 %v1210
    %1799 = vmatprep.subr.mxu0 %v1207
    %1800 = vmatpush1.msra.mxu0 %v1206
    %1801 = vmatprep.subr.mxu0 %v1203
    %1802 = vmatpush1.msra.mxu0 %v1202
    %1803 = vmatprep.subr.mxu0 %v1199
    %1804 = vmatpush1.msra.mxu0 %v1198
    %1805 = vmatprep.subr.mxu0 %v1195
    %1806 = vmatpush1.msra.mxu0 %v1194
    %1807 = vmatprep.subr.mxu0 %v1191
    %1808 = vmatpush1.msra.mxu0 %v1190
    %1809 = vmatprep.subr.mxu0 %v1187
    %1810 = vmatpush1.msra.mxu0 %v1186
    %1811 = vmatprep.subr.mxu0 %v1311
    %1812 = vmatpush2.msra.mxu0 %v1310
    %1813 = vmatprep.subr.mxu0 %v1307
    %1814 = vmatpush2.msra.mxu0 %v1306
    %1815 = vmatprep.subr.mxu0 %v1303
    %1816 = vmatpush2.msra.mxu0 %v1302
    %1817 = vmatprep.subr.mxu0 %v1299
    %1818 = vmatpush2.msra.mxu0 %v1298
    %1819 = vmatprep.subr.mxu0 %v1295
    %1820 = vmatpush2.msra.mxu0 %v1294
    %1821 = vmatprep.subr.mxu0 %v1291
    %1822 = vmatpush2.msra.mxu0 %v1290
    %1823 = vmatprep.subr.mxu0 %v1287
    %1824 = vmatpush2.msra.mxu0 %v1286
    %1825 = vmatprep.subr.mxu0 %v1283
    %1826 = vmatpush2.msra.mxu0 %v1282
    %1827 = vmatprep.subr.mxu0 %v1279
    %1828 = vmatpush2.msra.mxu0 %v1278
    %1829 = vmatprep.subr.mxu0 %v1275
    %1830 = vmatpush2.msra.mxu0 %v1274
    %1831 = vmatprep.subr.mxu0 %v1271
    %1832 = vmatpush2.msra.mxu0 %v1270
    %1833 = vmatprep.subr.mxu0 %v1267
    %1834 = vmatpush2.msra.mxu0 %v1266
    %1835 = vmatprep.subr.mxu0 %v1263
    %1836 = vmatpush2.msra.mxu0 %v1262
    %1837 = vmatprep.subr.mxu0 %v1259
    %1838 = vmatpush2.msra.mxu0 %v1258
    %1839 = vmatprep.subr.mxu0 %v1255
    %1840 = vmatpush2.msra.mxu0 %v1254
    %1841 = vmatprep.subr.mxu0 %v1251
    %1842 = vmatpush2.msra.mxu0 %v1250
    %1843 = vmatprep.mubr.f32.mxu0 %v900
    %1844 = vmatmul.mubr.f32.gmra.mxu0 %v897
    %v1845 = vpop.f32.mrf.mxu0
    %v1846 = vadd.f32 %v1757, %v1845
    %v1847 = vpop.f32.mrf.mxu0
    %v1848 = vadd.f32 %v1759, %v1847
    %1849 = vmatprep.mubr.f32.mxu0 %v904
    %1850 = vmatmul.mubr.f32.gmra.mxu0 %v902
    %v1851 = vpop.f32.mrf.mxu0
    %v1852 = vadd.f32 %v1763, %v1851
    %v1853 = vpop.f32.mrf.mxu0
    %v1854 = vadd.f32 %v1765, %v1853
    %1855 = vmatprep.mubr.f32.mxu0 %v919
    %1856 = vmatmul.mubr.f32.gmra.mxu0 %v916
    %v1857 = vpop.f32.mrf.mxu0
    %v1858 = vadd.f32 %v1769, %v1857
    %v1859 = vpop.f32.mrf.mxu0
    %v1860 = vadd.f32 %v1771, %v1859
    %1861 = vmatprep.mubr.f32.mxu0 %v923
    %1862 = vmatmul.mubr.f32.gmra.mxu0 %v921
    %v1863 = vpop.f32.mrf.mxu0
    %v1864 = vadd.f32 %v1775, %v1863
    %v1865 = vpop.f32.mrf.mxu0
    %v1866 = vadd.f32 %v1777, %v1865
    %1867 = vdwg.mxu0
    %vm1868 = vcmp.ge.f32.partialorder %v1579, 0.0
    %vm1869 = vcmp.ge.f32.partialorder %v1581, 0.0
    %vm1870 = vcmp.ge.f32.partialorder %v1846, 0.0
    %vm1871 = vcmp.ge.f32.partialorder %v1848, 0.0
    %vm1872 = vcmp.ge.f32.partialorder %v1585, 0.0
    %vm1873 = vcmp.ge.f32.partialorder %v1587, 0.0
    %vm1874 = vcmp.ge.f32.partialorder %v1852, 0.0
    %vm1875 = vcmp.ge.f32.partialorder %v1854, 0.0
    %vm1876 = vcmp.ge.f32.partialorder %v1591, 0.0
    %vm1877 = vcmp.ge.f32.partialorder %v1593, 0.0
    %vm1878 = vcmp.ge.f32.partialorder %v1858, 0.0
    %vm1879 = vcmp.ge.f32.partialorder %v1860, 0.0
    %vm1880 = vcmp.ge.f32.partialorder %v1597, 0.0
    %vm1881 = vcmp.ge.f32.partialorder %v1599, 0.0
    %vm1882 = vcmp.ge.f32.partialorder %v1864, 0.0
    %vm1883 = vcmp.ge.f32.partialorder %v1866, 0.0
    %v1884 = vmul.f32 %v1579, 0.2
    %v1885 = vmul.f32 %v1581, 0.2
    %v1886 = vmul.f32 %v1846, 0.2
    %v1887 = vmul.f32 %v1848, 0.2
    %v1888 = vmul.f32 %v1585, 0.2
    %v1889 = vmul.f32 %v1587, 0.2
    %v1890 = vmul.f32 %v1852, 0.2
    %v1891 = vmul.f32 %v1854, 0.2
    %v1892 = vmul.f32 %v1591, 0.2
    %v1893 = vmul.f32 %v1593, 0.2
    %v1894 = vmul.f32 %v1858, 0.2
    %v1895 = vmul.f32 %v1860, 0.2
    %v1896 = vmul.f32 %v1597, 0.2
    %v1897 = vmul.f32 %v1599, 0.2
    %v1898 = vmul.f32 %v1864, 0.2
    %v1899 = vmul.f32 %v1866, 0.2
    %v1900 = vsel %vm1868, %v1579, %v1884
    %v1901 = vsel %vm1869, %v1581, %v1885
    %v1902 = vsel %vm1870, %v1846, %v1886
    %v1903 = vsel %vm1871, %v1848, %v1887
    %v1904 = vsel %vm1872, %v1585, %v1888
    %v1905 = vsel %vm1873, %v1587, %v1889
    %v1906 = vsel %vm1874, %v1852, %v1890
    %v1907 = vsel %vm1875, %v1854, %v1891
    %v1908 = vsel %vm1876, %v1591, %v1892
    %v1909 = vsel %vm1877, %v1593, %v1893
    %v1910 = vsel %vm1878, %v1858, %v1894
    %v1911 = vsel %vm1879, %v1860, %v1895
    %v1912 = vsel %vm1880, %v1597, %v1896
    %v1913 = vsel %vm1881, %v1599, %v1897
    %v1914 = vsel %vm1882, %v1864, %v1898
    %v1915 = vsel %vm1883, %v1866, %v1899
    %v1916 = vld [vmem:[#allocation15] sm:$0xff]
    %v1917 = vld [vmem:[#allocation15 + $0x8] sm:$0xff]
    %v1918 = vld [vmem:[#allocation15 + $0x10] sm:$0xff]
    %v1919 = vld [vmem:[#allocation15 + $0x18] sm:$0xff]
    %v1920 = vld [vmem:[#allocation15 + $0x20] sm:$0xff]
    %v1921 = vld [vmem:[#allocation15 + $0x28] sm:$0xff]
    %v1922 = vld [vmem:[#allocation15 + $0x30] sm:$0xff]
    %v1923 = vld [vmem:[#allocation15 + $0x38] sm:$0xff]
    %v1924 = vmul.f32 %v1900, %v1916
    %v1925 = vmul.f32 %v1901, %v1917
    %v1926 = vmul.f32 %v1902, %v1918
    %v1927 = vmul.f32 %v1903, %v1919
    %v1928 = vmul.f32 %v1904, %v1920
    %v1929 = vmul.f32 %v1905, %v1921
    %v1930 = vmul.f32 %v1906, %v1922
    %v1931 = vmul.f32 %v1907, %v1923
    %v1932 = vadd.f32 %v1924, %v1928
    %v1933 = vrot.slane %v1932, 4
    %v1934 = vadd.f32 %v1932, %v1933
    %v1935 = vrot.slane %v1934, 2
    %v1936 = vadd.f32 %v1934, %v1935
    %v1937 = vrot.slane %v1936, 1
    %v1938 = vadd.f32 %v1936, %v1937
    %v1939 = vadd.f32 %v1925, %v1929
    %v1940 = vrot.slane %v1939, 4
    %v1941 = vadd.f32 %v1939, %v1940
    %v1942 = vrot.slane %v1941, 2
    %v1943 = vadd.f32 %v1941, %v1942
    %v1944 = vrot.slane %v1943, 1
    %v1945 = vadd.f32 %v1943, %v1944
    %v1946 = vadd.f32 %v1926, %v1930
    %v1947 = vrot.slane %v1946, 4
    %v1948 = vadd.f32 %v1946, %v1947
    %v1949 = vrot.slane %v1948, 2
    %v1950 = vadd.f32 %v1948, %v1949
    %v1951 = vrot.slane %v1950, 1
    %v1952 = vadd.f32 %v1950, %v1951
    %v1953 = vadd.f32 %v1927, %v1931
    %v1954 = vrot.slane %v1953, 4
    %v1955 = vadd.f32 %v1953, %v1954
    %v1956 = vrot.slane %v1955, 2
    %v1957 = vadd.f32 %v1955, %v1956
    %v1958 = vrot.slane %v1957, 1
    %v1959 = vadd.f32 %v1957, %v1958
    %v1960 = vadd.f32 %v1938, %v1945
    %v1961 = vadd.f32 %v1960, %v1952
    %v1962 = vadd.f32 %v1961, %v1959
    %1963 = vadd.xlane.f32.xlu0 %v1962
    %v1964 = vpop.xlane.xlu0 %1963
    %v1965 = vld [vmem:[#allocation4] sm:$0x1]
    %v1966 = vadd.f32 %v1964, %v1965
    %vm1967 = vcmask 0
    %1968 = vst.msk [vmem:[%s9] sm:$0x1] %vm1967, %v1966
    %v1969 = vmul.f32 %v1908, %v1916
    %v1970 = vmul.f32 %v1909, %v1917
    %v1971 = vmul.f32 %v1910, %v1918
    %v1972 = vmul.f32 %v1911, %v1919
    %v1973 = vmul.f32 %v1912, %v1920
    %v1974 = vmul.f32 %v1913, %v1921
    %v1975 = vmul.f32 %v1914, %v1922
    %v1976 = vmul.f32 %v1915, %v1923
    %v1977 = vadd.f32 %v1969, %v1973
    %v1978 = vrot.slane %v1977, 4
    %v1979 = vadd.f32 %v1977, %v1978
    %v1980 = vrot.slane %v1979, 2
    %v1981 = vadd.f32 %v1979, %v1980
    %v1982 = vrot.slane %v1981, 1
    %v1983 = vadd.f32 %v1981, %v1982
    %v1984 = vadd.f32 %v1970, %v1974
    %v1985 = vrot.slane %v1984, 4
    %v1986 = vadd.f32 %v1984, %v1985
    %v1987 = vrot.slane %v1986, 2
    %v1988 = vadd.f32 %v1986, %v1987
    %v1989 = vrot.slane %v1988, 1
    %v1990 = vadd.f32 %v1988, %v1989
    %v1991 = vadd.f32 %v1971, %v1975
    %v1992 = vrot.slane %v1991, 4
    %v1993 = vadd.f32 %v1991, %v1992
    %v1994 = vrot.slane %v1993, 2
    %v1995 = vadd.f32 %v1993, %v1994
    %v1996 = vrot.slane %v1995, 1
    %v1997 = vadd.f32 %v1995, %v1996
    %v1998 = vadd.f32 %v1972, %v1976
    %v1999 = vrot.slane %v1998, 4
    %v2000 = vadd.f32 %v1998, %v1999
    %v2001 = vrot.slane %v2000, 2
    %v2002 = vadd.f32 %v2000, %v2001
    %v2003 = vrot.slane %v2002, 1
    %v2004 = vadd.f32 %v2002, %v2003
    %v2005 = vadd.f32 %v1983, %v1990
    %v2006 = vadd.f32 %v2005, %v1997
    %v2007 = vadd.f32 %v2006, %v2004
    %2008 = vadd.xlane.f32.xlu0 %v2007
    %v2009 = vpop.xlane.xlu0 %2008
    %v2010 = vld [vmem:[#allocation4] sm:$0x1]
    %v2011 = vadd.f32 %v2009, %v2010
    %s2012 = scalar_lea.vmem %s9, 1
    %2013 = vst.msk [vmem:[%s2012] sm:$0x1] %vm1967, %v2011
    // Predicated region
    $region66: #{tpu_custom_call.1} parent=1 // pred_check
      _
    $region67: #{tpu_custom_call.1} parent=1 // pred_check_branch
      %2015 = sbr.rel (0) target = $region69
    $region68: #{tpu_custom_call.1} parent=1 // pred_region
      _
    $region69: #{tpu_custom_call.1} parent=1 // pred_fallthru
      _
    // Predicated region
    $region70: #{tpu_custom_call.1} parent=1 // pred_check
      _
    $region71: #{tpu_custom_call.1} parent=1 // pred_check_branch
      %2017 = sbr.rel (0) target = $region73
    $region72: #{tpu_custom_call.1} parent=1 // pred_region
      _
    $region73: #{tpu_custom_call.1} parent=1 // pred_fallthru
      _
    %2018 = vsyncpa [#allocation6], 1
    %2019 = vsyncpa [#allocation8], 1
    %2020 = vsyncpa [#allocation11], 1
    %2021 = vsyncpa [#allocation14], 1

</llo_original>
